<compile_context>
chip_gen: v7x
topology: tpu7x:2x2x1
jax: 0.10.0
libtpu: 0.0.40
codegen_flags: <defaults>
</compile_context>

<pallas_src>
import functools

import jax
import jax.numpy as jnp
import numpy as np
from jax.experimental import pallas as pl
from jax.experimental.pallas import tpu as pltpu

EPS = 1e-6


# ----------------------------- in-kernel VN building blocks -----------------------------
def _vn_matmul4(x4, w_ref):
    """x4: [Bb, 3, M, Cin] -> one stacked [Bb*3*M, Cin] @ [Cin, K] MXU matmul (bf16 in, f32 acc)."""
    bb, v, m, cin = x4.shape
    y = jnp.dot(x4.reshape(bb * v * m, cin).astype(jnp.bfloat16), w_ref[...],
                preferred_element_type=jnp.float32)
    return y.reshape(bb, v, m, w_ref.shape[1])


def _vn_block4(x4, wu_ref, cout_p, *, approx):
    """Fused VNLinearLeakyReLU (negative_slope=0): one matmul computes both w/u branches."""
    y = _vn_matmul4(x4, wu_ref)                       # [Bb, 3, M, 2*cout_p]
    p, d = y[..., :cout_p], y[..., cout_p:]           # tile-aligned lane slices
    dot = jnp.sum(p * d, axis=1, keepdims=True)       # reduce over the 3 vector components
    dsq = jnp.sum(d * d, axis=1, keepdims=True)
    if approx:
        coef = dot * pl.reciprocal(dsq + EPS, approx=True)   # EUP slot (free vs VALU)
    else:
        coef = dot / (dsq + EPS)                      # exact: keeps argmax bit-compatible w/ ref
    return jnp.where(dot >= 0.0, p, p - coef * d)


def _vn_block_rows(xs, wu_ref, cout_p, *, approx):
    """FC-stage VN layer.  xs: tuple of 3 [R, Cin] components, stacked into one M=3R matmul."""
    y = jnp.dot(jnp.concatenate(xs, axis=0).astype(jnp.bfloat16), wu_ref[...],
                preferred_element_type=jnp.float32)   # [3R, 2*cout_p]
    r = xs[0].shape[0]
    p = tuple(y[v * r:(v + 1) * r, :cout_p] for v in range(3))
    d = tuple(y[v * r:(v + 1) * r, cout_p:] for v in range(3))
    dot = p[0] * d[0] + p[1] * d[1] + p[2] * d[2]
    dsq = d[0] * d[0] + d[1] * d[1] + d[2] * d[2]
    if approx:
        coef = dot * pl.reciprocal(dsq + EPS, approx=True)
    else:
        coef = dot / (dsq + EPS)
    keep = dot >= 0.0
    return tuple(jnp.where(keep, pv, pv - coef * dv) for pv, dv in zip(p, d))


def _vn_linear_rows(xs, w_ref):
    y = jnp.dot(jnp.concatenate(xs, axis=0).astype(jnp.bfloat16), w_ref[...],
                preferred_element_type=jnp.float32)
    r = xs[0].shape[0]
    return tuple(y[v * r:(v + 1) * r] for v in range(3))


# ----------------------------------- fused kernel ---------------------------------------
def _stnkd_kernel(x_ref, wu1, wu2, wu3, wp, wuf1, wuf2, wf3,
                  o_ref, pool_dot, pool_x,
                  *, pooling, n_points, c1p, c2p, c3p, f1p, f2p):
    n_idx = pl.program_id(1)

    # ---- init running pool state on the first point tile of this batch block ----
    @pl.when(n_idx == 0)
    def _():
        pool_x[...] = jnp.zeros(pool_x.shape, pool_x.dtype)
        if pooling == "max":
            pool_dot[...] = jnp.full(pool_dot.shape, -jnp.inf, pool_dot.dtype)

    # ---- conv stack on this point tile (3 components stacked -> one matmul per layer) ----
    x = x_ref[...]                                    # [Bb, 3, Nt, C0]  bf16
    x = _vn_block4(x, wu1, c1p, approx=False)         # [Bb, 3, Nt, 128]  (real 21)
    x = _vn_block4(x, wu2, c2p, approx=False)         # [Bb, 3, Nt, 128]  (real 42)
    x = _vn_block4(x, wu3, c3p, approx=False)         # [Bb, 3, Nt, 384]  (real 341)

    # ---- online pooling over point tiles (state in VMEM scratch) ----
    if pooling == "max":
        ddir = _vn_matmul4(x, wp)                     # [Bb, 3, Nt, c3p]
        dot = jnp.sum(x * ddir, axis=1)               # [Bb, Nt, c3p]
        nt = dot.shape[1]
        tmax = jnp.max(dot, axis=1, keepdims=True)    # [Bb, 1, c3p]
        row = jax.lax.broadcasted_iota(jnp.int32, dot.shape, 1)
        first = jnp.min(jnp.where(dot >= tmax, row, nt), axis=1, keepdims=True)
        sel = (row == first).astype(x.dtype)          # one-hot over Nt (first argmax)
        upd = tmax[:, 0] > pool_dot[...]              # strict > keeps earlier tiles on ties
        pool_dot[...] = jnp.where(upd, tmax[:, 0], pool_dot[...])
        for v in range(3):
            tx_v = jnp.sum(x[:, v] * sel, axis=1)     # [Bb, c3p]
            pool_x[v] = jnp.where(upd, tx_v, pool_x[v])
    else:  # mean pooling: running sum over points
        for v in range(3):
            pool_x[v] += jnp.sum(x[:, v], axis=1)

    # ---- FC head + output store, only on the last point tile ----
    @pl.when(n_idx == pl.num_programs(1) - 1)
    def _():
        scale = 1.0 if pooling == "max" else 1.0 / n_points
        gs = tuple(pool_x[v] * scale for v in range(3))      # 3 x [Bb, c3p]
        gs = _vn_block_rows(gs, wuf1, f1p, approx=True)      # fc1  (M = Bb*3)
        gs = _vn_block_rows(gs, wuf2, f2p, approx=True)      # fc2
        ys = _vn_linear_rows(gs, wf3)                        # fc3 -> 3 x [Bb, d]
        for v in range(3):
            o_ref[:, v, :] = ys[v].astype(o_ref.dtype)


# ------------------------------------- wrapper -------------------------------------------
def _rup(n, m=128):
    return ((n + m - 1) // m) * m


def _pad2(a, rows, cols):
    return jnp.pad(a, ((0, rows - a.shape[0]), (0, cols - a.shape[1])))


def stnkd_forward(x, params, pooling="max", *, batch_block=4, n_block=None,
                  channels_last=False, vmem_limit_bytes=None):
    """x: [B, d, 3, N] (torch layout) or [B, 3, N, d] if channels_last.  Returns [B, d, 3]."""
    if channels_last:
        B, three, N, C0 = x.shape
    else:
        B, C0, three, N = x.shape
        # Single fused transpose+cast under jit; callers that already hold x channels-last can
        # pass channels_last=True and skip this HBM round trip entirely.
        x = jnp.transpose(x, (0, 2, 3, 1))
    assert three == 3
    x = x.astype(jnp.bfloat16)                        # bf16 operands, f32 accumulation in-kernel

    c1 = params["w1"].shape[0]
    c2 = params["w2"].shape[0]
    c3 = params["w3"].shape[0]
    f1 = params["wf1"].shape[0]
    f2 = params["wf2"].shape[0]
    d_out = params["wf3"].shape[0]
    c1p, c2p, c3p, f1p, f2p = (_rup(c1), _rup(c2), _rup(c3), _rup(f1), _rup(f2))

    # Fuse w/u into one [Cin_p, 2*Cout_p] rhs per VN layer; zero-pad channels to 128-multiples so
    # every in-kernel lane slice is tile aligned (padded channels are exactly zero end-to-end).
    def fuse(wn, un, cin_p, cout_p):
        w = _pad2(params[wn].T.astype(jnp.float32), cin_p, cout_p)
        u = _pad2(params[un].T.astype(jnp.float32), cin_p, cout_p)
        return jnp.concatenate([w, u], axis=1).astype(jnp.bfloat16)

    wu1 = fuse("w1", "u1", C0, c1p)
    wu2 = fuse("w2", "u2", c1p, c2p)
    wu3 = fuse("w3", "u3", c2p, c3p)
    wp = _pad2(params["wp"].T.astype(jnp.float32), c3p, c3p).astype(jnp.bfloat16)
    wuf1 = fuse("wf1", "uf1", c3p, f1p)
    wuf2 = fuse("wf2", "uf2", f1p, f2p)
    wf3 = _pad2(params["wf3"].T.astype(jnp.float32), f2p, d_out).astype(jnp.bfloat16)

    # batch blocking (pad B up to a multiple of the block)
    bb = max(1, min(batch_block, B))
    B_pad = -(-B // bb) * bb
    if B_pad != B:
        x = jnp.pad(x, ((0, B_pad - B), (0, 0), (0, 0), (0, 0)))

    # point tiling: bounds VMEM for large N (v7x 64 MiB, v5e 16 MiB scoped default)
    if n_block is None:
        if N <= 256:
            n_block = N
        else:
            divs = [t for t in range(256, 7, -8) if N % t == 0]
            n_block = divs[0] if divs else N
    assert N % n_block == 0, "n_block must divide N"
    assert n_block % 8 == 0, "point tile must be a multiple of 8 (sublane width)"
    num_n = N // n_block

    kernel = functools.partial(
        _stnkd_kernel, pooling=pooling, n_points=N,
        c1p=c1p, c2p=c2p, c3p=c3p, f1p=f1p, f2p=f2p)

    weight_args = (wu1, wu2, wu3, wp, wuf1, wuf2, wf3)
    in_specs = [pl.BlockSpec((bb, 3, n_block, C0), lambda b, n: (b, 0, n, 0))]
    # constant index map -> each weight is DMA'd once and stays resident in VMEM
    in_specs += [pl.BlockSpec(w.shape, lambda b, n: (0, 0)) for w in weight_args]

    out = pl.pallas_call(
        kernel,
        grid=(B_pad // bb, num_n),
        in_specs=in_specs,
        out_specs=pl.BlockSpec((bb, 3, d_out), lambda b, n: (b, 0, 0)),
        out_shape=jax.ShapeDtypeStruct((B_pad, 3, d_out), jnp.float32),
        scratch_shapes=[pltpu.VMEM((bb, c3p), jnp.float32),      # running max of <x, d>
                        pltpu.VMEM((3, bb, c3p), jnp.float32)],  # running pooled x (or sum)
        compiler_params=pltpu.CompilerParams(
            dimension_semantics=("parallel", "arbitrary"),
            vmem_limit_bytes=vmem_limit_bytes),
    )(x, *weight_args)

    return jnp.transpose(out[:B], (0, 2, 1))          # [B, d, 3] (torch layout)


# ------------------------------ deterministic parameters ---------------------------------
def init_params(key, d=64):
    def lin(k, out_c, in_c):
        bound = 1.0 / np.sqrt(in_c)                   # torch nn.Linear default (bias=False)
        return jax.random.uniform(k, (out_c, in_c), jnp.float32, -bound, bound)

    c1, c2, c3 = 64 // 3, 128 // 3, 1024 // 3
    f1, f2 = 512 // 3, 256 // 3
    ks = jax.random.split(key, 12)
    return dict(
        w1=lin(ks[0], c1, d), u1=lin(ks[1], c1, d),
        w2=lin(ks[2], c2, c1), u2=lin(ks[3], c2, c1),
        w3=lin(ks[4], c3, c2), u3=lin(ks[5], c3, c2),
        wp=lin(ks[6], c3, c3),
        wf1=lin(ks[7], f1, c3), uf1=lin(ks[8], f1, c3),
        wf2=lin(ks[9], f2, f1), uf2=lin(ks[10], f2, f1),
        wf3=lin(ks[11], d, f2),
    )


# --------------------------------- pure-JAX reference ------------------------------------
# Mirrors the kernel's mixed-precision policy (bf16 matmul operands, f32 accumulate/elementwise)
# so kernel and reference share identical rounding; otherwise identical to the torch module.
def _ref_lin(x, w):                                   # x: [B, Cin, 3, ...], w: [Cout, Cin]
    return jnp.einsum("oi,bi...->bo...",
                      w.astype(jnp.bfloat16), x.astype(jnp.bfloat16),
                      preferred_element_type=jnp.float32)


def _ref_lrelu(x, w, u):
    p, dv = _ref_lin(x, w), _ref_lin(x, u)
    dot = jnp.sum(p * dv, axis=2, keepdims=True)
    dsq = jnp.sum(dv * dv, axis=2, keepdims=True)
    return jnp.where(dot >= 0, p, p - (dot / (dsq + EPS)) * dv)


def stnkd_reference(x, params, pooling="max"):
    x = _ref_lrelu(x, params["w1"], params["u1"])
    x = _ref_lrelu(x, params["w2"], params["u2"])
    x = _ref_lrelu(x, params["w3"], params["u3"])
    if pooling == "max":
        d = _ref_lin(x, params["wp"])
        dot = jnp.sum(x * d, axis=2)                              # [B, C, N]
        idx = jnp.argmax(dot, axis=-1)                            # [B, C]
        x = jnp.take_along_axis(x, idx[:, :, None, None], axis=-1)[..., 0]   # [B, C, 3]
    else:
        x = x.mean(axis=-1)
    x = _ref_lrelu(x, params["wf1"], params["uf1"])
    x = _ref_lrelu(x, params["wf2"], params["uf2"])
    return _ref_lin(x, params["wf3"])                             # [B, d, 3]


# ----------------------------------------- main -------------------------------------------
if __name__ == "__main__":
    key = jax.random.PRNGKey(0)
    kx, kp = jax.random.split(key)
    B, d, N = 4, 64, 16
    x = jax.random.normal(kx, (B, d, 3, N), jnp.float32)          # torch layout [B, C=d, 3, N]
    params = init_params(kp, d=d)

    for pooling in ("max", "mean"):
        fwd = jax.jit(functools.partial(stnkd_forward, pooling=pooling, batch_block=2))
        out = jax.block_until_ready(fwd(x, params))
        ref = stnkd_reference(x, params, pooling=pooling)
        assert out.shape == (B, d, 3)
        np.testing.assert_allclose(np.asarray(out), np.asarray(ref), rtol=2e-2, atol=1e-2)

    print("KERNEL_OK")
</pallas_src>

<mosaic_0001>
module attributes {stable_mosaic.version = 11 : i64} {
  func.func @_stnkd_kernel(%arg0: i32, %arg1: i32, %arg2: memref<2x3x16x64xbf16, #tpu.memory_space<vmem>>, %arg3: memref<64x256xbf16, #tpu.memory_space<vmem>>, %arg4: memref<128x256xbf16, #tpu.memory_space<vmem>>, %arg5: memref<128x768xbf16, #tpu.memory_space<vmem>>, %arg6: memref<384x384xbf16, #tpu.memory_space<vmem>>, %arg7: memref<384x512xbf16, #tpu.memory_space<vmem>>, %arg8: memref<256x256xbf16, #tpu.memory_space<vmem>>, %arg9: memref<128x64xbf16, #tpu.memory_space<vmem>>, %arg10: memref<2x3x64xf32, #tpu.memory_space<vmem>>, %arg11: memref<2x384xf32, #tpu.memory_space<vmem>>, %arg12: memref<3x2x384xf32, #tpu.memory_space<vmem>>) attributes {dimension_semantics = [#tpu.dimension_semantics<parallel>, #tpu.dimension_semantics<arbitrary>], iteration_bounds = array<i64: 2, 1>, scalar_prefetch = 0 : i64, scratch_operands = 2 : i64, tpu.core_type = #tpu.core_type<tc>, window_params = [{transform_indices = @transform_0, window_bounds = array<i64: 2, 3, 16, 64>}, {pipeline_mode = #tpu.pipeline_mode<synchronous>, transform_indices = @transform_1, window_bounds = array<i64: 64, 256>}, {pipeline_mode = #tpu.pipeline_mode<synchronous>, transform_indices = @transform_2, window_bounds = array<i64: 128, 256>}, {pipeline_mode = #tpu.pipeline_mode<synchronous>, transform_indices = @transform_3, window_bounds = array<i64: 128, 768>}, {pipeline_mode = #tpu.pipeline_mode<synchronous>, transform_indices = @transform_4, window_bounds = array<i64: 384, 384>}, {pipeline_mode = #tpu.pipeline_mode<synchronous>, transform_indices = @transform_5, window_bounds = array<i64: 384, 512>}, {pipeline_mode = #tpu.pipeline_mode<synchronous>, transform_indices = @transform_6, window_bounds = array<i64: 256, 256>}, {pipeline_mode = #tpu.pipeline_mode<synchronous>, transform_indices = @transform_7, window_bounds = array<i64: 128, 64>}, {transform_indices = @transform_8, window_bounds = array<i64: 2, 3, 64>}]} {
    %c0_i32 = arith.constant 0 : i32
    %0 = arith.cmpi eq, %arg1, %c0_i32 : i32
    %1 = arith.extui %0 : i1 to i32
    %c0_i32_0 = arith.constant 0 : i32
    %2 = arith.cmpi ne, %1, %c0_i32_0 : i32
    scf.if %2 {
      %cst_57 = arith.constant 0.000000e+00 : f32
      %135 = vector.broadcast %cst_57 : f32 to vector<3x2x384xf32>
      %c0_58 = arith.constant 0 : index
      %c0_59 = arith.constant 0 : index
      %c0_60 = arith.constant 0 : index
      %136 = vector.load %arg12[%c0_58, %c0_59, %c0_60] : memref<3x2x384xf32, #tpu.memory_space<vmem>>, vector<3x2x384xf32>
      tpu.vector_store %arg12[%c0_58, %c0_59, %c0_60], %135 {strides = array<i32>} : memref<3x2x384xf32, #tpu.memory_space<vmem>>, vector<3x2x384xf32>,
      %cst_61 = arith.constant 0xFF800000 : f32
      %137 = vector.broadcast %cst_61 : f32 to vector<2x384xf32>
      %c0_62 = arith.constant 0 : index
      %c0_63 = arith.constant 0 : index
      %138 = vector.load %arg11[%c0_62, %c0_63] : memref<2x384xf32, #tpu.memory_space<vmem>>, vector<2x384xf32>
      tpu.vector_store %arg11[%c0_62, %c0_63], %137 {strides = array<i32>} : memref<2x384xf32, #tpu.memory_space<vmem>>, vector<2x384xf32>,
    } else {
    }
    %c0 = arith.constant 0 : index
    %c0_1 = arith.constant 0 : index
    %c0_2 = arith.constant 0 : index
    %c0_3 = arith.constant 0 : index
    %3 = vector.load %arg2[%c0, %c0_1, %c0_2, %c0_3] : memref<2x3x16x64xbf16, #tpu.memory_space<vmem>>, vector<2x3x16x64xbf16>
    %4 = vector.shape_cast %3 : vector<2x3x16x64xbf16> to vector<96x64xbf16>
    %c0_4 = arith.constant 0 : index
    %c0_5 = arith.constant 0 : index
    %5 = vector.load %arg3[%c0_4, %c0_5] : memref<64x256xbf16, #tpu.memory_space<vmem>>, vector<64x256xbf16>
    %cst = arith.constant dense<0.000000e+00> : vector<96x256xf32>
    %6 = tpu.matmul %4, %5, %cst {dimension_numbers = #tpu.dot_dimension_numbers<[1], [0], [0], [1], [0, 0, 1, 1], [], []>} : vector<96x64xbf16>, vector<64x256xbf16>, vector<96x256xf32> -> vector<96x256xf32>
    %7 = vector.shape_cast %6 : vector<96x256xf32> to vector<2x3x16x256xf32>
    %8 = vector.extract_strided_slice %7 {offsets = [0, 0, 0, 0], sizes = [2, 3, 16, 128], strides = [1, 1, 1, 1]} : vector<2x3x16x256xf32> to vector<2x3x16x128xf32>
    %9 = vector.extract_strided_slice %7 {offsets = [0, 0, 0, 128], sizes = [2, 3, 16, 128], strides = [1, 1, 1, 1]} : vector<2x3x16x256xf32> to vector<2x3x16x128xf32>
    %10 = arith.mulf %8, %9 : vector<2x3x16x128xf32>
    %cst_6 = arith.constant dense<0.000000e+00> : vector<2x16x128xf32>
    %11 = vector.multi_reduction <add>, %10, %cst_6 [1] : vector<2x3x16x128xf32> to vector<2x16x128xf32>
    %12 = vector.shape_cast %11 : vector<2x16x128xf32> to vector<2x1x16x128xf32>
    %13 = arith.mulf %9, %9 : vector<2x3x16x128xf32>
    %cst_7 = arith.constant dense<0.000000e+00> : vector<2x16x128xf32>
    %14 = vector.multi_reduction <add>, %13, %cst_7 [1] : vector<2x3x16x128xf32> to vector<2x16x128xf32>
    %15 = vector.shape_cast %14 : vector<2x16x128xf32> to vector<2x1x16x128xf32>
    %cst_8 = arith.constant 9.99999997E-7 : f32
    %16 = vector.broadcast %cst_8 : f32 to vector<2x1x16x128xf32>
    %17 = arith.addf %15, %16 : vector<2x1x16x128xf32>
    %18 = arith.divf %12, %17 : vector<2x1x16x128xf32>
    %cst_9 = arith.constant 0.000000e+00 : f32
    %19 = vector.broadcast %cst_9 : f32 to vector<2x1x16x128xf32>
    %20 = arith.cmpf oge, %12, %19 : vector<2x1x16x128xf32>
    %21 = vector.broadcast %18 : vector<2x1x16x128xf32> to vector<2x3x16x128xf32>
    %22 = arith.mulf %21, %9 : vector<2x3x16x128xf32>
    %23 = arith.subf %8, %22 : vector<2x3x16x128xf32>
    %24 = vector.shape_cast %20 : vector<2x1x16x128xi1> to vector<2x1x16x128xi1>
    %25 = vector.broadcast %24 : vector<2x1x16x128xi1> to vector<2x3x16x128xi1>
    %26 = arith.select %25, %8, %23 : vector<2x3x16x128xi1>, vector<2x3x16x128xf32>
    %27 = vector.shape_cast %26 : vector<2x3x16x128xf32> to vector<96x128xf32>
    %28 = arith.truncf %27 : vector<96x128xf32> to vector<96x128xbf16>
    %c0_10 = arith.constant 0 : index
    %c0_11 = arith.constant 0 : index
    %29 = vector.load %arg4[%c0_10, %c0_11] : memref<128x256xbf16, #tpu.memory_space<vmem>>, vector<128x256xbf16>
    %cst_12 = arith.constant dense<0.000000e+00> : vector<96x256xf32>
    %30 = tpu.matmul %28, %29, %cst_12 {dimension_numbers = #tpu.dot_dimension_numbers<[1], [0], [0], [1], [0, 0, 1, 1], [], []>} : vector<96x128xbf16>, vector<128x256xbf16>, vector<96x256xf32> -> vector<96x256xf32>
    %31 = vector.shape_cast %30 : vector<96x256xf32> to vector<2x3x16x256xf32>
    %32 = vector.extract_strided_slice %31 {offsets = [0, 0, 0, 0], sizes = [2, 3, 16, 128], strides = [1, 1, 1, 1]} : vector<2x3x16x256xf32> to vector<2x3x16x128xf32>
    %33 = vector.extract_strided_slice %31 {offsets = [0, 0, 0, 128], sizes = [2, 3, 16, 128], strides = [1, 1, 1, 1]} : vector<2x3x16x256xf32> to vector<2x3x16x128xf32>
    %34 = arith.mulf %32, %33 : vector<2x3x16x128xf32>
    %cst_13 = arith.constant dense<0.000000e+00> : vector<2x16x128xf32>
    %35 = vector.multi_reduction <add>, %34, %cst_13 [1] : vector<2x3x16x128xf32> to vector<2x16x128xf32>
    %36 = vector.shape_cast %35 : vector<2x16x128xf32> to vector<2x1x16x128xf32>
    %37 = arith.mulf %33, %33 : vector<2x3x16x128xf32>
    %cst_14 = arith.constant dense<0.000000e+00> : vector<2x16x128xf32>
    %38 = vector.multi_reduction <add>, %37, %cst_14 [1] : vector<2x3x16x128xf32> to vector<2x16x128xf32>
    %39 = vector.shape_cast %38 : vector<2x16x128xf32> to vector<2x1x16x128xf32>
    %cst_15 = arith.constant 9.99999997E-7 : f32
    %40 = vector.broadcast %cst_15 : f32 to vector<2x1x16x128xf32>
    %41 = arith.addf %39, %40 : vector<2x1x16x128xf32>
    %42 = arith.divf %36, %41 : vector<2x1x16x128xf32>
    %cst_16 = arith.constant 0.000000e+00 : f32
    %43 = vector.broadcast %cst_16 : f32 to vector<2x1x16x128xf32>
    %44 = arith.cmpf oge, %36, %43 : vector<2x1x16x128xf32>
    %45 = vector.broadcast %42 : vector<2x1x16x128xf32> to vector<2x3x16x128xf32>
    %46 = arith.mulf %45, %33 : vector<2x3x16x128xf32>
    %47 = arith.subf %32, %46 : vector<2x3x16x128xf32>
    %48 = vector.shape_cast %44 : vector<2x1x16x128xi1> to vector<2x1x16x128xi1>
    %49 = vector.broadcast %48 : vector<2x1x16x128xi1> to vector<2x3x16x128xi1>
    %50 = arith.select %49, %32, %47 : vector<2x3x16x128xi1>, vector<2x3x16x128xf32>
    %51 = vector.shape_cast %50 : vector<2x3x16x128xf32> to vector<96x128xf32>
    %52 = arith.truncf %51 : vector<96x128xf32> to vector<96x128xbf16>
    %c0_17 = arith.constant 0 : index
    %c0_18 = arith.constant 0 : index
    %53 = vector.load %arg5[%c0_17, %c0_18] : memref<128x768xbf16, #tpu.memory_space<vmem>>, vector<128x768xbf16>
    %cst_19 = arith.constant dense<0.000000e+00> : vector<96x768xf32>
    %54 = tpu.matmul %52, %53, %cst_19 {dimension_numbers = #tpu.dot_dimension_numbers<[1], [0], [0], [1], [0, 0, 1, 1], [], []>} : vector<96x128xbf16>, vector<128x768xbf16>, vector<96x768xf32> -> vector<96x768xf32>
    %55 = vector.shape_cast %54 : vector<96x768xf32> to vector<2x3x16x768xf32>
    %56 = vector.extract_strided_slice %55 {offsets = [0, 0, 0, 0], sizes = [2, 3, 16, 384], strides = [1, 1, 1, 1]} : vector<2x3x16x768xf32> to vector<2x3x16x384xf32>
    %57 = vector.extract_strided_slice %55 {offsets = [0, 0, 0, 384], sizes = [2, 3, 16, 384], strides = [1, 1, 1, 1]} : vector<2x3x16x768xf32> to vector<2x3x16x384xf32>
    %58 = arith.mulf %56, %57 : vector<2x3x16x384xf32>
    %cst_20 = arith.constant dense<0.000000e+00> : vector<2x16x384xf32>
    %59 = vector.multi_reduction <add>, %58, %cst_20 [1] : vector<2x3x16x384xf32> to vector<2x16x384xf32>
    %60 = vector.shape_cast %59 : vector<2x16x384xf32> to vector<2x1x16x384xf32>
    %61 = arith.mulf %57, %57 : vector<2x3x16x384xf32>
    %cst_21 = arith.constant dense<0.000000e+00> : vector<2x16x384xf32>
    %62 = vector.multi_reduction <add>, %61, %cst_21 [1] : vector<2x3x16x384xf32> to vector<2x16x384xf32>
    %63 = vector.shape_cast %62 : vector<2x16x384xf32> to vector<2x1x16x384xf32>
    %cst_22 = arith.constant 9.99999997E-7 : f32
    %64 = vector.broadcast %cst_22 : f32 to vector<2x1x16x384xf32>
    %65 = arith.addf %63, %64 : vector<2x1x16x384xf32>
    %66 = arith.divf %60, %65 : vector<2x1x16x384xf32>
    %cst_23 = arith.constant 0.000000e+00 : f32
    %67 = vector.broadcast %cst_23 : f32 to vector<2x1x16x384xf32>
    %68 = arith.cmpf oge, %60, %67 : vector<2x1x16x384xf32>
    %69 = vector.broadcast %66 : vector<2x1x16x384xf32> to vector<2x3x16x384xf32>
    %70 = arith.mulf %69, %57 : vector<2x3x16x384xf32>
    %71 = arith.subf %56, %70 : vector<2x3x16x384xf32>
    %72 = vector.shape_cast %68 : vector<2x1x16x384xi1> to vector<2x1x16x384xi1>
    %73 = vector.broadcast %72 : vector<2x1x16x384xi1> to vector<2x3x16x384xi1>
    %74 = arith.select %73, %56, %71 : vector<2x3x16x384xi1>, vector<2x3x16x384xf32>
    %75 = vector.shape_cast %74 : vector<2x3x16x384xf32> to vector<96x384xf32>
    %76 = arith.truncf %75 : vector<96x384xf32> to vector<96x384xbf16>
    %c0_24 = arith.constant 0 : index
    %c0_25 = arith.constant 0 : index
    %77 = vector.load %arg6[%c0_24, %c0_25] : memref<384x384xbf16, #tpu.memory_space<vmem>>, vector<384x384xbf16>
    %cst_26 = arith.constant dense<0.000000e+00> : vector<96x384xf32>
    %78 = tpu.matmul %76, %77, %cst_26 {dimension_numbers = #tpu.dot_dimension_numbers<[1], [0], [0], [1], [0, 0, 1, 1], [], []>} : vector<96x384xbf16>, vector<384x384xbf16>, vector<96x384xf32> -> vector<96x384xf32>
    %79 = vector.shape_cast %78 : vector<96x384xf32> to vector<2x3x16x384xf32>
    %80 = arith.mulf %74, %79 : vector<2x3x16x384xf32>
    %cst_27 = arith.constant dense<0.000000e+00> : vector<2x16x384xf32>
    %81 = vector.multi_reduction <add>, %80, %cst_27 [1] : vector<2x3x16x384xf32> to vector<2x16x384xf32>
    %cst_28 = arith.constant dense<0xFF800000> : vector<2x384xf32>
    %82 = vector.multi_reduction <maximumf>, %81, %cst_28 [1] : vector<2x16x384xf32> to vector<2x384xf32>
    %83 = vector.shape_cast %82 : vector<2x384xf32> to vector<2x1x384xf32>
    %84 = tpu.iota {dimensions = array<i32: 1>} : vector<2x16x384xi32>
    %85 = vector.broadcast %83 : vector<2x1x384xf32> to vector<2x16x384xf32>
    %86 = arith.cmpf oge, %81, %85 : vector<2x16x384xf32>
    %c16_i32 = arith.constant 16 : i32
    %87 = vector.broadcast %c16_i32 : i32 to vector<2x16x384xi32>
    %88 = arith.select %86, %84, %87 : vector<2x16x384xi1>, vector<2x16x384xi32>
    %cst_29 = arith.constant dense<2147483647> : vector<2x384xi32>
    %89 = vector.multi_reduction <minsi>, %88, %cst_29 [1] : vector<2x16x384xi32> to vector<2x384xi32>
    %90 = vector.shape_cast %89 : vector<2x384xi32> to vector<2x1x384xi32>
    %91 = vector.broadcast %90 : vector<2x1x384xi32> to vector<2x16x384xi32>
    %92 = arith.cmpi eq, %84, %91 : vector<2x16x384xi32>
    %93 = arith.extui %92 : vector<2x16x384xi1> to vector<2x16x384xi32>
    %94 = arith.sitofp %93 : vector<2x16x384xi32> to vector<2x16x384xf32>
    %95 = vector.shape_cast %83 : vector<2x1x384xf32> to vector<2x384xf32>
    %c0_30 = arith.constant 0 : index
    %c0_31 = arith.constant 0 : index
    %96 = vector.load %arg11[%c0_30, %c0_31] : memref<2x384xf32, #tpu.memory_space<vmem>>, vector<2x384xf32>
    %97 = arith.cmpf ogt, %95, %96 : vector<2x384xf32>
    %98 = vector.shape_cast %83 : vector<2x1x384xf32> to vector<2x384xf32>
    %c0_32 = arith.constant 0 : index
    %c0_33 = arith.constant 0 : index
    %99 = vector.load %arg11[%c0_32, %c0_33] : memref<2x384xf32, #tpu.memory_space<vmem>>, vector<2x384xf32>
    %100 = arith.select %97, %98, %99 : vector<2x384xi1>, vector<2x384xf32>
    %c0_34 = arith.constant 0 : index
    %c0_35 = arith.constant 0 : index
    %101 = vector.load %arg11[%c0_34, %c0_35] : memref<2x384xf32, #tpu.memory_space<vmem>>, vector<2x384xf32>
    tpu.vector_store %arg11[%c0_34, %c0_35], %100 {strides = array<i32>} : memref<2x384xf32, #tpu.memory_space<vmem>>, vector<2x384xf32>,
    %102 = vector.extract_strided_slice %74 {offsets = [0, 0, 0, 0], sizes = [2, 1, 16, 384], strides = [1, 1, 1, 1]} : vector<2x3x16x384xf32> to vector<2x1x16x384xf32>
    %103 = vector.shape_cast %102 : vector<2x1x16x384xf32> to vector<2x16x384xf32>
    %104 = arith.mulf %103, %94 : vector<2x16x384xf32>
    %cst_36 = arith.constant dense<0.000000e+00> : vector<2x384xf32>
    %105 = vector.multi_reduction <add>, %104, %cst_36 [1] : vector<2x16x384xf32> to vector<2x384xf32>
    %c0_37 = arith.constant 0 : index
    %c0_38 = arith.constant 0 : index
    %c0_39 = arith.constant 0 : index
    %106 = vector.load %arg12[%c0_37, %c0_38, %c0_39] : memref<3x2x384xf32, #tpu.memory_space<vmem>>, vector<1x2x384xf32>
    %107 = vector.shape_cast %106 : vector<1x2x384xf32> to vector<2x384xf32>
    %108 = arith.select %97, %105, %107 : vector<2x384xi1>, vector<2x384xf32>
    %c0_40 = arith.constant 0 : index
    %c0_41 = arith.constant 0 : index
    %c0_42 = arith.constant 0 : index
    %109 = vector.load %arg12[%c0_40, %c0_41, %c0_42] : memref<3x2x384xf32, #tpu.memory_space<vmem>>, vector<1x2x384xf32>
    %110 = vector.shape_cast %109 : vector<1x2x384xf32> to vector<2x384xf32>
    %111 = vector.shape_cast %108 : vector<2x384xf32> to vector<1x2x384xf32>
    tpu.vector_store %arg12[%c0_40, %c0_41, %c0_42], %111 {strides = array<i32>} : memref<3x2x384xf32, #tpu.memory_space<vmem>>, vector<1x2x384xf32>,
    %112 = vector.extract_strided_slice %74 {offsets = [0, 1, 0, 0], sizes = [2, 1, 16, 384], strides = [1, 1, 1, 1]} : vector<2x3x16x384xf32> to vector<2x1x16x384xf32>
    %113 = vector.shape_cast %112 : vector<2x1x16x384xf32> to vector<2x16x384xf32>
    %114 = arith.mulf %113, %94 : vector<2x16x384xf32>
    %cst_43 = arith.constant dense<0.000000e+00> : vector<2x384xf32>
    %115 = vector.multi_reduction <add>, %114, %cst_43 [1] : vector<2x16x384xf32> to vector<2x384xf32>
    %c1 = arith.constant 1 : index
    %c0_44 = arith.constant 0 : index
    %c0_45 = arith.constant 0 : index
    %116 = vector.load %arg12[%c1, %c0_44, %c0_45] : memref<3x2x384xf32, #tpu.memory_space<vmem>>, vector<1x2x384xf32>
    %117 = vector.shape_cast %116 : vector<1x2x384xf32> to vector<2x384xf32>
    %118 = arith.select %97, %115, %117 : vector<2x384xi1>, vector<2x384xf32>
    %c1_46 = arith.constant 1 : index
    %c0_47 = arith.constant 0 : index
    %c0_48 = arith.constant 0 : index
    %119 = vector.load %arg12[%c1_46, %c0_47, %c0_48] : memref<3x2x384xf32, #tpu.memory_space<vmem>>, vector<1x2x384xf32>
    %120 = vector.shape_cast %119 : vector<1x2x384xf32> to vector<2x384xf32>
    %121 = vector.shape_cast %118 : vector<2x384xf32> to vector<1x2x384xf32>
    tpu.vector_store %arg12[%c1_46, %c0_47, %c0_48], %121 {strides = array<i32>} : memref<3x2x384xf32, #tpu.memory_space<vmem>>, vector<1x2x384xf32>,
    %122 = vector.extract_strided_slice %74 {offsets = [0, 2, 0, 0], sizes = [2, 1, 16, 384], strides = [1, 1, 1, 1]} : vector<2x3x16x384xf32> to vector<2x1x16x384xf32>
    %123 = vector.shape_cast %122 : vector<2x1x16x384xf32> to vector<2x16x384xf32>
    %124 = arith.mulf %123, %94 : vector<2x16x384xf32>
    %cst_49 = arith.constant dense<0.000000e+00> : vector<2x384xf32>
    %125 = vector.multi_reduction <add>, %124, %cst_49 [1] : vector<2x16x384xf32> to vector<2x384xf32>
    %c2 = arith.constant 2 : index
    %c0_50 = arith.constant 0 : index
    %c0_51 = arith.constant 0 : index
    %126 = vector.load %arg12[%c2, %c0_50, %c0_51] : memref<3x2x384xf32, #tpu.memory_space<vmem>>, vector<1x2x384xf32>
    %127 = vector.shape_cast %126 : vector<1x2x384xf32> to vector<2x384xf32>
    %128 = arith.select %97, %125, %127 : vector<2x384xi1>, vector<2x384xf32>
    %c2_52 = arith.constant 2 : index
    %c0_53 = arith.constant 0 : index
    %c0_54 = arith.constant 0 : index
    %129 = vector.load %arg12[%c2_52, %c0_53, %c0_54] : memref<3x2x384xf32, #tpu.memory_space<vmem>>, vector<1x2x384xf32>
    %130 = vector.shape_cast %129 : vector<1x2x384xf32> to vector<2x384xf32>
    %131 = vector.shape_cast %128 : vector<2x384xf32> to vector<1x2x384xf32>
    tpu.vector_store %arg12[%c2_52, %c0_53, %c0_54], %131 {strides = array<i32>} : memref<3x2x384xf32, #tpu.memory_space<vmem>>, vector<1x2x384xf32>,
    %c0_i32_55 = arith.constant 0 : i32
    %132 = arith.cmpi eq, %arg1, %c0_i32_55 : i32
    %133 = arith.extui %132 : i1 to i32
    %c0_i32_56 = arith.constant 0 : i32
    %134 = arith.cmpi ne, %133, %c0_i32_56 : i32
    scf.if %134 {
      %c0_57 = arith.constant 0 : index
      %c0_58 = arith.constant 0 : index
      %c0_59 = arith.constant 0 : index
      %135 = vector.load %arg12[%c0_57, %c0_58, %c0_59] : memref<3x2x384xf32, #tpu.memory_space<vmem>>, vector<1x2x384xf32>
      %136 = vector.shape_cast %135 : vector<1x2x384xf32> to vector<2x384xf32>
      %cst_60 = arith.constant 1.000000e+00 : f32
      %137 = vector.broadcast %cst_60 : f32 to vector<2x384xf32>
      %138 = arith.mulf %136, %137 : vector<2x384xf32>
      %c1_61 = arith.constant 1 : index
      %c0_62 = arith.constant 0 : index
      %c0_63 = arith.constant 0 : index
      %139 = vector.load %arg12[%c1_61, %c0_62, %c0_63] : memref<3x2x384xf32, #tpu.memory_space<vmem>>, vector<1x2x384xf32>
      %140 = vector.shape_cast %139 : vector<1x2x384xf32> to vector<2x384xf32>
      %cst_64 = arith.constant 1.000000e+00 : f32
      %141 = vector.broadcast %cst_64 : f32 to vector<2x384xf32>
      %142 = arith.mulf %140, %141 : vector<2x384xf32>
      %c2_65 = arith.constant 2 : index
      %c0_66 = arith.constant 0 : index
      %c0_67 = arith.constant 0 : index
      %143 = vector.load %arg12[%c2_65, %c0_66, %c0_67] : memref<3x2x384xf32, #tpu.memory_space<vmem>>, vector<1x2x384xf32>
      %144 = vector.shape_cast %143 : vector<1x2x384xf32> to vector<2x384xf32>
      %cst_68 = arith.constant 1.000000e+00 : f32
      %145 = vector.broadcast %cst_68 : f32 to vector<2x384xf32>
      %146 = arith.mulf %144, %145 : vector<2x384xf32>
      %147 = tpu.concatenate %138, %142, %146 in 0 : vector<2x384xf32>, vector<2x384xf32>, vector<2x384xf32> -> vector<6x384xf32>
      %148 = arith.truncf %147 : vector<6x384xf32> to vector<6x384xbf16>
      %c0_69 = arith.constant 0 : index
      %c0_70 = arith.constant 0 : index
      %149 = vector.load %arg7[%c0_69, %c0_70] : memref<384x512xbf16, #tpu.memory_space<vmem>>, vector<384x512xbf16>
      %cst_71 = arith.constant dense<0.000000e+00> : vector<6x512xf32>
      %150 = tpu.matmul %148, %149, %cst_71 {dimension_numbers = #tpu.dot_dimension_numbers<[1], [0], [0], [1], [0, 0, 1, 1], [], []>} : vector<6x384xbf16>, vector<384x512xbf16>, vector<6x512xf32> -> vector<6x512xf32>
      %151 = vector.extract_strided_slice %150 {offsets = [0, 0], sizes = [2, 256], strides = [1, 1]} : vector<6x512xf32> to vector<2x256xf32>
      %152 = vector.extract_strided_slice %150 {offsets = [2, 0], sizes = [2, 256], strides = [1, 1]} : vector<6x512xf32> to vector<2x256xf32>
      %153 = vector.extract_strided_slice %150 {offsets = [4, 0], sizes = [2, 256], strides = [1, 1]} : vector<6x512xf32> to vector<2x256xf32>
      %154 = vector.extract_strided_slice %150 {offsets = [0, 256], sizes = [2, 256], strides = [1, 1]} : vector<6x512xf32> to vector<2x256xf32>
      %155 = vector.extract_strided_slice %150 {offsets = [2, 256], sizes = [2, 256], strides = [1, 1]} : vector<6x512xf32> to vector<2x256xf32>
      %156 = vector.extract_strided_slice %150 {offsets = [4, 256], sizes = [2, 256], strides = [1, 1]} : vector<6x512xf32> to vector<2x256xf32>
      %157 = arith.mulf %151, %154 : vector<2x256xf32>
      %158 = arith.mulf %152, %155 : vector<2x256xf32>
      %159 = arith.addf %157, %158 : vector<2x256xf32>
      %160 = arith.mulf %153, %156 : vector<2x256xf32>
      %161 = arith.addf %159, %160 : vector<2x256xf32>
      %162 = arith.mulf %154, %154 : vector<2x256xf32>
      %163 = arith.mulf %155, %155 : vector<2x256xf32>
      %164 = arith.addf %162, %163 : vector<2x256xf32>
      %165 = arith.mulf %156, %156 : vector<2x256xf32>
      %166 = arith.addf %164, %165 : vector<2x256xf32>
      %cst_72 = arith.constant 9.99999997E-7 : f32
      %167 = vector.broadcast %cst_72 : f32 to vector<2x256xf32>
      %168 = arith.addf %166, %167 : vector<2x256xf32>
      %169 = tpu.reciprocal %168 {approx = true} : vector<2x256xf32> -> vector<2x256xf32>
      %170 = arith.mulf %161, %169 : vector<2x256xf32>
      %cst_73 = arith.constant 0.000000e+00 : f32
      %171 = vector.broadcast %cst_73 : f32 to vector<2x256xf32>
      %172 = arith.cmpf oge, %161, %171 : vector<2x256xf32>
      %173 = arith.mulf %170, %154 : vector<2x256xf32>
      %174 = arith.subf %151, %173 : vector<2x256xf32>
      %175 = arith.select %172, %151, %174 : vector<2x256xi1>, vector<2x256xf32>
      %176 = arith.mulf %170, %155 : vector<2x256xf32>
      %177 = arith.subf %152, %176 : vector<2x256xf32>
      %178 = arith.select %172, %152, %177 : vector<2x256xi1>, vector<2x256xf32>
      %179 = arith.mulf %170, %156 : vector<2x256xf32>
      %180 = arith.subf %153, %179 : vector<2x256xf32>
      %181 = arith.select %172, %153, %180 : vector<2x256xi1>, vector<2x256xf32>
      %182 = tpu.concatenate %175, %178, %181 in 0 : vector<2x256xf32>, vector<2x256xf32>, vector<2x256xf32> -> vector<6x256xf32>
      %183 = arith.truncf %182 : vector<6x256xf32> to vector<6x256xbf16>
      %c0_74 = arith.constant 0 : index
      %c0_75 = arith.constant 0 : index
      %184 = vector.load %arg8[%c0_74, %c0_75] : memref<256x256xbf16, #tpu.memory_space<vmem>>, vector<256x256xbf16>
      %cst_76 = arith.constant dense<0.000000e+00> : vector<6x256xf32>
      %185 = tpu.matmul %183, %184, %cst_76 {dimension_numbers = #tpu.dot_dimension_numbers<[1], [0], [0], [1], [0, 0, 1, 1], [], []>} : vector<6x256xbf16>, vector<256x256xbf16>, vector<6x256xf32> -> vector<6x256xf32>
      %186 = vector.extract_strided_slice %185 {offsets = [0, 0], sizes = [2, 128], strides = [1, 1]} : vector<6x256xf32> to vector<2x128xf32>
      %187 = vector.extract_strided_slice %185 {offsets = [2, 0], sizes = [2, 128], strides = [1, 1]} : vector<6x256xf32> to vector<2x128xf32>
      %188 = vector.extract_strided_slice %185 {offsets = [4, 0], sizes = [2, 128], strides = [1, 1]} : vector<6x256xf32> to vector<2x128xf32>
      %189 = vector.extract_strided_slice %185 {offsets = [0, 128], sizes = [2, 128], strides = [1, 1]} : vector<6x256xf32> to vector<2x128xf32>
      %190 = vector.extract_strided_slice %185 {offsets = [2, 128], sizes = [2, 128], strides = [1, 1]} : vector<6x256xf32> to vector<2x128xf32>
      %191 = vector.extract_strided_slice %185 {offsets = [4, 128], sizes = [2, 128], strides = [1, 1]} : vector<6x256xf32> to vector<2x128xf32>
      %192 = arith.mulf %186, %189 : vector<2x128xf32>
      %193 = arith.mulf %187, %190 : vector<2x128xf32>
      %194 = arith.addf %192, %193 : vector<2x128xf32>
      %195 = arith.mulf %188, %191 : vector<2x128xf32>
      %196 = arith.addf %194, %195 : vector<2x128xf32>
      %197 = arith.mulf %189, %189 : vector<2x128xf32>
      %198 = arith.mulf %190, %190 : vector<2x128xf32>
      %199 = arith.addf %197, %198 : vector<2x128xf32>
      %200 = arith.mulf %191, %191 : vector<2x128xf32>
      %201 = arith.addf %199, %200 : vector<2x128xf32>
      %cst_77 = arith.constant 9.99999997E-7 : f32
      %202 = vector.broadcast %cst_77 : f32 to vector<2x128xf32>
      %203 = arith.addf %201, %202 : vector<2x128xf32>
      %204 = tpu.reciprocal %203 {approx = true} : vector<2x128xf32> -> vector<2x128xf32>
      %205 = arith.mulf %196, %204 : vector<2x128xf32>
      %cst_78 = arith.constant 0.000000e+00 : f32
      %206 = vector.broadcast %cst_78 : f32 to vector<2x128xf32>
      %207 = arith.cmpf oge, %196, %206 : vector<2x128xf32>
      %208 = arith.mulf %205, %189 : vector<2x128xf32>
      %209 = arith.subf %186, %208 : vector<2x128xf32>
      %210 = arith.select %207, %186, %209 : vector<2x128xi1>, vector<2x128xf32>
      %211 = arith.mulf %205, %190 : vector<2x128xf32>
      %212 = arith.subf %187, %211 : vector<2x128xf32>
      %213 = arith.select %207, %187, %212 : vector<2x128xi1>, vector<2x128xf32>
      %214 = arith.mulf %205, %191 : vector<2x128xf32>
      %215 = arith.subf %188, %214 : vector<2x128xf32>
      %216 = arith.select %207, %188, %215 : vector<2x128xi1>, vector<2x128xf32>
      %217 = tpu.concatenate %210, %213, %216 in 0 : vector<2x128xf32>, vector<2x128xf32>, vector<2x128xf32> -> vector<6x128xf32>
      %218 = arith.truncf %217 : vector<6x128xf32> to vector<6x128xbf16>
      %c0_79 = arith.constant 0 : index
      %c0_80 = arith.constant 0 : index
      %219 = vector.load %arg9[%c0_79, %c0_80] : memref<128x64xbf16, #tpu.memory_space<vmem>>, vector<128x64xbf16>
      %cst_81 = arith.constant dense<0.000000e+00> : vector<6x64xf32>
      %220 = tpu.matmul %218, %219, %cst_81 {dimension_numbers = #tpu.dot_dimension_numbers<[1], [0], [0], [1], [0, 0, 1, 1], [], []>} : vector<6x128xbf16>, vector<128x64xbf16>, vector<6x64xf32> -> vector<6x64xf32>
      %221 = vector.extract_strided_slice %220 {offsets = [0, 0], sizes = [2, 64], strides = [1, 1]} : vector<6x64xf32> to vector<2x64xf32>
      %222 = vector.extract_strided_slice %220 {offsets = [2, 0], sizes = [2, 64], strides = [1, 1]} : vector<6x64xf32> to vector<2x64xf32>
      %223 = vector.extract_strided_slice %220 {offsets = [4, 0], sizes = [2, 64], strides = [1, 1]} : vector<6x64xf32> to vector<2x64xf32>
      %c0_82 = arith.constant 0 : index
      %c0_83 = arith.constant 0 : index
      %c0_84 = arith.constant 0 : index
      %224 = vector.load %arg10[%c0_82, %c0_83, %c0_84] : memref<2x3x64xf32, #tpu.memory_space<vmem>>, vector<2x1x64xf32>
      %225 = vector.shape_cast %224 : vector<2x1x64xf32> to vector<2x64xf32>
      %226 = vector.shape_cast %221 : vector<2x64xf32> to vector<2x1x64xf32>
      tpu.vector_store %arg10[%c0_82, %c0_83, %c0_84], %226 {strides = array<i32>} : memref<2x3x64xf32, #tpu.memory_space<vmem>>, vector<2x1x64xf32>,
      %c0_85 = arith.constant 0 : index
      %c1_86 = arith.constant 1 : index
      %c0_87 = arith.constant 0 : index
      %227 = vector.load %arg10[%c0_85, %c1_86, %c0_87] : memref<2x3x64xf32, #tpu.memory_space<vmem>>, vector<2x1x64xf32>
      %228 = vector.shape_cast %227 : vector<2x1x64xf32> to vector<2x64xf32>
      %229 = vector.shape_cast %222 : vector<2x64xf32> to vector<2x1x64xf32>
      tpu.vector_store %arg10[%c0_85, %c1_86, %c0_87], %229 {strides = array<i32>} : memref<2x3x64xf32, #tpu.memory_space<vmem>>, vector<2x1x64xf32>,
      %c0_88 = arith.constant 0 : index
      %c2_89 = arith.constant 2 : index
      %c0_90 = arith.constant 0 : index
      %230 = vector.load %arg10[%c0_88, %c2_89, %c0_90] : memref<2x3x64xf32, #tpu.memory_space<vmem>>, vector<2x1x64xf32>
      %231 = vector.shape_cast %230 : vector<2x1x64xf32> to vector<2x64xf32>
      %232 = vector.shape_cast %223 : vector<2x64xf32> to vector<2x1x64xf32>
      tpu.vector_store %arg10[%c0_88, %c2_89, %c0_90], %232 {strides = array<i32>} : memref<2x3x64xf32, #tpu.memory_space<vmem>>, vector<2x1x64xf32>,
    } else {
    }
    return
  }
  func.func @transform_0(%arg0: i32, %arg1: i32) -> (i32, i32, i32, i32) {
    %c0_i32 = arith.constant 0 : i32
    %c0_i32_0 = arith.constant 0 : i32
    %c0_i32_1 = arith.constant 0 : i32
    return %arg0, %c0_i32, %arg1, %c0_i32_0 : i32, i32, i32, i32
  }
  func.func @transform_1(%arg0: i32, %arg1: i32) -> (i32, i32) {
    %c0_i32 = arith.constant 0 : i32
    %c0_i32_0 = arith.constant 0 : i32
    %c0_i32_1 = arith.constant 0 : i32
    return %c0_i32, %c0_i32_0 : i32, i32
  }
  func.func @transform_2(%arg0: i32, %arg1: i32) -> (i32, i32) {
    %c0_i32 = arith.constant 0 : i32
    %c0_i32_0 = arith.constant 0 : i32
    %c0_i32_1 = arith.constant 0 : i32
    return %c0_i32, %c0_i32_0 : i32, i32
  }
  func.func @transform_3(%arg0: i32, %arg1: i32) -> (i32, i32) {
    %c0_i32 = arith.constant 0 : i32
    %c0_i32_0 = arith.constant 0 : i32
    %c0_i32_1 = arith.constant 0 : i32
    return %c0_i32, %c0_i32_0 : i32, i32
  }
  func.func @transform_4(%arg0: i32, %arg1: i32) -> (i32, i32) {
    %c0_i32 = arith.constant 0 : i32
    %c0_i32_0 = arith.constant 0 : i32
    %c0_i32_1 = arith.constant 0 : i32
    return %c0_i32, %c0_i32_0 : i32, i32
  }
  func.func @transform_5(%arg0: i32, %arg1: i32) -> (i32, i32) {
    %c0_i32 = arith.constant 0 : i32
    %c0_i32_0 = arith.constant 0 : i32
    %c0_i32_1 = arith.constant 0 : i32
    return %c0_i32, %c0_i32_0 : i32, i32
  }
  func.func @transform_6(%arg0: i32, %arg1: i32) -> (i32, i32) {
    %c0_i32 = arith.constant 0 : i32
    %c0_i32_0 = arith.constant 0 : i32
    %c0_i32_1 = arith.constant 0 : i32
    return %c0_i32, %c0_i32_0 : i32, i32
  }
  func.func @transform_7(%arg0: i32, %arg1: i32) -> (i32, i32) {
    %c0_i32 = arith.constant 0 : i32
    %c0_i32_0 = arith.constant 0 : i32
    %c0_i32_1 = arith.constant 0 : i32
    return %c0_i32, %c0_i32_0 : i32, i32
  }
  func.func @transform_8(%arg0: i32, %arg1: i32) -> (i32, i32, i32) {
    %c0_i32 = arith.constant 0 : i32
    %c0_i32_0 = arith.constant 0 : i32
    %c0_i32_1 = arith.constant 0 : i32
    return %arg0, %c0_i32, %c0_i32_0 : i32, i32, i32
  }
}

</mosaic_0001>

<llo_original>
// kernel: stnkd_forward.1
$region0: #{stnkd_forward.1}
  #allocation0 [shape = 'u32[]', space=smem, size = 0x4, offset = 0x4, fixed_abs, tag = 'smem constant byte address 0x4 - core index']
  #allocation1 [shape = 'u32[144,128]{1,0:T(1,128)}', space=vmem, size = 0x12000, scoped, tag = 'internal scratch']
  #allocation2 [shape = 'f32[2,384]{1,0:T(2,128)}', space=vmem, size = 0xc00, scoped, tag = 'scratch operand']
  #allocation3 [shape = 'f32[3,2,384]{2,1,0:T(2,128)}', space=vmem, size = 0x2400, scoped, tag = 'scratch operand']
  %s0 = inlined_call_operand.vmem [shape: bf16[4,3,16,64], index: 0, kind: input, shape index: {}]
  %s1 = inlined_call_operand.vmem [shape: bf16[64,256], index: 1, kind: input, shape index: {}]
  %s2 = inlined_call_operand.vmem [shape: bf16[128,256], index: 2, kind: input, shape index: {}]
  %s3 = inlined_call_operand.vmem [shape: bf16[128,768], index: 3, kind: input, shape index: {}]
  %s4 = inlined_call_operand.vmem [shape: bf16[384,384], index: 4, kind: input, shape index: {}]
  %s5 = inlined_call_operand.vmem [shape: bf16[384,512], index: 5, kind: input, shape index: {}]
  %s6 = inlined_call_operand.vmem [shape: bf16[256,256], index: 6, kind: input, shape index: {}]
  %s7 = inlined_call_operand.vmem [shape: bf16[128,64], index: 7, kind: input, shape index: {}]
  %s8 = inlined_call_operand.vmem [shape: f32[4,3,64], index: 8, kind: output, shape index: {}]
  %s9 = sld [smem:[#allocation0]]
  $region73: #{stnkd_forward.1} parent=0
    _
  %s11 = ssub.s32 1, %s9
  %s12 = scalar_select 0, %s11, %s9
  loop: start=0, step=1, limit=4
  $region2: #{stnkd_forward.1} parent=0 // loop_pre_header
    _
  $region3: #{stnkd_forward.1} parent=0 // loop_header
    %s14 = sphi 0, %s18
    %p15 = scmp.ge.s32.totalorder %s14, 4
    %s21 = sphi 0, %s33
    %s22 = sphi 0, %s29
    %s23 = sphi 0, %s21
    %s24 = sphi 0, %s22
    %s25 = sphi 0, %s23
    %s26 = sphi 0, %s24
    %s38 = sphi 0, %s40
    %s41 = sphi 0, %s38
    %s42 = sphi 0, %s41
    %s58 = sphi 0, %s42
    %s62 = sphi 0, %s62
    %s64 = sphi 0, %s62
    %s65 = sphi 0, %s64
    %s79 = sphi 0, %s65
    %s83 = sphi 0, %s83
    %s85 = sphi 0, %s83
    %s86 = sphi 0, %s85
    %s100 = sphi 0, %s86
    %s104 = sphi 0, %s104
    %s106 = sphi 0, %s104
    %s107 = sphi 0, %s106
    %s121 = sphi 0, %s107
    %s125 = sphi 0, %s125
    %s127 = sphi 0, %s125
    %s128 = sphi 0, %s127
    %s142 = sphi 0, %s128
    %s146 = sphi 0, %s146
    %s148 = sphi 0, %s146
    %s149 = sphi 0, %s148
    %s163 = sphi 0, %s149
    %s167 = sphi 0, %s167
    %s169 = sphi 0, %s167
    %s170 = sphi 0, %s169
    %s184 = sphi 0, %s170
    %s188 = sphi 0, %s188
    %s190 = sphi 0, %s188
    %s191 = sphi 0, %s190
    %s205 = sphi 0, %s191
    %s211 = sphi 0, %s213
    %s214 = sphi 0, %s211
    %s215 = sphi 0, %s214
    %s231 = sphi 0, %s215
  $region4: #{stnkd_forward.1} parent=0 // loop_header_branch
    %17 = sbr.rel (%p15) target = $region8
  $region5: #{stnkd_forward.1} parent=0 // loop_body
    %s19 = ssub.s32 %s14, 1
    %s20 = ssub.s32 %s14, 2
    %s27 = sadd.s32 1, %s22
    %p28 = scmp.ge.s32.totalorder %s27, 1
    %s29 = scalar_select %p28, 0, %s27
    %s30 = sadd.s32 1, %s21
    %s31 = scalar_select %p28, %s30, %s21
    %p32 = scmp.ge.s32.totalorder %s31, 2
    %s33 = scalar_select %p32, 0, %s31
    %s34 = ssub.s32 %s21, %s33
    %s35 = ssub.s32 %s22, %s29
    %s36 = sor.u32 %s34, %s35
    %p37 = scmp.eq.s32.totalorder %s36, 0
    %s39 = sadd.s32 %s38, 1
    %s40 = scalar_select %p37, %s38, %s39
    %p43 = pneg %p37
    %p44 = scmp.eq.s32.totalorder %s14, 1
    %p45 = por %p43, %p44
    %p46 = scmp.ne.s32.totalorder %s38, %s41
    %p47 = scmp.eq.s32.totalorder %s14, 0
    %p48 = por %p46, %p47
    %p49 = scmp.ne.s32.totalorder %s38, %s41
    %p50 = scmp.eq.s32.totalorder %s19, 1
    %p51 = por %p49, %p50
    %p52 = scmp.ne.s32.totalorder %s41, %s42
    %p53 = scmp.eq.s32.totalorder %s19, 0
    %p54 = por %p52, %p53
    %p55 = scmp.ne.s32.totalorder %s41, %s42
    %p56 = scmp.eq.s32.totalorder %s20, 1
    %p57 = por %p55, %p56
    %p59 = scmp.ne.s32.totalorder %s42, %s58
    %p60 = scmp.eq.s32.totalorder %s20, 0
    %p61 = por %p59, %p60
    %s63 = sadd.s32 %s62, 1
    %p66 = scmp.eq.s32.totalorder %s14, 1
    %p67 = scmp.ne.s32.totalorder %s62, %s64
    %p68 = scmp.eq.s32.totalorder %s14, 0
    %p69 = por %p67, %p68
    %p70 = scmp.ne.s32.totalorder %s62, %s64
    %p71 = scmp.eq.s32.totalorder %s19, 1
    %p72 = por %p70, %p71
    %p73 = scmp.ne.s32.totalorder %s64, %s65
    %p74 = scmp.eq.s32.totalorder %s19, 0
    %p75 = por %p73, %p74
    %p76 = scmp.ne.s32.totalorder %s64, %s65
    %p77 = scmp.eq.s32.totalorder %s20, 1
    %p78 = por %p76, %p77
    %p80 = scmp.ne.s32.totalorder %s65, %s79
    %p81 = scmp.eq.s32.totalorder %s20, 0
    %p82 = por %p80, %p81
    %s84 = sadd.s32 %s83, 1
    %p87 = scmp.eq.s32.totalorder %s14, 1
    %p88 = scmp.ne.s32.totalorder %s83, %s85
    %p89 = scmp.eq.s32.totalorder %s14, 0
    %p90 = por %p88, %p89
    %p91 = scmp.ne.s32.totalorder %s83, %s85
    %p92 = scmp.eq.s32.totalorder %s19, 1
    %p93 = por %p91, %p92
    %p94 = scmp.ne.s32.totalorder %s85, %s86
    %p95 = scmp.eq.s32.totalorder %s19, 0
    %p96 = por %p94, %p95
    %p97 = scmp.ne.s32.totalorder %s85, %s86
    %p98 = scmp.eq.s32.totalorder %s20, 1
    %p99 = por %p97, %p98
    %p101 = scmp.ne.s32.totalorder %s86, %s100
    %p102 = scmp.eq.s32.totalorder %s20, 0
    %p103 = por %p101, %p102
    %s105 = sadd.s32 %s104, 1
    %p108 = scmp.eq.s32.totalorder %s14, 1
    %p109 = scmp.ne.s32.totalorder %s104, %s106
    %p110 = scmp.eq.s32.totalorder %s14, 0
    %p111 = por %p109, %p110
    %p112 = scmp.ne.s32.totalorder %s104, %s106
    %p113 = scmp.eq.s32.totalorder %s19, 1
    %p114 = por %p112, %p113
    %p115 = scmp.ne.s32.totalorder %s106, %s107
    %p116 = scmp.eq.s32.totalorder %s19, 0
    %p117 = por %p115, %p116
    %p118 = scmp.ne.s32.totalorder %s106, %s107
    %p119 = scmp.eq.s32.totalorder %s20, 1
    %p120 = por %p118, %p119
    %p122 = scmp.ne.s32.totalorder %s107, %s121
    %p123 = scmp.eq.s32.totalorder %s20, 0
    %p124 = por %p122, %p123
    %s126 = sadd.s32 %s125, 1
    %p129 = scmp.eq.s32.totalorder %s14, 1
    %p130 = scmp.ne.s32.totalorder %s125, %s127
    %p131 = scmp.eq.s32.totalorder %s14, 0
    %p132 = por %p130, %p131
    %p133 = scmp.ne.s32.totalorder %s125, %s127
    %p134 = scmp.eq.s32.totalorder %s19, 1
    %p135 = por %p133, %p134
    %p136 = scmp.ne.s32.totalorder %s127, %s128
    %p137 = scmp.eq.s32.totalorder %s19, 0
    %p138 = por %p136, %p137
    %p139 = scmp.ne.s32.totalorder %s127, %s128
    %p140 = scmp.eq.s32.totalorder %s20, 1
    %p141 = por %p139, %p140
    %p143 = scmp.ne.s32.totalorder %s128, %s142
    %p144 = scmp.eq.s32.totalorder %s20, 0
    %p145 = por %p143, %p144
    %s147 = sadd.s32 %s146, 1
    %p150 = scmp.eq.s32.totalorder %s14, 1
    %p151 = scmp.ne.s32.totalorder %s146, %s148
    %p152 = scmp.eq.s32.totalorder %s14, 0
    %p153 = por %p151, %p152
    %p154 = scmp.ne.s32.totalorder %s146, %s148
    %p155 = scmp.eq.s32.totalorder %s19, 1
    %p156 = por %p154, %p155
    %p157 = scmp.ne.s32.totalorder %s148, %s149
    %p158 = scmp.eq.s32.totalorder %s19, 0
    %p159 = por %p157, %p158
    %p160 = scmp.ne.s32.totalorder %s148, %s149
    %p161 = scmp.eq.s32.totalorder %s20, 1
    %p162 = por %p160, %p161
    %p164 = scmp.ne.s32.totalorder %s149, %s163
    %p165 = scmp.eq.s32.totalorder %s20, 0
    %p166 = por %p164, %p165
    %s168 = sadd.s32 %s167, 1
    %p171 = scmp.eq.s32.totalorder %s14, 1
    %p172 = scmp.ne.s32.totalorder %s167, %s169
    %p173 = scmp.eq.s32.totalorder %s14, 0
    %p174 = por %p172, %p173
    %p175 = scmp.ne.s32.totalorder %s167, %s169
    %p176 = scmp.eq.s32.totalorder %s19, 1
    %p177 = por %p175, %p176
    %p178 = scmp.ne.s32.totalorder %s169, %s170
    %p179 = scmp.eq.s32.totalorder %s19, 0
    %p180 = por %p178, %p179
    %p181 = scmp.ne.s32.totalorder %s169, %s170
    %p182 = scmp.eq.s32.totalorder %s20, 1
    %p183 = por %p181, %p182
    %p185 = scmp.ne.s32.totalorder %s170, %s184
    %p186 = scmp.eq.s32.totalorder %s20, 0
    %p187 = por %p185, %p186
    %s189 = sadd.s32 %s188, 1
    %p192 = scmp.eq.s32.totalorder %s14, 1
    %p193 = scmp.ne.s32.totalorder %s188, %s190
    %p194 = scmp.eq.s32.totalorder %s14, 0
    %p195 = por %p193, %p194
    %p196 = scmp.ne.s32.totalorder %s188, %s190
    %p197 = scmp.eq.s32.totalorder %s19, 1
    %p198 = por %p196, %p197
    %p199 = scmp.ne.s32.totalorder %s190, %s191
    %p200 = scmp.eq.s32.totalorder %s19, 0
    %p201 = por %p199, %p200
    %p202 = scmp.ne.s32.totalorder %s190, %s191
    %p203 = scmp.eq.s32.totalorder %s20, 1
    %p204 = por %p202, %p203
    %p206 = scmp.ne.s32.totalorder %s191, %s205
    %p207 = scmp.eq.s32.totalorder %s20, 0
    %p208 = por %p206, %p207
    %s209 = ssub.s32 %s21, %s33
    %p210 = scmp.eq.s32.totalorder %s209, 0
    %s212 = sadd.s32 %s211, 1
    %s213 = scalar_select %p210, %s211, %s212
    %p216 = pneg %p210
    %p217 = scmp.eq.s32.totalorder %s14, 1
    %p218 = por %p216, %p217
    %p219 = scmp.ne.s32.totalorder %s211, %s214
    %p220 = scmp.eq.s32.totalorder %s14, 0
    %p221 = por %p219, %p220
    %p222 = scmp.ne.s32.totalorder %s211, %s214
    %p223 = scmp.eq.s32.totalorder %s19, 1
    %p224 = por %p222, %p223
    %p225 = scmp.ne.s32.totalorder %s214, %s215
    %p226 = scmp.eq.s32.totalorder %s19, 0
    %p227 = por %p225, %p226
    %p228 = scmp.ne.s32.totalorder %s214, %s215
    %p229 = scmp.eq.s32.totalorder %s20, 1
    %p230 = por %p228, %p229
    %p232 = scmp.ne.s32.totalorder %s215, %s231
    %p233 = scmp.eq.s32.totalorder %s20, 0
    %p234 = por %p232, %p233
    %p235 = scmp.le.s32.totalorder 1, %s14
    %p236 = scmp.lt.s32.totalorder %s14, 3
    %p237 = pnand %p235, %p236
    %p238 = pneg %p237
    // Predicated region
    $region9: #{stnkd_forward.1} parent=5 // pred_check
      _
    $region10: #{stnkd_forward.1} parent=5 // pred_check_branch
      %240 = sbr.rel (%p237) target = $region12
    $region11: #{stnkd_forward.1} parent=5 // pred_region
      %s241 = ssub.s32 %s14, 1
      // Predicated region
      $region13: #{stnkd_forward.1} parent=11 // pred_check
        %p242 = pneg %p75
      $region14: #{stnkd_forward.1} parent=11 // pred_check_branch
        %244 = sbr.rel (%p242) target = $region16
      $region15: #{stnkd_forward.1} parent=11 // pred_region
        _
      $region16: #{stnkd_forward.1} parent=11 // pred_fallthru
        _
      // Predicated region
      $region17: #{stnkd_forward.1} parent=11 // pred_check
        %p245 = pneg %p96
      $region18: #{stnkd_forward.1} parent=11 // pred_check_branch
        %247 = sbr.rel (%p245) target = $region20
      $region19: #{stnkd_forward.1} parent=11 // pred_region
        _
      $region20: #{stnkd_forward.1} parent=11 // pred_fallthru
        _
      // Predicated region
      $region21: #{stnkd_forward.1} parent=11 // pred_check
        %p248 = pneg %p117
      $region22: #{stnkd_forward.1} parent=11 // pred_check_branch
        %250 = sbr.rel (%p248) target = $region24
      $region23: #{stnkd_forward.1} parent=11 // pred_region
        _
      $region24: #{stnkd_forward.1} parent=11 // pred_fallthru
        _
      // Predicated region
      $region25: #{stnkd_forward.1} parent=11 // pred_check
        %p251 = pneg %p138
      $region26: #{stnkd_forward.1} parent=11 // pred_check_branch
        %253 = sbr.rel (%p251) target = $region28
      $region27: #{stnkd_forward.1} parent=11 // pred_region
        _
      $region28: #{stnkd_forward.1} parent=11 // pred_fallthru
        _
      // Predicated region
      $region29: #{stnkd_forward.1} parent=11 // pred_check
        %p254 = pneg %p159
      $region30: #{stnkd_forward.1} parent=11 // pred_check_branch
        %256 = sbr.rel (%p254) target = $region32
      $region31: #{stnkd_forward.1} parent=11 // pred_region
        _
      $region32: #{stnkd_forward.1} parent=11 // pred_fallthru
        _
      // Predicated region
      $region33: #{stnkd_forward.1} parent=11 // pred_check
        %p257 = pneg %p180
      $region34: #{stnkd_forward.1} parent=11 // pred_check_branch
        %259 = sbr.rel (%p257) target = $region36
      $region35: #{stnkd_forward.1} parent=11 // pred_region
        _
      $region36: #{stnkd_forward.1} parent=11 // pred_fallthru
        _
      // Predicated region
      $region37: #{stnkd_forward.1} parent=11 // pred_check
        %p260 = pneg %p201
      $region38: #{stnkd_forward.1} parent=11 // pred_check_branch
        %262 = sbr.rel (%p260) target = $region40
      $region39: #{stnkd_forward.1} parent=11 // pred_region
        _
      $region40: #{stnkd_forward.1} parent=11 // pred_fallthru
        _
    $region12: #{stnkd_forward.1} parent=5 // pred_fallthru
      _
    %p263 = scmp.lt.s32.totalorder %s14, 2
    // Predicated region
    $region41: #{stnkd_forward.1} parent=5 // pred_check
      %p264 = pneg %p263
    $region42: #{stnkd_forward.1} parent=5 // pred_check_branch
      %266 = sbr.rel (%p264) target = $region44
    $region43: #{stnkd_forward.1} parent=5 // pred_region
      // Predicated region
      $region45: #{stnkd_forward.1} parent=43 // pred_check
        %p267 = pneg %p48
      $region46: #{stnkd_forward.1} parent=43 // pred_check_branch
        %269 = sbr.rel (%p267) target = $region48
      $region47: #{stnkd_forward.1} parent=43 // pred_region
        %s270 = smul.u32 2, %s21
        %s271 = smul.u32 2, %s22
        %p272 = scmp.lt.s32.totalorder %s270, 3
        %s273 = scalar_select %p272, %s270, 3
        %p274 = scmp.lt.s32.totalorder %s271, 1
        %s275 = scalar_select %p274, %s271, 1
        %s276 = smul.addr %s273, 6
        %s277 = sadd.s32 %s275, %s276
        %s278 = smul.addr %s277, 4
        %s279 = scalar_lea.vmem %s0, %s278
        %s280 = smul.u32 2, %s21
        %s281 = smul.u32 2, %s22
      $region48: #{stnkd_forward.1} parent=43 // pred_fallthru
        _
    $region44: #{stnkd_forward.1} parent=5 // pred_fallthru
      _
    %p282 = scmp.le.s32.totalorder 1, %s14
    %p283 = scmp.lt.s32.totalorder %s14, 3
    %p284 = pnand %p282, %p283
    %p285 = pneg %p284
    // Predicated region
    $region49: #{stnkd_forward.1} parent=5 // pred_check
      _
    $region50: #{stnkd_forward.1} parent=5 // pred_check_branch
      %287 = sbr.rel (%p284) target = $region52
    $region51: #{stnkd_forward.1} parent=5 // pred_region
      %s288 = ssub.s32 %s14, 1
      %s289 = smul.u32 2, %s23
      %s290 = smul.u32 2, %s24
      %p291 = scmp.lt.s32.totalorder %s289, 3
      %s292 = scalar_select %p291, %s289, 3
      %p293 = scmp.lt.s32.totalorder %s290, 1
      %s294 = scalar_select %p293, %s290, 1
      %s295 = smul.addr %s292, 6
      %s296 = sadd.s32 %s294, %s295
      %s297 = smul.addr %s296, 4
      %s298 = scalar_lea.vmem %s0, %s297
      %p299 = pneg %p54
      %p300 = pneg %p51
      %p301 = pneg %p75
      %p302 = pneg %p72
      %p303 = pneg %p96
      %p304 = pneg %p93
      %p305 = pneg %p117
      %p306 = pneg %p114
      %p307 = pneg %p138
      %p308 = pneg %p135
      %p309 = pneg %p159
      %p310 = pneg %p156
      %p311 = pneg %p180
      %p312 = pneg %p177
      %p313 = pneg %p201
      %p314 = pneg %p198
      %p315 = pneg %p227
      %p316 = pneg %p224
      %s317 = smul.u32 2, %s23
      %p318 = scmp.lt.s32.totalorder %s317, 3
      %s319 = scalar_select %p318, %s317, 3
      %s320 = smul.addr %s319, 4
      %s321 = scalar_lea.vmem %s8, %s320
      %s322 = smul.u32 2, %s23
      %s323 = smul.u32 2, %s24
      %p324 = scmp.lt.s32.totalorder %s322, 3
      %s325 = scalar_select %p324, %s322, 3
      %p326 = scmp.lt.s32.totalorder %s323, 1
      %s327 = scalar_select %p326, %s323, 1
      %s328 = smul.addr %s325, 6
      %s329 = sadd.s32 %s327, %s328
      %s330 = smul.addr %s329, 4
      %s331 = scalar_lea.vmem %s0, %s330
      %s332 = smul.u32 2, %s23
      %s333 = smul.u32 2, %s24
      %s334 = smul.u32 2, %s23
      %p335 = scmp.lt.s32.totalorder %s334, 3
      %s336 = scalar_select %p335, %s334, 3
      %s337 = smul.addr %s336, 4
      %s338 = scalar_lea.vmem %s8, %s337
      %s339 = smul.u32 2, %s23
      %p341 = scmp.eq.s32.totalorder %s24, 0
      // Predicated region
      $region53: #{stnkd_forward.1} parent=51 // pred_check
        %p342 = pneg %p341
      $region54: #{stnkd_forward.1} parent=51 // pred_check_branch
        %344 = sbr.rel (%p342) target = $region56
      $region55: #{stnkd_forward.1} parent=51 // pred_region
        %345 = vst [vmem:[#allocation3] sm:$0x3f] 0.0
        %346 = vst [vmem:[#allocation3 + $0x6] sm:$0x3f] 0.0
        %347 = vst [vmem:[#allocation3 + $0xc] sm:$0x3f] 0.0
        %348 = vst [vmem:[#allocation2] sm:$0x3f] -inf
      $region56: #{stnkd_forward.1} parent=51 // pred_fallthru
        _
      %v349 = vld [vmem:[%s331] sm:$0xf]
      %v350 = vld [vmem:[%s331 + $0x4] sm:$0xf]
      %v351 = vld [vmem:[%s331 + $0x8] sm:$0xf]
      %v352 = vld [vmem:[%s331 + $0xc] sm:$0xf]
      %v353 = vld [vmem:[%s331 + $0x10] sm:$0xf]
      %v354 = vld [vmem:[%s331 + $0x14] sm:$0xf]
      %v355 = vld [vmem:[%s331 + $0x18] sm:$0xf]
      %v356 = vld [vmem:[%s331 + $0x1c] sm:$0xf]
      %v357 = vld [vmem:[%s331 + $0x20] sm:$0xf]
      %v358 = vld [vmem:[%s331 + $0x24] sm:$0xf]
      %v359 = vld [vmem:[%s331 + $0x28] sm:$0xf]
      %v360 = vld [vmem:[%s331 + $0x2c] sm:$0xf]
      %v361 = vld [vmem:[%s1] sm:$0xff]
      %v362 = vld [vmem:[%s1 + $0x8] sm:$0xff]
      %v363 = vld [vmem:[%s1 + $0x10] sm:$0xff]
      %v364 = vld [vmem:[%s1 + $0x18] sm:$0xff]
      %v365 = vld [vmem:[%s1 + $0x20] sm:$0xff]
      %v366 = vld [vmem:[%s1 + $0x28] sm:$0xff]
      %v367 = vld [vmem:[%s1 + $0x30] sm:$0xff]
      %v368 = vld [vmem:[%s1 + $0x38] sm:$0xff]
      %v381 = vunpack.c.l.b16 %v349
      %v382 = vunpack.c.l.b16 %v350
      %v383 = vunpack.c.l.b16 %v351
      %v384 = vunpack.c.l.b16 %v352
      %v385 = vunpack.c.l.b16 %v353
      %v386 = vunpack.c.l.b16 %v354
      %v387 = vunpack.c.l.b16 %v355
      %v388 = vunpack.c.l.b16 %v356
      %v389 = vunpack.c.l.b16 %v357
      %v390 = vunpack.c.l.b16 %v358
      %v391 = vunpack.c.l.b16 %v359
      %v392 = vunpack.c.l.b16 %v360
      %v393 = vpack.c.b16 %v382, %v381
      %v394 = vpack.c.b16 %v384, %v383
      %v395 = vpack.c.b16 %v386, %v385
      %v396 = vpack.c.b16 %v388, %v387
      %v397 = vpack.c.b16 %v390, %v389
      %v398 = vpack.c.b16 %v392, %v391
      %v407 = vunpack.c.l.b16 %v361
      %v408 = vunpack.c.h.b16 %v361
      %v409 = vunpack.c.l.b16 %v362
      %v410 = vunpack.c.h.b16 %v362
      %v411 = vunpack.c.l.b16 %v363
      %v412 = vunpack.c.h.b16 %v363
      %v413 = vunpack.c.l.b16 %v364
      %v414 = vunpack.c.h.b16 %v364
      %v415 = vunpack.c.l.b16 %v365
      %v416 = vunpack.c.h.b16 %v365
      %v417 = vunpack.c.l.b16 %v366
      %v418 = vunpack.c.h.b16 %v366
      %v419 = vunpack.c.l.b16 %v367
      %v420 = vunpack.c.h.b16 %v367
      %v421 = vunpack.c.l.b16 %v368
      %v422 = vunpack.c.h.b16 %v368
      %v423 = vpack.c.b16 %v409, %v407
      %v424 = vpack.c.b16 %v410, %v408
      %v425 = vpack.c.b16 %v413, %v411
      %v426 = vpack.c.b16 %v414, %v412
      %v427 = vpack.c.b16 %v417, %v415
      %v428 = vpack.c.b16 %v418, %v416
      %v429 = vpack.c.b16 %v421, %v419
      %v430 = vpack.c.b16 %v422, %v420
      %vm439 = vcmask 523264
      %v441 = vsel %vm439, %v393, 0
      %v444 = vsel %vm439, %v394, 0
      %v447 = vsel %vm439, %v395, 0
      %v450 = vsel %vm439, %v396, 0
      %v453 = vsel %vm439, %v397, 0
      %v456 = vsel %vm439, %v398, 0
      %458 = vmatprep.subr.bf16.mxu0 %v424
      %459 = vmatpush1.bf16.msra.mxu0 %v423
      %460 = vmatprep.subr.bf16.mxu0 %v426
      %461 = vmatpush1.bf16.msra.mxu0 %v425
      %462 = vmatprep.subr.bf16.mxu0 %v428
      %463 = vmatpush1.bf16.msra.mxu0 %v427
      %464 = vmatprep.subr.bf16.mxu0 %v430
      %465 = vmatpush1.bf16.msra.mxu0 %v429
      %466 = vmatprep.subr.bf16.mxu0 0
      %467 = vmatpush1.bf16.msra.mxu0 0
      %468 = vmatprep.subr.bf16.mxu0 0
      %469 = vmatpush1.bf16.msra.mxu0 0
      %470 = vmatprep.subr.bf16.mxu0 0
      %471 = vmatpush1.bf16.msra.mxu0 0
      %472 = vmatprep.subr.bf16.mxu0 0
      %473 = vmatpush1.bf16.msra.mxu0 0
      %474 = vmatprep.subr.bf16.mxu0 0
      %475 = vmatpush1.bf16.msra.mxu0 0
      %476 = vmatprep.subr.bf16.mxu0 0
      %477 = vmatpush1.bf16.msra.mxu0 0
      %478 = vmatprep.subr.bf16.mxu0 0
      %479 = vmatpush1.bf16.msra.mxu0 0
      %480 = vmatprep.subr.bf16.mxu0 0
      %481 = vmatpush1.bf16.msra.mxu0 0
      %482 = vmatprep.subr.bf16.mxu0 0
      %483 = vmatpush1.bf16.msra.mxu0 0
      %484 = vmatprep.subr.bf16.mxu0 0
      %485 = vmatpush1.bf16.msra.mxu0 0
      %486 = vmatprep.subr.bf16.mxu0 0
      %487 = vmatpush1.bf16.msra.mxu0 0
      %488 = vmatprep.subr.bf16.mxu0 0
      %489 = vmatpush1.bf16.msra.mxu0 0
      %490 = vmatprep.mubr.bf16.mxu0 0
      %491 = vmatmul.mubr.bf16.gmra.mrb[0].mxu0 %v441
      %v492 = vpop.f32.mrb[0].mxu0
      %v493 = vadd.f32 0.0, %v492
      %v494 = vpop.f32.mrb[0].mxu0
      %v495 = vadd.f32 0.0, %v494
      %v496 = vpop.f32.mrb[0].mxu0
      %v497 = vadd.f32 0.0, %v496
      %v498 = vpop.f32.mrb[0].mxu0
      %v499 = vadd.f32 0.0, %v498
      %500 = vmatprep.mubr.bf16.mxu0 0
      %501 = vmatmul.mubr.bf16.gmra.mrb[0].mxu0 %v444
      %v502 = vpop.f32.mrb[0].mxu0
      %v503 = vadd.f32 0.0, %v502
      %v504 = vpop.f32.mrb[0].mxu0
      %v505 = vadd.f32 0.0, %v504
      %v506 = vpop.f32.mrb[0].mxu0
      %v507 = vadd.f32 0.0, %v506
      %v508 = vpop.f32.mrb[0].mxu0
      %v509 = vadd.f32 0.0, %v508
      %510 = vmatprep.mubr.bf16.mxu0 0
      %511 = vmatmul.mubr.bf16.gmra.mrb[0].mxu0 %v447
      %v512 = vpop.f32.mrb[0].mxu0
      %v513 = vadd.f32 0.0, %v512
      %v514 = vpop.f32.mrb[0].mxu0
      %v515 = vadd.f32 0.0, %v514
      %v516 = vpop.f32.mrb[0].mxu0
      %v517 = vadd.f32 0.0, %v516
      %v518 = vpop.f32.mrb[0].mxu0
      %v519 = vadd.f32 0.0, %v518
      %520 = vmatprep.mubr.bf16.mxu0 0
      %521 = vmatmul.mubr.bf16.gmra.mrb[0].mxu0 %v450
      %v522 = vpop.f32.mrb[0].mxu0
      %v523 = vadd.f32 0.0, %v522
      %v524 = vpop.f32.mrb[0].mxu0
      %v525 = vadd.f32 0.0, %v524
      %v526 = vpop.f32.mrb[0].mxu0
      %v527 = vadd.f32 0.0, %v526
      %v528 = vpop.f32.mrb[0].mxu0
      %v529 = vadd.f32 0.0, %v528
      %530 = vmatprep.mubr.bf16.mxu0 0
      %531 = vmatmul.mubr.bf16.gmra.mrb[0].mxu0 %v453
      %v532 = vpop.f32.mrb[0].mxu0
      %v533 = vadd.f32 0.0, %v532
      %v534 = vpop.f32.mrb[0].mxu0
      %v535 = vadd.f32 0.0, %v534
      %v536 = vpop.f32.mrb[0].mxu0
      %v537 = vadd.f32 0.0, %v536
      %v538 = vpop.f32.mrb[0].mxu0
      %v539 = vadd.f32 0.0, %v538
      %540 = vmatprep.mubr.bf16.mxu0 0
      %541 = vmatmul.mubr.bf16.gmra.mrb[0].mxu0 %v456
      %v542 = vpop.f32.mrb[0].mxu0
      %v543 = vadd.f32 0.0, %v542
      %v544 = vpop.f32.mrb[0].mxu0
      %v545 = vadd.f32 0.0, %v544
      %v546 = vpop.f32.mrb[0].mxu0
      %v547 = vadd.f32 0.0, %v546
      %v548 = vpop.f32.mrb[0].mxu0
      %v549 = vadd.f32 0.0, %v548
      %550 = vdwg.mxu0
      %v551 = vmul.f32 %v493, %v495
      %v552 = vmul.f32 %v497, %v499
      %v553 = vmul.f32 %v503, %v505
      %v554 = vmul.f32 %v507, %v509
      %v555 = vmul.f32 %v513, %v515
      %v556 = vmul.f32 %v517, %v519
      %v557 = vmul.f32 %v523, %v525
      %v558 = vmul.f32 %v527, %v529
      %v559 = vmul.f32 %v533, %v535
      %v560 = vmul.f32 %v537, %v539
      %v561 = vmul.f32 %v543, %v545
      %v562 = vmul.f32 %v547, %v549
      %v563 = vadd.f32 %v551, %v553
      %v564 = vadd.f32 %v563, %v555
      %v565 = vadd.f32 %v552, %v554
      %v566 = vadd.f32 %v565, %v556
      %v567 = vadd.f32 %v557, %v559
      %v568 = vadd.f32 %v567, %v561
      %v569 = vadd.f32 %v558, %v560
      %v570 = vadd.f32 %v569, %v562
      %v571 = vmul.f32 %v495, %v495
      %v572 = vmul.f32 %v499, %v499
      %v573 = vmul.f32 %v505, %v505
      %v574 = vmul.f32 %v509, %v509
      %v575 = vmul.f32 %v515, %v515
      %v576 = vmul.f32 %v519, %v519
      %v577 = vmul.f32 %v525, %v525
      %v578 = vmul.f32 %v529, %v529
      %v579 = vmul.f32 %v535, %v535
      %v580 = vmul.f32 %v539, %v539
      %v581 = vmul.f32 %v545, %v545
      %v582 = vmul.f32 %v549, %v549
      %v583 = vadd.f32 %v571, %v573
      %v584 = vadd.f32 %v583, %v575
      %v585 = vadd.f32 %v572, %v574
      %v586 = vadd.f32 %v585, %v576
      %v587 = vadd.f32 %v577, %v579
      %v588 = vadd.f32 %v587, %v581
      %v589 = vadd.f32 %v578, %v580
      %v590 = vadd.f32 %v589, %v582
      %v591 = vadd.f32 %v584, 1e-06
      %v592 = vadd.f32 %v586, 1e-06
      %v593 = vadd.f32 %v588, 1e-06
      %v594 = vadd.f32 %v590, 1e-06
      %v595 = vrcp.pop %v591
      %v596 = vmul.f32 %v564, %v595
      %v597 = vrcp.pop %v592
      %v598 = vmul.f32 %v566, %v597
      %v599 = vrcp.pop %v593
      %v600 = vmul.f32 %v568, %v599
      %v601 = vrcp.pop %v594
      %v602 = vmul.f32 %v570, %v601
      %vm603 = vcmp.ge.f32.partialorder %v564, 0.0
      %vm604 = vcmp.ge.f32.partialorder %v566, 0.0
      %vm605 = vcmp.ge.f32.partialorder %v568, 0.0
      %vm606 = vcmp.ge.f32.partialorder %v570, 0.0
      %v607 = vmul.f32 %v596, %v495
      %v608 = vmul.f32 %v598, %v499
      %v609 = vmul.f32 %v596, %v505
      %v610 = vmul.f32 %v598, %v509
      %v611 = vmul.f32 %v596, %v515
      %v612 = vmul.f32 %v598, %v519
      %v613 = vmul.f32 %v600, %v525
      %v614 = vmul.f32 %v602, %v529
      %v615 = vmul.f32 %v600, %v535
      %v616 = vmul.f32 %v602, %v539
      %v617 = vmul.f32 %v600, %v545
      %v618 = vmul.f32 %v602, %v549
      %v619 = vsub.f32 %v493, %v607
      %v620 = vsub.f32 %v497, %v608
      %v621 = vsub.f32 %v503, %v609
      %v622 = vsub.f32 %v507, %v610
      %v623 = vsub.f32 %v513, %v611
      %v624 = vsub.f32 %v517, %v612
      %v625 = vsub.f32 %v523, %v613
      %v626 = vsub.f32 %v527, %v614
      %v627 = vsub.f32 %v533, %v615
      %v628 = vsub.f32 %v537, %v616
      %v629 = vsub.f32 %v543, %v617
      %v630 = vsub.f32 %v547, %v618
      %v631 = vsel %vm603, 1, 0
      %v632 = vsel %vm604, 1, 0
      %v633 = vsel %vm605, 1, 0
      %v634 = vsel %vm606, 1, 0
      %vm635 = vcmp.eq.s32.totalorder %v631, 1
      %vm636 = vcmp.eq.s32.totalorder %v632, 1
      %vm637 = vcmp.eq.s32.totalorder %v633, 1
      %vm638 = vcmp.eq.s32.totalorder %v634, 1
      %v639 = vsel %vm635, %v493, %v619
      %v640 = vsel %vm636, %v497, %v620
      %v641 = vsel %vm635, %v503, %v621
      %v642 = vsel %vm636, %v507, %v622
      %v643 = vsel %vm635, %v513, %v623
      %v644 = vsel %vm636, %v517, %v624
      %v645 = vsel %vm637, %v523, %v625
      %v646 = vsel %vm638, %v527, %v626
      %v647 = vsel %vm637, %v533, %v627
      %v648 = vsel %vm638, %v537, %v628
      %v649 = vsel %vm637, %v543, %v629
      %v650 = vsel %vm638, %v547, %v630
      %v651 = vpack.c.bf16 %v640, %v639
      %v652 = vpack.c.bf16 %v642, %v641
      %v653 = vpack.c.bf16 %v644, %v643
      %v654 = vpack.c.bf16 %v646, %v645
      %v655 = vpack.c.bf16 %v648, %v647
      %v656 = vpack.c.bf16 %v650, %v649
      %v657 = vld [vmem:[%s2] sm:$0xff]
      %v658 = vld [vmem:[%s2 + $0x8] sm:$0xff]
      %v659 = vld [vmem:[%s2 + $0x10] sm:$0xff]
      %v660 = vld [vmem:[%s2 + $0x18] sm:$0xff]
      %v661 = vld [vmem:[%s2 + $0x20] sm:$0xff]
      %v662 = vld [vmem:[%s2 + $0x28] sm:$0xff]
      %v663 = vld [vmem:[%s2 + $0x30] sm:$0xff]
      %v664 = vld [vmem:[%s2 + $0x38] sm:$0xff]
      %v665 = vld [vmem:[%s2 + $0x40] sm:$0xff]
      %v666 = vld [vmem:[%s2 + $0x48] sm:$0xff]
      %v667 = vld [vmem:[%s2 + $0x50] sm:$0xff]
      %v668 = vld [vmem:[%s2 + $0x58] sm:$0xff]
      %v669 = vld [vmem:[%s2 + $0x60] sm:$0xff]
      %v670 = vld [vmem:[%s2 + $0x68] sm:$0xff]
      %v671 = vld [vmem:[%s2 + $0x70] sm:$0xff]
      %v672 = vld [vmem:[%s2 + $0x78] sm:$0xff]
      %v689 = vunpack.c.l.b16 %v657
      %v690 = vunpack.c.h.b16 %v657
      %v691 = vunpack.c.l.b16 %v658
      %v692 = vunpack.c.h.b16 %v658
      %v693 = vunpack.c.l.b16 %v659
      %v694 = vunpack.c.h.b16 %v659
      %v695 = vunpack.c.l.b16 %v660
      %v696 = vunpack.c.h.b16 %v660
      %v697 = vunpack.c.l.b16 %v661
      %v698 = vunpack.c.h.b16 %v661
      %v699 = vunpack.c.l.b16 %v662
      %v700 = vunpack.c.h.b16 %v662
      %v701 = vunpack.c.l.b16 %v663
      %v702 = vunpack.c.h.b16 %v663
      %v703 = vunpack.c.l.b16 %v664
      %v704 = vunpack.c.h.b16 %v664
      %v705 = vunpack.c.l.b16 %v665
      %v706 = vunpack.c.h.b16 %v665
      %v707 = vunpack.c.l.b16 %v666
      %v708 = vunpack.c.h.b16 %v666
      %v709 = vunpack.c.l.b16 %v667
      %v710 = vunpack.c.h.b16 %v667
      %v711 = vunpack.c.l.b16 %v668
      %v712 = vunpack.c.h.b16 %v668
      %v713 = vunpack.c.l.b16 %v669
      %v714 = vunpack.c.h.b16 %v669
      %v715 = vunpack.c.l.b16 %v670
      %v716 = vunpack.c.h.b16 %v670
      %v717 = vunpack.c.l.b16 %v671
      %v718 = vunpack.c.h.b16 %v671
      %v719 = vunpack.c.l.b16 %v672
      %v720 = vunpack.c.h.b16 %v672
      %v721 = vpack.c.b16 %v691, %v689
      %v722 = vpack.c.b16 %v692, %v690
      %v723 = vpack.c.b16 %v695, %v693
      %v724 = vpack.c.b16 %v696, %v694
      %v725 = vpack.c.b16 %v699, %v697
      %v726 = vpack.c.b16 %v700, %v698
      %v727 = vpack.c.b16 %v703, %v701
      %v728 = vpack.c.b16 %v704, %v702
      %v729 = vpack.c.b16 %v707, %v705
      %v730 = vpack.c.b16 %v708, %v706
      %v731 = vpack.c.b16 %v711, %v709
      %v732 = vpack.c.b16 %v712, %v710
      %v733 = vpack.c.b16 %v715, %v713
      %v734 = vpack.c.b16 %v716, %v714
      %v735 = vpack.c.b16 %v719, %v717
      %v736 = vpack.c.b16 %v720, %v718
      %753 = vmatprep.subr.bf16.mxu0 %v722
      %754 = vmatpush1.bf16.msra.mxu0 %v721
      %755 = vmatprep.subr.bf16.mxu0 %v724
      %756 = vmatpush1.bf16.msra.mxu0 %v723
      %757 = vmatprep.subr.bf16.mxu0 %v726
      %758 = vmatpush1.bf16.msra.mxu0 %v725
      %759 = vmatprep.subr.bf16.mxu0 %v728
      %760 = vmatpush1.bf16.msra.mxu0 %v727
      %761 = vmatprep.subr.bf16.mxu0 %v730
      %762 = vmatpush1.bf16.msra.mxu0 %v729
      %763 = vmatprep.subr.bf16.mxu0 %v732
      %764 = vmatpush1.bf16.msra.mxu0 %v731
      %765 = vmatprep.subr.bf16.mxu0 %v734
      %766 = vmatpush1.bf16.msra.mxu0 %v733
      %767 = vmatprep.subr.bf16.mxu0 %v736
      %768 = vmatpush1.bf16.msra.mxu0 %v735
      %769 = vmatprep.subr.bf16.mxu0 0
      %770 = vmatpush1.bf16.msra.mxu0 0
      %771 = vmatprep.subr.bf16.mxu0 0
      %772 = vmatpush1.bf16.msra.mxu0 0
      %773 = vmatprep.subr.bf16.mxu0 0
      %774 = vmatpush1.bf16.msra.mxu0 0
      %775 = vmatprep.subr.bf16.mxu0 0
      %776 = vmatpush1.bf16.msra.mxu0 0
      %777 = vmatprep.subr.bf16.mxu0 0
      %778 = vmatpush1.bf16.msra.mxu0 0
      %779 = vmatprep.subr.bf16.mxu0 0
      %780 = vmatpush1.bf16.msra.mxu0 0
      %781 = vmatprep.subr.bf16.mxu0 0
      %782 = vmatpush1.bf16.msra.mxu0 0
      %783 = vmatprep.subr.bf16.mxu0 0
      %784 = vmatpush1.bf16.msra.mxu0 0
      %785 = vmatprep.mubr.bf16.mxu0 0
      %786 = vmatmul.mubr.bf16.gmra.mrb[0].mxu0 %v651
      %v787 = vpop.f32.mrb[0].mxu0
      %v788 = vadd.f32 0.0, %v787
      %v789 = vpop.f32.mrb[0].mxu0
      %v790 = vadd.f32 0.0, %v789
      %v791 = vpop.f32.mrb[0].mxu0
      %v792 = vadd.f32 0.0, %v791
      %v793 = vpop.f32.mrb[0].mxu0
      %v794 = vadd.f32 0.0, %v793
      %795 = vmatprep.mubr.bf16.mxu0 0
      %796 = vmatmul.mubr.bf16.gmra.mrb[0].mxu0 %v652
      %v797 = vpop.f32.mrb[0].mxu0
      %v798 = vadd.f32 0.0, %v797
      %v799 = vpop.f32.mrb[0].mxu0
      %v800 = vadd.f32 0.0, %v799
      %v801 = vpop.f32.mrb[0].mxu0
      %v802 = vadd.f32 0.0, %v801
      %v803 = vpop.f32.mrb[0].mxu0
      %v804 = vadd.f32 0.0, %v803
      %805 = vmatprep.mubr.bf16.mxu0 0
      %806 = vmatmul.mubr.bf16.gmra.mrb[0].mxu0 %v653
      %v807 = vpop.f32.mrb[0].mxu0
      %v808 = vadd.f32 0.0, %v807
      %v809 = vpop.f32.mrb[0].mxu0
      %v810 = vadd.f32 0.0, %v809
      %v811 = vpop.f32.mrb[0].mxu0
      %v812 = vadd.f32 0.0, %v811
      %v813 = vpop.f32.mrb[0].mxu0
      %v814 = vadd.f32 0.0, %v813
      %815 = vmatprep.mubr.bf16.mxu0 0
      %816 = vmatmul.mubr.bf16.gmra.mrb[0].mxu0 %v654
      %v817 = vpop.f32.mrb[0].mxu0
      %v818 = vadd.f32 0.0, %v817
      %v819 = vpop.f32.mrb[0].mxu0
      %v820 = vadd.f32 0.0, %v819
      %v821 = vpop.f32.mrb[0].mxu0
      %v822 = vadd.f32 0.0, %v821
      %v823 = vpop.f32.mrb[0].mxu0
      %v824 = vadd.f32 0.0, %v823
      %825 = vmatprep.mubr.bf16.mxu0 0
      %826 = vmatmul.mubr.bf16.gmra.mrb[0].mxu0 %v655
      %v827 = vpop.f32.mrb[0].mxu0
      %v828 = vadd.f32 0.0, %v827
      %v829 = vpop.f32.mrb[0].mxu0
      %v830 = vadd.f32 0.0, %v829
      %v831 = vpop.f32.mrb[0].mxu0
      %v832 = vadd.f32 0.0, %v831
      %v833 = vpop.f32.mrb[0].mxu0
      %v834 = vadd.f32 0.0, %v833
      %835 = vmatprep.mubr.bf16.mxu0 0
      %836 = vmatmul.mubr.bf16.gmra.mrb[0].mxu0 %v656
      %v837 = vpop.f32.mrb[0].mxu0
      %v838 = vadd.f32 0.0, %v837
      %v839 = vpop.f32.mrb[0].mxu0
      %v840 = vadd.f32 0.0, %v839
      %v841 = vpop.f32.mrb[0].mxu0
      %v842 = vadd.f32 0.0, %v841
      %v843 = vpop.f32.mrb[0].mxu0
      %v844 = vadd.f32 0.0, %v843
      %845 = vdwg.mxu0
      %v846 = vmul.f32 %v788, %v790
      %v847 = vmul.f32 %v792, %v794
      %v848 = vmul.f32 %v798, %v800
      %v849 = vmul.f32 %v802, %v804
      %v850 = vmul.f32 %v808, %v810
      %v851 = vmul.f32 %v812, %v814
      %v852 = vmul.f32 %v818, %v820
      %v853 = vmul.f32 %v822, %v824
      %v854 = vmul.f32 %v828, %v830
      %v855 = vmul.f32 %v832, %v834
      %v856 = vmul.f32 %v838, %v840
      %v857 = vmul.f32 %v842, %v844
      %v858 = vadd.f32 %v846, %v848
      %v859 = vadd.f32 %v858, %v850
      %v860 = vadd.f32 %v847, %v849
      %v861 = vadd.f32 %v860, %v851
      %v862 = vadd.f32 %v852, %v854
      %v863 = vadd.f32 %v862, %v856
      %v864 = vadd.f32 %v853, %v855
      %v865 = vadd.f32 %v864, %v857
      %v866 = vmul.f32 %v790, %v790
      %v867 = vmul.f32 %v794, %v794
      %v868 = vmul.f32 %v800, %v800
      %v869 = vmul.f32 %v804, %v804
      %v870 = vmul.f32 %v810, %v810
      %v871 = vmul.f32 %v814, %v814
      %v872 = vmul.f32 %v820, %v820
      %v873 = vmul.f32 %v824, %v824
      %v874 = vmul.f32 %v830, %v830
      %v875 = vmul.f32 %v834, %v834
      %v876 = vmul.f32 %v840, %v840
      %v877 = vmul.f32 %v844, %v844
      %v878 = vadd.f32 %v866, %v868
      %v879 = vadd.f32 %v878, %v870
      %v880 = vadd.f32 %v867, %v869
      %v881 = vadd.f32 %v880, %v871
      %v882 = vadd.f32 %v872, %v874
      %v883 = vadd.f32 %v882, %v876
      %v884 = vadd.f32 %v873, %v875
      %v885 = vadd.f32 %v884, %v877
      %v886 = vadd.f32 %v879, 1e-06
      %v887 = vadd.f32 %v881, 1e-06
      %v888 = vadd.f32 %v883, 1e-06
      %v889 = vadd.f32 %v885, 1e-06
      %v890 = vrcp.pop %v886
      %v891 = vmul.f32 %v859, %v890
      %v892 = vrcp.pop %v887
      %v893 = vmul.f32 %v861, %v892
      %v894 = vrcp.pop %v888
      %v895 = vmul.f32 %v863, %v894
      %v896 = vrcp.pop %v889
      %v897 = vmul.f32 %v865, %v896
      %vm898 = vcmp.ge.f32.partialorder %v859, 0.0
      %vm899 = vcmp.ge.f32.partialorder %v861, 0.0
      %vm900 = vcmp.ge.f32.partialorder %v863, 0.0
      %vm901 = vcmp.ge.f32.partialorder %v865, 0.0
      %v902 = vmul.f32 %v891, %v790
      %v903 = vmul.f32 %v893, %v794
      %v904 = vmul.f32 %v891, %v800
      %v905 = vmul.f32 %v893, %v804
      %v906 = vmul.f32 %v891, %v810
      %v907 = vmul.f32 %v893, %v814
      %v908 = vmul.f32 %v895, %v820
      %v909 = vmul.f32 %v897, %v824
      %v910 = vmul.f32 %v895, %v830
      %v911 = vmul.f32 %v897, %v834
      %v912 = vmul.f32 %v895, %v840
      %v913 = vmul.f32 %v897, %v844
      %v914 = vsub.f32 %v788, %v902
      %v915 = vsub.f32 %v792, %v903
      %v916 = vsub.f32 %v798, %v904
      %v917 = vsub.f32 %v802, %v905
      %v918 = vsub.f32 %v808, %v906
      %v919 = vsub.f32 %v812, %v907
      %v920 = vsub.f32 %v818, %v908
      %v921 = vsub.f32 %v822, %v909
      %v922 = vsub.f32 %v828, %v910
      %v923 = vsub.f32 %v832, %v911
      %v924 = vsub.f32 %v838, %v912
      %v925 = vsub.f32 %v842, %v913
      %v926 = vsel %vm898, 1, 0
      %v927 = vsel %vm899, 1, 0
      %v928 = vsel %vm900, 1, 0
      %v929 = vsel %vm901, 1, 0
      %vm930 = vcmp.eq.s32.totalorder %v926, 1
      %vm931 = vcmp.eq.s32.totalorder %v927, 1
      %vm932 = vcmp.eq.s32.totalorder %v928, 1
      %vm933 = vcmp.eq.s32.totalorder %v929, 1
      %v934 = vsel %vm930, %v788, %v914
      %v935 = vsel %vm931, %v792, %v915
      %v936 = vsel %vm930, %v798, %v916
      %v937 = vsel %vm931, %v802, %v917
      %v938 = vsel %vm930, %v808, %v918
      %v939 = vsel %vm931, %v812, %v919
      %v940 = vsel %vm932, %v818, %v920
      %v941 = vsel %vm933, %v822, %v921
      %v942 = vsel %vm932, %v828, %v922
      %v943 = vsel %vm933, %v832, %v923
      %v944 = vsel %vm932, %v838, %v924
      %v945 = vsel %vm933, %v842, %v925
      %v946 = vpack.c.bf16 %v935, %v934
      %v947 = vpack.c.bf16 %v937, %v936
      %v948 = vpack.c.bf16 %v939, %v938
      %v949 = vpack.c.bf16 %v941, %v940
      %v950 = vpack.c.bf16 %v943, %v942
      %v951 = vpack.c.bf16 %v945, %v944
      %v952 = vld [vmem:[%s3] sm:$0xff]
      %v953 = vld [vmem:[%s3 + $0x8] sm:$0xff]
      %v954 = vld [vmem:[%s3 + $0x10] sm:$0xff]
      %v955 = vld [vmem:[%s3 + $0x18] sm:$0xff]
      %v956 = vld [vmem:[%s3 + $0x20] sm:$0xff]
      %v957 = vld [vmem:[%s3 + $0x28] sm:$0xff]
      %v958 = vld [vmem:[%s3 + $0x30] sm:$0xff]
      %v959 = vld [vmem:[%s3 + $0x38] sm:$0xff]
      %v960 = vld [vmem:[%s3 + $0x40] sm:$0xff]
      %v961 = vld [vmem:[%s3 + $0x48] sm:$0xff]
      %v962 = vld [vmem:[%s3 + $0x50] sm:$0xff]
      %v963 = vld [vmem:[%s3 + $0x58] sm:$0xff]
      %v964 = vld [vmem:[%s3 + $0x60] sm:$0xff]
      %v965 = vld [vmem:[%s3 + $0x68] sm:$0xff]
      %v966 = vld [vmem:[%s3 + $0x70] sm:$0xff]
      %v967 = vld [vmem:[%s3 + $0x78] sm:$0xff]
      %v968 = vld [vmem:[%s3 + $0x80] sm:$0xff]
      %v969 = vld [vmem:[%s3 + $0x88] sm:$0xff]
      %v970 = vld [vmem:[%s3 + $0x90] sm:$0xff]
      %v971 = vld [vmem:[%s3 + $0x98] sm:$0xff]
      %v972 = vld [vmem:[%s3 + $0xa0] sm:$0xff]
      %v973 = vld [vmem:[%s3 + $0xa8] sm:$0xff]
      %v974 = vld [vmem:[%s3 + $0xb0] sm:$0xff]
      %v975 = vld [vmem:[%s3 + $0xb8] sm:$0xff]
      %v976 = vld [vmem:[%s3 + $0xc0] sm:$0xff]
      %v977 = vld [vmem:[%s3 + $0xc8] sm:$0xff]
      %v978 = vld [vmem:[%s3 + $0xd0] sm:$0xff]
      %v979 = vld [vmem:[%s3 + $0xd8] sm:$0xff]
      %v980 = vld [vmem:[%s3 + $0xe0] sm:$0xff]
      %v981 = vld [vmem:[%s3 + $0xe8] sm:$0xff]
      %v982 = vld [vmem:[%s3 + $0xf0] sm:$0xff]
      %v983 = vld [vmem:[%s3 + $0xf8] sm:$0xff]
      %v984 = vld [vmem:[%s3 + $0x100] sm:$0xff]
      %v985 = vld [vmem:[%s3 + $0x108] sm:$0xff]
      %v986 = vld [vmem:[%s3 + $0x110] sm:$0xff]
      %v987 = vld [vmem:[%s3 + $0x118] sm:$0xff]
      %v988 = vld [vmem:[%s3 + $0x120] sm:$0xff]
      %v989 = vld [vmem:[%s3 + $0x128] sm:$0xff]
      %v990 = vld [vmem:[%s3 + $0x130] sm:$0xff]
      %v991 = vld [vmem:[%s3 + $0x138] sm:$0xff]
      %v992 = vld [vmem:[%s3 + $0x140] sm:$0xff]
      %v993 = vld [vmem:[%s3 + $0x148] sm:$0xff]
      %v994 = vld [vmem:[%s3 + $0x150] sm:$0xff]
      %v995 = vld [vmem:[%s3 + $0x158] sm:$0xff]
      %v996 = vld [vmem:[%s3 + $0x160] sm:$0xff]
      %v997 = vld [vmem:[%s3 + $0x168] sm:$0xff]
      %v998 = vld [vmem:[%s3 + $0x170] sm:$0xff]
      %v999 = vld [vmem:[%s3 + $0x178] sm:$0xff]
      %v1048 = vunpack.c.l.b16 %v952
      %v1049 = vunpack.c.h.b16 %v952
      %v1050 = vunpack.c.l.b16 %v953
      %v1051 = vunpack.c.h.b16 %v953
      %v1052 = vunpack.c.l.b16 %v954
      %v1053 = vunpack.c.h.b16 %v954
      %v1054 = vunpack.c.l.b16 %v955
      %v1055 = vunpack.c.h.b16 %v955
      %v1056 = vunpack.c.l.b16 %v956
      %v1057 = vunpack.c.h.b16 %v956
      %v1058 = vunpack.c.l.b16 %v957
      %v1059 = vunpack.c.h.b16 %v957
      %v1060 = vunpack.c.l.b16 %v958
      %v1061 = vunpack.c.h.b16 %v958
      %v1062 = vunpack.c.l.b16 %v959
      %v1063 = vunpack.c.h.b16 %v959
      %v1064 = vunpack.c.l.b16 %v960
      %v1065 = vunpack.c.h.b16 %v960
      %v1066 = vunpack.c.l.b16 %v961
      %v1067 = vunpack.c.h.b16 %v961
      %v1068 = vunpack.c.l.b16 %v962
      %v1069 = vunpack.c.h.b16 %v962
      %v1070 = vunpack.c.l.b16 %v963
      %v1071 = vunpack.c.h.b16 %v963
      %v1072 = vunpack.c.l.b16 %v964
      %v1073 = vunpack.c.h.b16 %v964
      %v1074 = vunpack.c.l.b16 %v965
      %v1075 = vunpack.c.h.b16 %v965
      %v1076 = vunpack.c.l.b16 %v966
      %v1077 = vunpack.c.h.b16 %v966
      %v1078 = vunpack.c.l.b16 %v967
      %v1079 = vunpack.c.h.b16 %v967
      %v1080 = vunpack.c.l.b16 %v968
      %v1081 = vunpack.c.h.b16 %v968
      %v1082 = vunpack.c.l.b16 %v969
      %v1083 = vunpack.c.h.b16 %v969
      %v1084 = vunpack.c.l.b16 %v970
      %v1085 = vunpack.c.h.b16 %v970
      %v1086 = vunpack.c.l.b16 %v971
      %v1087 = vunpack.c.h.b16 %v971
      %v1088 = vunpack.c.l.b16 %v972
      %v1089 = vunpack.c.h.b16 %v972
      %v1090 = vunpack.c.l.b16 %v973
      %v1091 = vunpack.c.h.b16 %v973
      %v1092 = vunpack.c.l.b16 %v974
      %v1093 = vunpack.c.h.b16 %v974
      %v1094 = vunpack.c.l.b16 %v975
      %v1095 = vunpack.c.h.b16 %v975
      %v1096 = vunpack.c.l.b16 %v976
      %v1097 = vunpack.c.h.b16 %v976
      %v1098 = vunpack.c.l.b16 %v977
      %v1099 = vunpack.c.h.b16 %v977
      %v1100 = vunpack.c.l.b16 %v978
      %v1101 = vunpack.c.h.b16 %v978
      %v1102 = vunpack.c.l.b16 %v979
      %v1103 = vunpack.c.h.b16 %v979
      %v1104 = vunpack.c.l.b16 %v980
      %v1105 = vunpack.c.h.b16 %v980
      %v1106 = vunpack.c.l.b16 %v981
      %v1107 = vunpack.c.h.b16 %v981
      %v1108 = vunpack.c.l.b16 %v982
      %v1109 = vunpack.c.h.b16 %v982
      %v1110 = vunpack.c.l.b16 %v983
      %v1111 = vunpack.c.h.b16 %v983
      %v1112 = vunpack.c.l.b16 %v984
      %v1113 = vunpack.c.h.b16 %v984
      %v1114 = vunpack.c.l.b16 %v985
      %v1115 = vunpack.c.h.b16 %v985
      %v1116 = vunpack.c.l.b16 %v986
      %v1117 = vunpack.c.h.b16 %v986
      %v1118 = vunpack.c.l.b16 %v987
      %v1119 = vunpack.c.h.b16 %v987
      %v1120 = vunpack.c.l.b16 %v988
      %v1121 = vunpack.c.h.b16 %v988
      %v1122 = vunpack.c.l.b16 %v989
      %v1123 = vunpack.c.h.b16 %v989
      %v1124 = vunpack.c.l.b16 %v990
      %v1125 = vunpack.c.h.b16 %v990
      %v1126 = vunpack.c.l.b16 %v991
      %v1127 = vunpack.c.h.b16 %v991
      %v1128 = vunpack.c.l.b16 %v992
      %v1129 = vunpack.c.h.b16 %v992
      %v1130 = vunpack.c.l.b16 %v993
      %v1131 = vunpack.c.h.b16 %v993
      %v1132 = vunpack.c.l.b16 %v994
      %v1133 = vunpack.c.h.b16 %v994
      %v1134 = vunpack.c.l.b16 %v995
      %v1135 = vunpack.c.h.b16 %v995
      %v1136 = vunpack.c.l.b16 %v996
      %v1137 = vunpack.c.h.b16 %v996
      %v1138 = vunpack.c.l.b16 %v997
      %v1139 = vunpack.c.h.b16 %v997
      %v1140 = vunpack.c.l.b16 %v998
      %v1141 = vunpack.c.h.b16 %v998
      %v1142 = vunpack.c.l.b16 %v999
      %v1143 = vunpack.c.h.b16 %v999
      %v1144 = vpack.c.b16 %v1054, %v1048
      %v1145 = vpack.c.b16 %v1055, %v1049
      %v1146 = vpack.c.b16 %v1056, %v1050
      %v1147 = vpack.c.b16 %v1057, %v1051
      %v1148 = vpack.c.b16 %v1058, %v1052
      %v1149 = vpack.c.b16 %v1059, %v1053
      %v1150 = vpack.c.b16 %v1066, %v1060
      %v1151 = vpack.c.b16 %v1067, %v1061
      %v1152 = vpack.c.b16 %v1068, %v1062
      %v1153 = vpack.c.b16 %v1069, %v1063
      %v1154 = vpack.c.b16 %v1070, %v1064
      %v1155 = vpack.c.b16 %v1071, %v1065
      %v1156 = vpack.c.b16 %v1078, %v1072
      %v1157 = vpack.c.b16 %v1079, %v1073
      %v1158 = vpack.c.b16 %v1080, %v1074
      %v1159 = vpack.c.b16 %v1081, %v1075
      %v1160 = vpack.c.b16 %v1082, %v1076
      %v1161 = vpack.c.b16 %v1083, %v1077
      %v1162 = vpack.c.b16 %v1090, %v1084
      %v1163 = vpack.c.b16 %v1091, %v1085
      %v1164 = vpack.c.b16 %v1092, %v1086
      %v1165 = vpack.c.b16 %v1093, %v1087
      %v1166 = vpack.c.b16 %v1094, %v1088
      %v1167 = vpack.c.b16 %v1095, %v1089
      %v1168 = vpack.c.b16 %v1102, %v1096
      %v1169 = vpack.c.b16 %v1103, %v1097
      %v1170 = vpack.c.b16 %v1104, %v1098
      %v1171 = vpack.c.b16 %v1105, %v1099
      %v1172 = vpack.c.b16 %v1106, %v1100
      %v1173 = vpack.c.b16 %v1107, %v1101
      %v1174 = vpack.c.b16 %v1114, %v1108
      %v1175 = vpack.c.b16 %v1115, %v1109
      %v1176 = vpack.c.b16 %v1116, %v1110
      %v1177 = vpack.c.b16 %v1117, %v1111
      %v1178 = vpack.c.b16 %v1118, %v1112
      %v1179 = vpack.c.b16 %v1119, %v1113
      %v1180 = vpack.c.b16 %v1126, %v1120
      %v1181 = vpack.c.b16 %v1127, %v1121
      %v1182 = vpack.c.b16 %v1128, %v1122
      %v1183 = vpack.c.b16 %v1129, %v1123
      %v1184 = vpack.c.b16 %v1130, %v1124
      %v1185 = vpack.c.b16 %v1131, %v1125
      %v1186 = vpack.c.b16 %v1138, %v1132
      %v1187 = vpack.c.b16 %v1139, %v1133
      %v1188 = vpack.c.b16 %v1140, %v1134
      %v1189 = vpack.c.b16 %v1141, %v1135
      %v1190 = vpack.c.b16 %v1142, %v1136
      %v1191 = vpack.c.b16 %v1143, %v1137
      %1240 = vmatprep.subr.bf16.mxu0 %v1145
      %1241 = vmatpush1.bf16.msra.mxu0 %v1144
      %1242 = vmatprep.subr.bf16.mxu0 %v1151
      %1243 = vmatpush1.bf16.msra.mxu0 %v1150
      %1244 = vmatprep.subr.bf16.mxu0 %v1157
      %1245 = vmatpush1.bf16.msra.mxu0 %v1156
      %1246 = vmatprep.subr.bf16.mxu0 %v1163
      %1247 = vmatpush1.bf16.msra.mxu0 %v1162
      %1248 = vmatprep.subr.bf16.mxu0 %v1169
      %1249 = vmatpush1.bf16.msra.mxu0 %v1168
      %1250 = vmatprep.subr.bf16.mxu0 %v1175
      %1251 = vmatpush1.bf16.msra.mxu0 %v1174
      %1252 = vmatprep.subr.bf16.mxu0 %v1181
      %1253 = vmatpush1.bf16.msra.mxu0 %v1180
      %1254 = vmatprep.subr.bf16.mxu0 %v1187
      %1255 = vmatpush1.bf16.msra.mxu0 %v1186
      %1256 = vmatprep.subr.bf16.mxu0 0
      %1257 = vmatpush1.bf16.msra.mxu0 0
      %1258 = vmatprep.subr.bf16.mxu0 0
      %1259 = vmatpush1.bf16.msra.mxu0 0
      %1260 = vmatprep.subr.bf16.mxu0 0
      %1261 = vmatpush1.bf16.msra.mxu0 0
      %1262 = vmatprep.subr.bf16.mxu0 0
      %1263 = vmatpush1.bf16.msra.mxu0 0
      %1264 = vmatprep.subr.bf16.mxu0 0
      %1265 = vmatpush1.bf16.msra.mxu0 0
      %1266 = vmatprep.subr.bf16.mxu0 0
      %1267 = vmatpush1.bf16.msra.mxu0 0
      %1268 = vmatprep.subr.bf16.mxu0 0
      %1269 = vmatpush1.bf16.msra.mxu0 0
      %1270 = vmatprep.subr.bf16.mxu0 0
      %1271 = vmatpush1.bf16.msra.mxu0 0
      %1272 = vmatprep.mubr.bf16.mxu0 0
      %1273 = vmatmul.mubr.bf16.gmra.mrb[0].mxu0 %v946
      %v1274 = vpop.f32.mrb[0].mxu0
      %v1275 = vadd.f32 0.0, %v1274
      %v1276 = vpop.f32.mrb[0].mxu0
      %v1277 = vadd.f32 0.0, %v1276
      %v1278 = vpop.f32.mrb[0].mxu0
      %v1279 = vadd.f32 0.0, %v1278
      %v1280 = vpop.f32.mrb[0].mxu0
      %v1281 = vadd.f32 0.0, %v1280
      %1282 = vmatprep.mubr.bf16.mxu0 0
      %1283 = vmatmul.mubr.bf16.gmra.mrb[0].mxu0 %v947
      %v1284 = vpop.f32.mrb[0].mxu0
      %v1285 = vadd.f32 0.0, %v1284
      %v1286 = vpop.f32.mrb[0].mxu0
      %v1287 = vadd.f32 0.0, %v1286
      %v1288 = vpop.f32.mrb[0].mxu0
      %v1289 = vadd.f32 0.0, %v1288
      %v1290 = vpop.f32.mrb[0].mxu0
      %v1291 = vadd.f32 0.0, %v1290
      %1292 = vmatprep.mubr.bf16.mxu0 0
      %1293 = vmatmul.mubr.bf16.gmra.mrb[0].mxu0 %v948
      %v1294 = vpop.f32.mrb[0].mxu0
      %v1295 = vadd.f32 0.0, %v1294
      %v1296 = vpop.f32.mrb[0].mxu0
      %v1297 = vadd.f32 0.0, %v1296
      %v1298 = vpop.f32.mrb[0].mxu0
      %v1299 = vadd.f32 0.0, %v1298
      %v1300 = vpop.f32.mrb[0].mxu0
      %v1301 = vadd.f32 0.0, %v1300
      %1302 = vmatprep.mubr.bf16.mxu0 0
      %1303 = vmatmul.mubr.bf16.gmra.mrb[0].mxu0 %v949
      %v1304 = vpop.f32.mrb[0].mxu0
      %v1305 = vadd.f32 0.0, %v1304
      %v1306 = vpop.f32.mrb[0].mxu0
      %v1307 = vadd.f32 0.0, %v1306
      %v1308 = vpop.f32.mrb[0].mxu0
      %v1309 = vadd.f32 0.0, %v1308
      %v1310 = vpop.f32.mrb[0].mxu0
      %v1311 = vadd.f32 0.0, %v1310
      %1312 = vmatprep.mubr.bf16.mxu0 0
      %1313 = vmatmul.mubr.bf16.gmra.mrb[0].mxu0 %v950
      %v1314 = vpop.f32.mrb[0].mxu0
      %v1315 = vadd.f32 0.0, %v1314
      %v1316 = vpop.f32.mrb[0].mxu0
      %v1317 = vadd.f32 0.0, %v1316
      %v1318 = vpop.f32.mrb[0].mxu0
      %v1319 = vadd.f32 0.0, %v1318
      %v1320 = vpop.f32.mrb[0].mxu0
      %v1321 = vadd.f32 0.0, %v1320
      %1322 = vmatprep.mubr.bf16.mxu0 0
      %1323 = vmatmul.mubr.bf16.gmra.mrb[0].mxu0 %v951
      %v1324 = vpop.f32.mrb[0].mxu0
      %v1325 = vadd.f32 0.0, %v1324
      %v1326 = vpop.f32.mrb[0].mxu0
      %v1327 = vadd.f32 0.0, %v1326
      %v1328 = vpop.f32.mrb[0].mxu0
      %v1329 = vadd.f32 0.0, %v1328
      %v1330 = vpop.f32.mrb[0].mxu0
      %v1331 = vadd.f32 0.0, %v1330
      %1332 = vdwg.mxu0
      %1333 = vmatprep.subr.bf16.mxu0 %v1147
      %1334 = vmatpush1.bf16.msra.mxu0 %v1146
      %1335 = vmatprep.subr.bf16.mxu0 %v1153
      %1336 = vmatpush1.bf16.msra.mxu0 %v1152
      %1337 = vmatprep.subr.bf16.mxu0 %v1159
      %1338 = vmatpush1.bf16.msra.mxu0 %v1158
      %1339 = vmatprep.subr.bf16.mxu0 %v1165
      %1340 = vmatpush1.bf16.msra.mxu0 %v1164
      %1341 = vmatprep.subr.bf16.mxu0 %v1171
      %1342 = vmatpush1.bf16.msra.mxu0 %v1170
      %1343 = vmatprep.subr.bf16.mxu0 %v1177
      %1344 = vmatpush1.bf16.msra.mxu0 %v1176
      %1345 = vmatprep.subr.bf16.mxu0 %v1183
      %1346 = vmatpush1.bf16.msra.mxu0 %v1182
      %1347 = vmatprep.subr.bf16.mxu0 %v1189
      %1348 = vmatpush1.bf16.msra.mxu0 %v1188
      %1349 = vmatprep.subr.bf16.mxu0 0
      %1350 = vmatpush1.bf16.msra.mxu0 0
      %1351 = vmatprep.subr.bf16.mxu0 0
      %1352 = vmatpush1.bf16.msra.mxu0 0
      %1353 = vmatprep.subr.bf16.mxu0 0
      %1354 = vmatpush1.bf16.msra.mxu0 0
      %1355 = vmatprep.subr.bf16.mxu0 0
      %1356 = vmatpush1.bf16.msra.mxu0 0
      %1357 = vmatprep.subr.bf16.mxu0 0
      %1358 = vmatpush1.bf16.msra.mxu0 0
      %1359 = vmatprep.subr.bf16.mxu0 0
      %1360 = vmatpush1.bf16.msra.mxu0 0
      %1361 = vmatprep.subr.bf16.mxu0 0
      %1362 = vmatpush1.bf16.msra.mxu0 0
      %1363 = vmatprep.subr.bf16.mxu0 0
      %1364 = vmatpush1.bf16.msra.mxu0 0
      %1365 = vmatprep.mubr.bf16.mxu0 0
      %1366 = vmatmul.mubr.bf16.gmra.mrb[0].mxu0 %v946
      %v1367 = vpop.f32.mrb[0].mxu0
      %v1368 = vadd.f32 0.0, %v1367
      %v1369 = vpop.f32.mrb[0].mxu0
      %v1370 = vadd.f32 0.0, %v1369
      %v1371 = vpop.f32.mrb[0].mxu0
      %v1372 = vadd.f32 0.0, %v1371
      %v1373 = vpop.f32.mrb[0].mxu0
      %v1374 = vadd.f32 0.0, %v1373
      %1375 = vmatprep.mubr.bf16.mxu0 0
      %1376 = vmatmul.mubr.bf16.gmra.mrb[0].mxu0 %v947
      %v1377 = vpop.f32.mrb[0].mxu0
      %v1378 = vadd.f32 0.0, %v1377
      %v1379 = vpop.f32.mrb[0].mxu0
      %v1380 = vadd.f32 0.0, %v1379
      %v1381 = vpop.f32.mrb[0].mxu0
      %v1382 = vadd.f32 0.0, %v1381
      %v1383 = vpop.f32.mrb[0].mxu0
      %v1384 = vadd.f32 0.0, %v1383
      %1385 = vmatprep.mubr.bf16.mxu0 0
      %1386 = vmatmul.mubr.bf16.gmra.mrb[0].mxu0 %v948
      %v1387 = vpop.f32.mrb[0].mxu0
      %v1388 = vadd.f32 0.0, %v1387
      %v1389 = vpop.f32.mrb[0].mxu0
      %v1390 = vadd.f32 0.0, %v1389
      %v1391 = vpop.f32.mrb[0].mxu0
      %v1392 = vadd.f32 0.0, %v1391
      %v1393 = vpop.f32.mrb[0].mxu0
      %v1394 = vadd.f32 0.0, %v1393
      %1395 = vmatprep.mubr.bf16.mxu0 0
      %1396 = vmatmul.mubr.bf16.gmra.mrb[0].mxu0 %v949
      %v1397 = vpop.f32.mrb[0].mxu0
      %v1398 = vadd.f32 0.0, %v1397
      %v1399 = vpop.f32.mrb[0].mxu0
      %v1400 = vadd.f32 0.0, %v1399
      %v1401 = vpop.f32.mrb[0].mxu0
      %v1402 = vadd.f32 0.0, %v1401
      %v1403 = vpop.f32.mrb[0].mxu0
      %v1404 = vadd.f32 0.0, %v1403
      %1405 = vmatprep.mubr.bf16.mxu0 0
      %1406 = vmatmul.mubr.bf16.gmra.mrb[0].mxu0 %v950
      %v1407 = vpop.f32.mrb[0].mxu0
      %v1408 = vadd.f32 0.0, %v1407
      %v1409 = vpop.f32.mrb[0].mxu0
      %v1410 = vadd.f32 0.0, %v1409
      %v1411 = vpop.f32.mrb[0].mxu0
      %v1412 = vadd.f32 0.0, %v1411
      %v1413 = vpop.f32.mrb[0].mxu0
      %v1414 = vadd.f32 0.0, %v1413
      %1415 = vmatprep.mubr.bf16.mxu0 0
      %1416 = vmatmul.mubr.bf16.gmra.mrb[0].mxu0 %v951
      %v1417 = vpop.f32.mrb[0].mxu0
      %v1418 = vadd.f32 0.0, %v1417
      %v1419 = vpop.f32.mrb[0].mxu0
      %v1420 = vadd.f32 0.0, %v1419
      %v1421 = vpop.f32.mrb[0].mxu0
      %v1422 = vadd.f32 0.0, %v1421
      %v1423 = vpop.f32.mrb[0].mxu0
      %v1424 = vadd.f32 0.0, %v1423
      %1425 = vdwg.mxu0
      %1426 = vmatprep.subr.bf16.mxu0 %v1149
      %1427 = vmatpush1.bf16.msra.mxu0 %v1148
      %1428 = vmatprep.subr.bf16.mxu0 %v1155
      %1429 = vmatpush1.bf16.msra.mxu0 %v1154
      %1430 = vmatprep.subr.bf16.mxu0 %v1161
      %1431 = vmatpush1.bf16.msra.mxu0 %v1160
      %1432 = vmatprep.subr.bf16.mxu0 %v1167
      %1433 = vmatpush1.bf16.msra.mxu0 %v1166
      %1434 = vmatprep.subr.bf16.mxu0 %v1173
      %1435 = vmatpush1.bf16.msra.mxu0 %v1172
      %1436 = vmatprep.subr.bf16.mxu0 %v1179
      %1437 = vmatpush1.bf16.msra.mxu0 %v1178
      %1438 = vmatprep.subr.bf16.mxu0 %v1185
      %1439 = vmatpush1.bf16.msra.mxu0 %v1184
      %1440 = vmatprep.subr.bf16.mxu0 %v1191
      %1441 = vmatpush1.bf16.msra.mxu0 %v1190
      %1442 = vmatprep.subr.bf16.mxu0 0
      %1443 = vmatpush1.bf16.msra.mxu0 0
      %1444 = vmatprep.subr.bf16.mxu0 0
      %1445 = vmatpush1.bf16.msra.mxu0 0
      %1446 = vmatprep.subr.bf16.mxu0 0
      %1447 = vmatpush1.bf16.msra.mxu0 0
      %1448 = vmatprep.subr.bf16.mxu0 0
      %1449 = vmatpush1.bf16.msra.mxu0 0
      %1450 = vmatprep.subr.bf16.mxu0 0
      %1451 = vmatpush1.bf16.msra.mxu0 0
      %1452 = vmatprep.subr.bf16.mxu0 0
      %1453 = vmatpush1.bf16.msra.mxu0 0
      %1454 = vmatprep.subr.bf16.mxu0 0
      %1455 = vmatpush1.bf16.msra.mxu0 0
      %1456 = vmatprep.subr.bf16.mxu0 0
      %1457 = vmatpush1.bf16.msra.mxu0 0
      %1458 = vmatprep.mubr.bf16.mxu0 0
      %1459 = vmatmul.mubr.bf16.gmra.mrb[0].mxu0 %v946
      %v1460 = vpop.f32.mrb[0].mxu0
      %v1461 = vadd.f32 0.0, %v1460
      %v1462 = vpop.f32.mrb[0].mxu0
      %v1463 = vadd.f32 0.0, %v1462
      %v1464 = vpop.f32.mrb[0].mxu0
      %v1465 = vadd.f32 0.0, %v1464
      %v1466 = vpop.f32.mrb[0].mxu0
      %v1467 = vadd.f32 0.0, %v1466
      %1468 = vmatprep.mubr.bf16.mxu0 0
      %1469 = vmatmul.mubr.bf16.gmra.mrb[0].mxu0 %v947
      %v1470 = vpop.f32.mrb[0].mxu0
      %v1471 = vadd.f32 0.0, %v1470
      %v1472 = vpop.f32.mrb[0].mxu0
      %v1473 = vadd.f32 0.0, %v1472
      %v1474 = vpop.f32.mrb[0].mxu0
      %v1475 = vadd.f32 0.0, %v1474
      %v1476 = vpop.f32.mrb[0].mxu0
      %v1477 = vadd.f32 0.0, %v1476
      %1478 = vmatprep.mubr.bf16.mxu0 0
      %1479 = vmatmul.mubr.bf16.gmra.mrb[0].mxu0 %v948
      %v1480 = vpop.f32.mrb[0].mxu0
      %v1481 = vadd.f32 0.0, %v1480
      %v1482 = vpop.f32.mrb[0].mxu0
      %v1483 = vadd.f32 0.0, %v1482
      %v1484 = vpop.f32.mrb[0].mxu0
      %v1485 = vadd.f32 0.0, %v1484
      %v1486 = vpop.f32.mrb[0].mxu0
      %v1487 = vadd.f32 0.0, %v1486
      %1488 = vmatprep.mubr.bf16.mxu0 0
      %1489 = vmatmul.mubr.bf16.gmra.mrb[0].mxu0 %v949
      %v1490 = vpop.f32.mrb[0].mxu0
      %v1491 = vadd.f32 0.0, %v1490
      %v1492 = vpop.f32.mrb[0].mxu0
      %v1493 = vadd.f32 0.0, %v1492
      %v1494 = vpop.f32.mrb[0].mxu0
      %v1495 = vadd.f32 0.0, %v1494
      %v1496 = vpop.f32.mrb[0].mxu0
      %v1497 = vadd.f32 0.0, %v1496
      %1498 = vmatprep.mubr.bf16.mxu0 0
      %1499 = vmatmul.mubr.bf16.gmra.mrb[0].mxu0 %v950
      %v1500 = vpop.f32.mrb[0].mxu0
      %v1501 = vadd.f32 0.0, %v1500
      %v1502 = vpop.f32.mrb[0].mxu0
      %v1503 = vadd.f32 0.0, %v1502
      %v1504 = vpop.f32.mrb[0].mxu0
      %v1505 = vadd.f32 0.0, %v1504
      %v1506 = vpop.f32.mrb[0].mxu0
      %v1507 = vadd.f32 0.0, %v1506
      %1508 = vmatprep.mubr.bf16.mxu0 0
      %1509 = vmatmul.mubr.bf16.gmra.mrb[0].mxu0 %v951
      %v1510 = vpop.f32.mrb[0].mxu0
      %v1511 = vadd.f32 0.0, %v1510
      %v1512 = vpop.f32.mrb[0].mxu0
      %v1513 = vadd.f32 0.0, %v1512
      %v1514 = vpop.f32.mrb[0].mxu0
      %v1515 = vadd.f32 0.0, %v1514
      %v1516 = vpop.f32.mrb[0].mxu0
      %v1517 = vadd.f32 0.0, %v1516
      %1518 = vdwg.mxu0
      %v1519 = vmul.f32 %v1275, %v1370
      %v1520 = vmul.f32 %v1277, %v1461
      %v1521 = vmul.f32 %v1368, %v1463
      %v1522 = vmul.f32 %v1279, %v1374
      %v1523 = vmul.f32 %v1281, %v1465
      %v1524 = vmul.f32 %v1372, %v1467
      %v1525 = vmul.f32 %v1285, %v1380
      %v1526 = vmul.f32 %v1287, %v1471
      %v1527 = vmul.f32 %v1378, %v1473
      %v1528 = vmul.f32 %v1289, %v1384
      %v1529 = vmul.f32 %v1291, %v1475
      %v1530 = vmul.f32 %v1382, %v1477
      %v1531 = vmul.f32 %v1295, %v1390
      %v1532 = vmul.f32 %v1297, %v1481
      %v1533 = vmul.f32 %v1388, %v1483
      %v1534 = vmul.f32 %v1299, %v1394
      %v1535 = vmul.f32 %v1301, %v1485
      %v1536 = vmul.f32 %v1392, %v1487
      %v1537 = vmul.f32 %v1305, %v1400
      %v1538 = vmul.f32 %v1307, %v1491
      %v1539 = vmul.f32 %v1398, %v1493
      %v1540 = vmul.f32 %v1309, %v1404
      %v1541 = vmul.f32 %v1311, %v1495
      %v1542 = vmul.f32 %v1402, %v1497
      %v1543 = vmul.f32 %v1315, %v1410
      %v1544 = vmul.f32 %v1317, %v1501
      %v1545 = vmul.f32 %v1408, %v1503
      %v1546 = vmul.f32 %v1319, %v1414
      %v1547 = vmul.f32 %v1321, %v1505
      %v1548 = vmul.f32 %v1412, %v1507
      %v1549 = vmul.f32 %v1325, %v1420
      %v1550 = vmul.f32 %v1327, %v1511
      %v1551 = vmul.f32 %v1418, %v1513
      %v1552 = vmul.f32 %v1329, %v1424
      %v1553 = vmul.f32 %v1331, %v1515
      %v1554 = vmul.f32 %v1422, %v1517
      %v1555 = vadd.f32 %v1519, %v1525
      %v1556 = vadd.f32 %v1555, %v1531
      %v1557 = vadd.f32 %v1520, %v1526
      %v1558 = vadd.f32 %v1557, %v1532
      %v1559 = vadd.f32 %v1521, %v1527
      %v1560 = vadd.f32 %v1559, %v1533
      %v1561 = vadd.f32 %v1522, %v1528
      %v1562 = vadd.f32 %v1561, %v1534
      %v1563 = vadd.f32 %v1523, %v1529
      %v1564 = vadd.f32 %v1563, %v1535
      %v1565 = vadd.f32 %v1524, %v1530
      %v1566 = vadd.f32 %v1565, %v1536
      %v1567 = vadd.f32 %v1537, %v1543
      %v1568 = vadd.f32 %v1567, %v1549
      %v1569 = vadd.f32 %v1538, %v1544
      %v1570 = vadd.f32 %v1569, %v1550
      %v1571 = vadd.f32 %v1539, %v1545
      %v1572 = vadd.f32 %v1571, %v1551
      %v1573 = vadd.f32 %v1540, %v1546
      %v1574 = vadd.f32 %v1573, %v1552
      %v1575 = vadd.f32 %v1541, %v1547
      %v1576 = vadd.f32 %v1575, %v1553
      %v1577 = vadd.f32 %v1542, %v1548
      %v1578 = vadd.f32 %v1577, %v1554
      %v1579 = vmul.f32 %v1370, %v1370
      %v1580 = vmul.f32 %v1461, %v1461
      %v1581 = vmul.f32 %v1463, %v1463
      %v1582 = vmul.f32 %v1374, %v1374
      %v1583 = vmul.f32 %v1465, %v1465
      %v1584 = vmul.f32 %v1467, %v1467
      %v1585 = vmul.f32 %v1380, %v1380
      %v1586 = vmul.f32 %v1471, %v1471
      %v1587 = vmul.f32 %v1473, %v1473
      %v1588 = vmul.f32 %v1384, %v1384
      %v1589 = vmul.f32 %v1475, %v1475
      %v1590 = vmul.f32 %v1477, %v1477
      %v1591 = vmul.f32 %v1390, %v1390
      %v1592 = vmul.f32 %v1481, %v1481
      %v1593 = vmul.f32 %v1483, %v1483
      %v1594 = vmul.f32 %v1394, %v1394
      %v1595 = vmul.f32 %v1485, %v1485
      %v1596 = vmul.f32 %v1487, %v1487
      %v1597 = vmul.f32 %v1400, %v1400
      %v1598 = vmul.f32 %v1491, %v1491
      %v1599 = vmul.f32 %v1493, %v1493
      %v1600 = vmul.f32 %v1404, %v1404
      %v1601 = vmul.f32 %v1495, %v1495
      %v1602 = vmul.f32 %v1497, %v1497
      %v1603 = vmul.f32 %v1410, %v1410
      %v1604 = vmul.f32 %v1501, %v1501
      %v1605 = vmul.f32 %v1503, %v1503
      %v1606 = vmul.f32 %v1414, %v1414
      %v1607 = vmul.f32 %v1505, %v1505
      %v1608 = vmul.f32 %v1507, %v1507
      %v1609 = vmul.f32 %v1420, %v1420
      %v1610 = vmul.f32 %v1511, %v1511
      %v1611 = vmul.f32 %v1513, %v1513
      %v1612 = vmul.f32 %v1424, %v1424
      %v1613 = vmul.f32 %v1515, %v1515
      %v1614 = vmul.f32 %v1517, %v1517
      %v1615 = vadd.f32 %v1579, %v1585
      %v1616 = vadd.f32 %v1615, %v1591
      %v1617 = vadd.f32 %v1580, %v1586
      %v1618 = vadd.f32 %v1617, %v1592
      %v1619 = vadd.f32 %v1581, %v1587
      %v1620 = vadd.f32 %v1619, %v1593
      %v1621 = vadd.f32 %v1582, %v1588
      %v1622 = vadd.f32 %v1621, %v1594
      %v1623 = vadd.f32 %v1583, %v1589
      %v1624 = vadd.f32 %v1623, %v1595
      %v1625 = vadd.f32 %v1584, %v1590
      %v1626 = vadd.f32 %v1625, %v1596
      %v1627 = vadd.f32 %v1597, %v1603
      %v1628 = vadd.f32 %v1627, %v1609
      %v1629 = vadd.f32 %v1598, %v1604
      %v1630 = vadd.f32 %v1629, %v1610
      %v1631 = vadd.f32 %v1599, %v1605
      %v1632 = vadd.f32 %v1631, %v1611
      %v1633 = vadd.f32 %v1600, %v1606
      %v1634 = vadd.f32 %v1633, %v1612
      %v1635 = vadd.f32 %v1601, %v1607
      %v1636 = vadd.f32 %v1635, %v1613
      %v1637 = vadd.f32 %v1602, %v1608
      %v1638 = vadd.f32 %v1637, %v1614
      %v1639 = vadd.f32 %v1616, 1e-06
      %v1640 = vadd.f32 %v1618, 1e-06
      %v1641 = vadd.f32 %v1620, 1e-06
      %v1642 = vadd.f32 %v1622, 1e-06
      %v1643 = vadd.f32 %v1624, 1e-06
      %v1644 = vadd.f32 %v1626, 1e-06
      %v1645 = vadd.f32 %v1628, 1e-06
      %v1646 = vadd.f32 %v1630, 1e-06
      %v1647 = vadd.f32 %v1632, 1e-06
      %v1648 = vadd.f32 %v1634, 1e-06
      %v1649 = vadd.f32 %v1636, 1e-06
      %v1650 = vadd.f32 %v1638, 1e-06
      %v1651 = vrcp.pop %v1639
      %v1652 = vmul.f32 %v1556, %v1651
      %v1653 = vrcp.pop %v1640
      %v1654 = vmul.f32 %v1558, %v1653
      %v1655 = vrcp.pop %v1641
      %v1656 = vmul.f32 %v1560, %v1655
      %v1657 = vrcp.pop %v1642
      %v1658 = vmul.f32 %v1562, %v1657
      %v1659 = vrcp.pop %v1643
      %v1660 = vmul.f32 %v1564, %v1659
      %v1661 = vrcp.pop %v1644
      %v1662 = vmul.f32 %v1566, %v1661
      %v1663 = vrcp.pop %v1645
      %v1664 = vmul.f32 %v1568, %v1663
      %v1665 = vrcp.pop %v1646
      %v1666 = vmul.f32 %v1570, %v1665
      %v1667 = vrcp.pop %v1647
      %v1668 = vmul.f32 %v1572, %v1667
      %v1669 = vrcp.pop %v1648
      %v1670 = vmul.f32 %v1574, %v1669
      %v1671 = vrcp.pop %v1649
      %v1672 = vmul.f32 %v1576, %v1671
      %v1673 = vrcp.pop %v1650
      %v1674 = vmul.f32 %v1578, %v1673
      %vm1675 = vcmp.ge.f32.partialorder %v1556, 0.0
      %vm1676 = vcmp.ge.f32.partialorder %v1558, 0.0
      %vm1677 = vcmp.ge.f32.partialorder %v1560, 0.0
      %vm1678 = vcmp.ge.f32.partialorder %v1562, 0.0
      %vm1679 = vcmp.ge.f32.partialorder %v1564, 0.0
      %vm1680 = vcmp.ge.f32.partialorder %v1566, 0.0
      %vm1681 = vcmp.ge.f32.partialorder %v1568, 0.0
      %vm1682 = vcmp.ge.f32.partialorder %v1570, 0.0
      %vm1683 = vcmp.ge.f32.partialorder %v1572, 0.0
      %vm1684 = vcmp.ge.f32.partialorder %v1574, 0.0
      %vm1685 = vcmp.ge.f32.partialorder %v1576, 0.0
      %vm1686 = vcmp.ge.f32.partialorder %v1578, 0.0
      %v1687 = vmul.f32 %v1652, %v1370
      %v1688 = vmul.f32 %v1654, %v1461
      %v1689 = vmul.f32 %v1656, %v1463
      %v1690 = vmul.f32 %v1658, %v1374
      %v1691 = vmul.f32 %v1660, %v1465
      %v1692 = vmul.f32 %v1662, %v1467
      %v1693 = vmul.f32 %v1652, %v1380
      %v1694 = vmul.f32 %v1654, %v1471
      %v1695 = vmul.f32 %v1656, %v1473
      %v1696 = vmul.f32 %v1658, %v1384
      %v1697 = vmul.f32 %v1660, %v1475
      %v1698 = vmul.f32 %v1662, %v1477
      %v1699 = vmul.f32 %v1652, %v1390
      %v1700 = vmul.f32 %v1654, %v1481
      %v1701 = vmul.f32 %v1656, %v1483
      %v1702 = vmul.f32 %v1658, %v1394
      %v1703 = vmul.f32 %v1660, %v1485
      %v1704 = vmul.f32 %v1662, %v1487
      %v1705 = vmul.f32 %v1664, %v1400
      %v1706 = vmul.f32 %v1666, %v1491
      %v1707 = vmul.f32 %v1668, %v1493
      %v1708 = vmul.f32 %v1670, %v1404
      %v1709 = vmul.f32 %v1672, %v1495
      %v1710 = vmul.f32 %v1674, %v1497
      %v1711 = vmul.f32 %v1664, %v1410
      %v1712 = vmul.f32 %v1666, %v1501
      %v1713 = vmul.f32 %v1668, %v1503
      %v1714 = vmul.f32 %v1670, %v1414
      %v1715 = vmul.f32 %v1672, %v1505
      %v1716 = vmul.f32 %v1674, %v1507
      %v1717 = vmul.f32 %v1664, %v1420
      %v1718 = vmul.f32 %v1666, %v1511
      %v1719 = vmul.f32 %v1668, %v1513
      %v1720 = vmul.f32 %v1670, %v1424
      %v1721 = vmul.f32 %v1672, %v1515
      %v1722 = vmul.f32 %v1674, %v1517
      %v1723 = vsub.f32 %v1275, %v1687
      %v1724 = vsub.f32 %v1277, %v1688
      %v1725 = vsub.f32 %v1368, %v1689
      %v1726 = vsub.f32 %v1279, %v1690
      %v1727 = vsub.f32 %v1281, %v1691
      %v1728 = vsub.f32 %v1372, %v1692
      %v1729 = vsub.f32 %v1285, %v1693
      %v1730 = vsub.f32 %v1287, %v1694
      %v1731 = vsub.f32 %v1378, %v1695
      %v1732 = vsub.f32 %v1289, %v1696
      %v1733 = vsub.f32 %v1291, %v1697
      %v1734 = vsub.f32 %v1382, %v1698
      %v1735 = vsub.f32 %v1295, %v1699
      %v1736 = vsub.f32 %v1297, %v1700
      %v1737 = vsub.f32 %v1388, %v1701
      %v1738 = vsub.f32 %v1299, %v1702
      %v1739 = vsub.f32 %v1301, %v1703
      %v1740 = vsub.f32 %v1392, %v1704
      %v1741 = vsub.f32 %v1305, %v1705
      %v1742 = vsub.f32 %v1307, %v1706
      %v1743 = vsub.f32 %v1398, %v1707
      %v1744 = vsub.f32 %v1309, %v1708
      %v1745 = vsub.f32 %v1311, %v1709
      %v1746 = vsub.f32 %v1402, %v1710
      %v1747 = vsub.f32 %v1315, %v1711
      %v1748 = vsub.f32 %v1317, %v1712
      %v1749 = vsub.f32 %v1408, %v1713
      %v1750 = vsub.f32 %v1319, %v1714
      %v1751 = vsub.f32 %v1321, %v1715
      %v1752 = vsub.f32 %v1412, %v1716
      %v1753 = vsub.f32 %v1325, %v1717
      %v1754 = vsub.f32 %v1327, %v1718
      %v1755 = vsub.f32 %v1418, %v1719
      %v1756 = vsub.f32 %v1329, %v1720
      %v1757 = vsub.f32 %v1331, %v1721
      %v1758 = vsub.f32 %v1422, %v1722
      %v1759 = vsel %vm1675, 1, 0
      %v1760 = vsel %vm1676, 1, 0
      %v1761 = vsel %vm1677, 1, 0
      %v1762 = vsel %vm1678, 1, 0
      %v1763 = vsel %vm1679, 1, 0
      %v1764 = vsel %vm1680, 1, 0
      %v1765 = vsel %vm1681, 1, 0
      %v1766 = vsel %vm1682, 1, 0
      %v1767 = vsel %vm1683, 1, 0
      %v1768 = vsel %vm1684, 1, 0
      %v1769 = vsel %vm1685, 1, 0
      %v1770 = vsel %vm1686, 1, 0
      %vm1771 = vcmp.eq.s32.totalorder %v1759, 1
      %vm1772 = vcmp.eq.s32.totalorder %v1760, 1
      %vm1773 = vcmp.eq.s32.totalorder %v1761, 1
      %vm1774 = vcmp.eq.s32.totalorder %v1762, 1
      %vm1775 = vcmp.eq.s32.totalorder %v1763, 1
      %vm1776 = vcmp.eq.s32.totalorder %v1764, 1
      %vm1777 = vcmp.eq.s32.totalorder %v1765, 1
      %vm1778 = vcmp.eq.s32.totalorder %v1766, 1
      %vm1779 = vcmp.eq.s32.totalorder %v1767, 1
      %vm1780 = vcmp.eq.s32.totalorder %v1768, 1
      %vm1781 = vcmp.eq.s32.totalorder %v1769, 1
      %vm1782 = vcmp.eq.s32.totalorder %v1770, 1
      %v1783 = vsel %vm1771, %v1275, %v1723
      %v1784 = vsel %vm1772, %v1277, %v1724
      %v1785 = vsel %vm1773, %v1368, %v1725
      %v1786 = vsel %vm1774, %v1279, %v1726
      %v1787 = vsel %vm1775, %v1281, %v1727
      %v1788 = vsel %vm1776, %v1372, %v1728
      %v1789 = vsel %vm1771, %v1285, %v1729
      %v1790 = vsel %vm1772, %v1287, %v1730
      %v1791 = vsel %vm1773, %v1378, %v1731
      %v1792 = vsel %vm1774, %v1289, %v1732
      %v1793 = vsel %vm1775, %v1291, %v1733
      %v1794 = vsel %vm1776, %v1382, %v1734
      %v1795 = vsel %vm1771, %v1295, %v1735
      %v1796 = vsel %vm1772, %v1297, %v1736
      %v1797 = vsel %vm1773, %v1388, %v1737
      %v1798 = vsel %vm1774, %v1299, %v1738
      %v1799 = vsel %vm1775, %v1301, %v1739
      %v1800 = vsel %vm1776, %v1392, %v1740
      %v1801 = vsel %vm1777, %v1305, %v1741
      %v1802 = vsel %vm1778, %v1307, %v1742
      %v1803 = vsel %vm1779, %v1398, %v1743
      %v1804 = vsel %vm1780, %v1309, %v1744
      %v1805 = vsel %vm1781, %v1311, %v1745
      %v1806 = vsel %vm1782, %v1402, %v1746
      %v1807 = vsel %vm1777, %v1315, %v1747
      %v1808 = vsel %vm1778, %v1317, %v1748
      %v1809 = vsel %vm1779, %v1408, %v1749
      %v1810 = vsel %vm1780, %v1319, %v1750
      %v1811 = vsel %vm1781, %v1321, %v1751
      %v1812 = vsel %vm1782, %v1412, %v1752
      %v1813 = vsel %vm1777, %v1325, %v1753
      %v1814 = vsel %vm1778, %v1327, %v1754
      %v1815 = vsel %vm1779, %v1418, %v1755
      %v1816 = vsel %vm1780, %v1329, %v1756
      %v1817 = vsel %vm1781, %v1331, %v1757
      %v1818 = vsel %vm1782, %v1422, %v1758
      %v1819 = vpack.c.bf16 %v1786, %v1783
      %v1820 = vpack.c.bf16 %v1787, %v1784
      %v1821 = vpack.c.bf16 %v1788, %v1785
      %v1822 = vpack.c.bf16 %v1792, %v1789
      %v1823 = vpack.c.bf16 %v1793, %v1790
      %v1824 = vpack.c.bf16 %v1794, %v1791
      %v1825 = vpack.c.bf16 %v1798, %v1795
      %v1826 = vpack.c.bf16 %v1799, %v1796
      %v1827 = vpack.c.bf16 %v1800, %v1797
      %v1828 = vpack.c.bf16 %v1804, %v1801
      %v1829 = vpack.c.bf16 %v1805, %v1802
      %v1830 = vpack.c.bf16 %v1806, %v1803
      %v1831 = vpack.c.bf16 %v1810, %v1807
      %v1832 = vpack.c.bf16 %v1811, %v1808
      %v1833 = vpack.c.bf16 %v1812, %v1809
      %v1834 = vpack.c.bf16 %v1816, %v1813
      %v1835 = vpack.c.bf16 %v1817, %v1814
      %v1836 = vpack.c.bf16 %v1818, %v1815
      %v1837 = vld [vmem:[%s4] sm:$0xff]
      %v1838 = vld [vmem:[%s4 + $0x8] sm:$0xf]
      %v1839 = vld [vmem:[%s4 + $0xc] sm:$0xff]
      %v1840 = vld [vmem:[%s4 + $0x14] sm:$0xf]
      %v1841 = vld [vmem:[%s4 + $0x18] sm:$0xff]
      %v1842 = vld [vmem:[%s4 + $0x20] sm:$0xf]
      %v1843 = vld [vmem:[%s4 + $0x24] sm:$0xff]
      %v1844 = vld [vmem:[%s4 + $0x2c] sm:$0xf]
      %v1845 = vld [vmem:[%s4 + $0x30] sm:$0xff]
      %v1846 = vld [vmem:[%s4 + $0x38] sm:$0xf]
      %v1847 = vld [vmem:[%s4 + $0x3c] sm:$0xff]
      %v1848 = vld [vmem:[%s4 + $0x44] sm:$0xf]
      %v1849 = vld [vmem:[%s4 + $0x48] sm:$0xff]
      %v1850 = vld [vmem:[%s4 + $0x50] sm:$0xf]
      %v1851 = vld [vmem:[%s4 + $0x54] sm:$0xff]
      %v1852 = vld [vmem:[%s4 + $0x5c] sm:$0xf]
      %v1853 = vld [vmem:[%s4 + $0x60] sm:$0xff]
      %v1854 = vld [vmem:[%s4 + $0x68] sm:$0xf]
      %v1855 = vld [vmem:[%s4 + $0x6c] sm:$0xff]
      %v1856 = vld [vmem:[%s4 + $0x74] sm:$0xf]
      %v1857 = vld [vmem:[%s4 + $0x78] sm:$0xff]
      %v1858 = vld [vmem:[%s4 + $0x80] sm:$0xf]
      %v1859 = vld [vmem:[%s4 + $0x84] sm:$0xff]
      %v1860 = vld [vmem:[%s4 + $0x8c] sm:$0xf]
      %v1861 = vld [vmem:[%s4 + $0x90] sm:$0xff]
      %v1862 = vld [vmem:[%s4 + $0x98] sm:$0xf]
      %v1863 = vld [vmem:[%s4 + $0x9c] sm:$0xff]
      %v1864 = vld [vmem:[%s4 + $0xa4] sm:$0xf]
      %v1865 = vld [vmem:[%s4 + $0xa8] sm:$0xff]
      %v1866 = vld [vmem:[%s4 + $0xb0] sm:$0xf]
      %v1867 = vld [vmem:[%s4 + $0xb4] sm:$0xff]
      %v1868 = vld [vmem:[%s4 + $0xbc] sm:$0xf]
      %v1869 = vld [vmem:[%s4 + $0xc0] sm:$0xff]
      %v1870 = vld [vmem:[%s4 + $0xc8] sm:$0xf]
      %v1871 = vld [vmem:[%s4 + $0xcc] sm:$0xff]
      %v1872 = vld [vmem:[%s4 + $0xd4] sm:$0xf]
      %v1873 = vld [vmem:[%s4 + $0xd8] sm:$0xff]
      %v1874 = vld [vmem:[%s4 + $0xe0] sm:$0xf]
      %v1875 = vld [vmem:[%s4 + $0xe4] sm:$0xff]
      %v1876 = vld [vmem:[%s4 + $0xec] sm:$0xf]
      %v1877 = vld [vmem:[%s4 + $0xf0] sm:$0xff]
      %v1878 = vld [vmem:[%s4 + $0xf8] sm:$0xf]
      %v1879 = vld [vmem:[%s4 + $0xfc] sm:$0xff]
      %v1880 = vld [vmem:[%s4 + $0x104] sm:$0xf]
      %v1881 = vld [vmem:[%s4 + $0x108] sm:$0xff]
      %v1882 = vld [vmem:[%s4 + $0x110] sm:$0xf]
      %v1883 = vld [vmem:[%s4 + $0x114] sm:$0xff]
      %v1884 = vld [vmem:[%s4 + $0x11c] sm:$0xf]
      %v1885 = vld [vmem:[%s4 + $0x120] sm:$0xff]
      %v1886 = vld [vmem:[%s4 + $0x128] sm:$0xf]
      %v1887 = vld [vmem:[%s4 + $0x12c] sm:$0xff]
      %v1888 = vld [vmem:[%s4 + $0x134] sm:$0xf]
      %v1889 = vld [vmem:[%s4 + $0x138] sm:$0xff]
      %v1890 = vld [vmem:[%s4 + $0x140] sm:$0xf]
      %v1891 = vld [vmem:[%s4 + $0x144] sm:$0xff]
      %v1892 = vld [vmem:[%s4 + $0x14c] sm:$0xf]
      %v1893 = vld [vmem:[%s4 + $0x150] sm:$0xff]
      %v1894 = vld [vmem:[%s4 + $0x158] sm:$0xf]
      %v1895 = vld [vmem:[%s4 + $0x15c] sm:$0xff]
      %v1896 = vld [vmem:[%s4 + $0x164] sm:$0xf]
      %v1897 = vld [vmem:[%s4 + $0x168] sm:$0xff]
      %v1898 = vld [vmem:[%s4 + $0x170] sm:$0xf]
      %v1899 = vld [vmem:[%s4 + $0x174] sm:$0xff]
      %v1900 = vld [vmem:[%s4 + $0x17c] sm:$0xf]
      %v1901 = vld [vmem:[%s4 + $0x180] sm:$0xff]
      %v1902 = vld [vmem:[%s4 + $0x188] sm:$0xf]
      %v1903 = vld [vmem:[%s4 + $0x18c] sm:$0xff]
      %v1904 = vld [vmem:[%s4 + $0x194] sm:$0xf]
      %v1905 = vld [vmem:[%s4 + $0x198] sm:$0xff]
      %v1906 = vld [vmem:[%s4 + $0x1a0] sm:$0xf]
      %v1907 = vld [vmem:[%s4 + $0x1a4] sm:$0xff]
      %v1908 = vld [vmem:[%s4 + $0x1ac] sm:$0xf]
      %v1909 = vld [vmem:[%s4 + $0x1b0] sm:$0xff]
      %v1910 = vld [vmem:[%s4 + $0x1b8] sm:$0xf]
      %v1911 = vld [vmem:[%s4 + $0x1bc] sm:$0xff]
      %v1912 = vld [vmem:[%s4 + $0x1c4] sm:$0xf]
      %v1913 = vld [vmem:[%s4 + $0x1c8] sm:$0xff]
      %v1914 = vld [vmem:[%s4 + $0x1d0] sm:$0xf]
      %v1915 = vld [vmem:[%s4 + $0x1d4] sm:$0xff]
      %v1916 = vld [vmem:[%s4 + $0x1dc] sm:$0xf]
      %v1917 = vld [vmem:[%s4 + $0x1e0] sm:$0xff]
      %v1918 = vld [vmem:[%s4 + $0x1e8] sm:$0xf]
      %v1919 = vld [vmem:[%s4 + $0x1ec] sm:$0xff]
      %v1920 = vld [vmem:[%s4 + $0x1f4] sm:$0xf]
      %v1921 = vld [vmem:[%s4 + $0x1f8] sm:$0xff]
      %v1922 = vld [vmem:[%s4 + $0x200] sm:$0xf]
      %v1923 = vld [vmem:[%s4 + $0x204] sm:$0xff]
      %v1924 = vld [vmem:[%s4 + $0x20c] sm:$0xf]
      %v1925 = vld [vmem:[%s4 + $0x210] sm:$0xff]
      %v1926 = vld [vmem:[%s4 + $0x218] sm:$0xf]
      %v1927 = vld [vmem:[%s4 + $0x21c] sm:$0xff]
      %v1928 = vld [vmem:[%s4 + $0x224] sm:$0xf]
      %v1929 = vld [vmem:[%s4 + $0x228] sm:$0xff]
      %v1930 = vld [vmem:[%s4 + $0x230] sm:$0xf]
      %v1931 = vld [vmem:[%s4 + $0x234] sm:$0xff]
      %v1932 = vld [vmem:[%s4 + $0x23c] sm:$0xf]
      %v2029 = vunpack.c.l.b16 %v1837
      %v2030 = vunpack.c.h.b16 %v1837
      %v2031 = vunpack.c.l.b16 %v1838
      %v2032 = vunpack.c.l.b16 %v1839
      %v2033 = vunpack.c.h.b16 %v1839
      %v2034 = vunpack.c.l.b16 %v1840
      %v2035 = vunpack.c.l.b16 %v1841
      %v2036 = vunpack.c.h.b16 %v1841
      %v2037 = vunpack.c.l.b16 %v1842
      %v2038 = vunpack.c.l.b16 %v1843
      %v2039 = vunpack.c.h.b16 %v1843
      %v2040 = vunpack.c.l.b16 %v1844
      %v2041 = vunpack.c.l.b16 %v1845
      %v2042 = vunpack.c.h.b16 %v1845
      %v2043 = vunpack.c.l.b16 %v1846
      %v2044 = vunpack.c.l.b16 %v1847
      %v2045 = vunpack.c.h.b16 %v1847
      %v2046 = vunpack.c.l.b16 %v1848
      %v2047 = vunpack.c.l.b16 %v1849
      %v2048 = vunpack.c.h.b16 %v1849
      %v2049 = vunpack.c.l.b16 %v1850
      %v2050 = vunpack.c.l.b16 %v1851
      %v2051 = vunpack.c.h.b16 %v1851
      %v2052 = vunpack.c.l.b16 %v1852
      %v2053 = vunpack.c.l.b16 %v1853
      %v2054 = vunpack.c.h.b16 %v1853
      %v2055 = vunpack.c.l.b16 %v1854
      %v2056 = vunpack.c.l.b16 %v1855
      %v2057 = vunpack.c.h.b16 %v1855
      %v2058 = vunpack.c.l.b16 %v1856
      %v2059 = vunpack.c.l.b16 %v1857
      %v2060 = vunpack.c.h.b16 %v1857
      %v2061 = vunpack.c.l.b16 %v1858
      %v2062 = vunpack.c.l.b16 %v1859
      %v2063 = vunpack.c.h.b16 %v1859
      %v2064 = vunpack.c.l.b16 %v1860
      %v2065 = vunpack.c.l.b16 %v1861
      %v2066 = vunpack.c.h.b16 %v1861
      %v2067 = vunpack.c.l.b16 %v1862
      %v2068 = vunpack.c.l.b16 %v1863
      %v2069 = vunpack.c.h.b16 %v1863
      %v2070 = vunpack.c.l.b16 %v1864
      %v2071 = vunpack.c.l.b16 %v1865
      %v2072 = vunpack.c.h.b16 %v1865
      %v2073 = vunpack.c.l.b16 %v1866
      %v2074 = vunpack.c.l.b16 %v1867
      %v2075 = vunpack.c.h.b16 %v1867
      %v2076 = vunpack.c.l.b16 %v1868
      %v2077 = vunpack.c.l.b16 %v1869
      %v2078 = vunpack.c.h.b16 %v1869
      %v2079 = vunpack.c.l.b16 %v1870
      %v2080 = vunpack.c.l.b16 %v1871
      %v2081 = vunpack.c.h.b16 %v1871
      %v2082 = vunpack.c.l.b16 %v1872
      %v2083 = vunpack.c.l.b16 %v1873
      %v2084 = vunpack.c.h.b16 %v1873
      %v2085 = vunpack.c.l.b16 %v1874
      %v2086 = vunpack.c.l.b16 %v1875
      %v2087 = vunpack.c.h.b16 %v1875
      %v2088 = vunpack.c.l.b16 %v1876
      %v2089 = vunpack.c.l.b16 %v1877
      %v2090 = vunpack.c.h.b16 %v1877
      %v2091 = vunpack.c.l.b16 %v1878
      %v2092 = vunpack.c.l.b16 %v1879
      %v2093 = vunpack.c.h.b16 %v1879
      %v2094 = vunpack.c.l.b16 %v1880
      %v2095 = vunpack.c.l.b16 %v1881
      %v2096 = vunpack.c.h.b16 %v1881
      %v2097 = vunpack.c.l.b16 %v1882
      %v2098 = vunpack.c.l.b16 %v1883
      %v2099 = vunpack.c.h.b16 %v1883
      %v2100 = vunpack.c.l.b16 %v1884
      %v2101 = vunpack.c.l.b16 %v1885
      %v2102 = vunpack.c.h.b16 %v1885
      %v2103 = vunpack.c.l.b16 %v1886
      %v2104 = vunpack.c.l.b16 %v1887
      %v2105 = vunpack.c.h.b16 %v1887
      %v2106 = vunpack.c.l.b16 %v1888
      %v2107 = vunpack.c.l.b16 %v1889
      %v2108 = vunpack.c.h.b16 %v1889
      %v2109 = vunpack.c.l.b16 %v1890
      %v2110 = vunpack.c.l.b16 %v1891
      %v2111 = vunpack.c.h.b16 %v1891
      %v2112 = vunpack.c.l.b16 %v1892
      %v2113 = vunpack.c.l.b16 %v1893
      %v2114 = vunpack.c.h.b16 %v1893
      %v2115 = vunpack.c.l.b16 %v1894
      %v2116 = vunpack.c.l.b16 %v1895
      %v2117 = vunpack.c.h.b16 %v1895
      %v2118 = vunpack.c.l.b16 %v1896
      %v2119 = vunpack.c.l.b16 %v1897
      %v2120 = vunpack.c.h.b16 %v1897
      %v2121 = vunpack.c.l.b16 %v1898
      %v2122 = vunpack.c.l.b16 %v1899
      %v2123 = vunpack.c.h.b16 %v1899
      %v2124 = vunpack.c.l.b16 %v1900
      %v2125 = vunpack.c.l.b16 %v1901
      %v2126 = vunpack.c.h.b16 %v1901
      %v2127 = vunpack.c.l.b16 %v1902
      %v2128 = vunpack.c.l.b16 %v1903
      %v2129 = vunpack.c.h.b16 %v1903
      %v2130 = vunpack.c.l.b16 %v1904
      %v2131 = vunpack.c.l.b16 %v1905
      %v2132 = vunpack.c.h.b16 %v1905
      %v2133 = vunpack.c.l.b16 %v1906
      %v2134 = vunpack.c.l.b16 %v1907
      %v2135 = vunpack.c.h.b16 %v1907
      %v2136 = vunpack.c.l.b16 %v1908
      %v2137 = vunpack.c.l.b16 %v1909
      %v2138 = vunpack.c.h.b16 %v1909
      %v2139 = vunpack.c.l.b16 %v1910
      %v2140 = vunpack.c.l.b16 %v1911
      %v2141 = vunpack.c.h.b16 %v1911
      %v2142 = vunpack.c.l.b16 %v1912
      %v2143 = vunpack.c.l.b16 %v1913
      %v2144 = vunpack.c.h.b16 %v1913
      %v2145 = vunpack.c.l.b16 %v1914
      %v2146 = vunpack.c.l.b16 %v1915
      %v2147 = vunpack.c.h.b16 %v1915
      %v2148 = vunpack.c.l.b16 %v1916
      %v2149 = vunpack.c.l.b16 %v1917
      %v2150 = vunpack.c.h.b16 %v1917
      %v2151 = vunpack.c.l.b16 %v1918
      %v2152 = vunpack.c.l.b16 %v1919
      %v2153 = vunpack.c.h.b16 %v1919
      %v2154 = vunpack.c.l.b16 %v1920
      %v2155 = vunpack.c.l.b16 %v1921
      %v2156 = vunpack.c.h.b16 %v1921
      %v2157 = vunpack.c.l.b16 %v1922
      %v2158 = vunpack.c.l.b16 %v1923
      %v2159 = vunpack.c.h.b16 %v1923
      %v2160 = vunpack.c.l.b16 %v1924
      %v2161 = vunpack.c.l.b16 %v1925
      %v2162 = vunpack.c.h.b16 %v1925
      %v2163 = vunpack.c.l.b16 %v1926
      %v2164 = vunpack.c.l.b16 %v1927
      %v2165 = vunpack.c.h.b16 %v1927
      %v2166 = vunpack.c.l.b16 %v1928
      %v2167 = vunpack.c.l.b16 %v1929
      %v2168 = vunpack.c.h.b16 %v1929
      %v2169 = vunpack.c.l.b16 %v1930
      %v2170 = vunpack.c.l.b16 %v1931
      %v2171 = vunpack.c.h.b16 %v1931
      %v2172 = vunpack.c.l.b16 %v1932
      %v2173 = vpack.c.b16 %v2032, %v2029
      %v2174 = vpack.c.b16 %v2033, %v2030
      %v2175 = vpack.c.b16 %v2034, %v2031
      %v2176 = vpack.c.b16 %v2038, %v2035
      %v2177 = vpack.c.b16 %v2039, %v2036
      %v2178 = vpack.c.b16 %v2040, %v2037
      %v2179 = vpack.c.b16 %v2044, %v2041
      %v2180 = vpack.c.b16 %v2045, %v2042
      %v2181 = vpack.c.b16 %v2046, %v2043
      %v2182 = vpack.c.b16 %v2050, %v2047
      %v2183 = vpack.c.b16 %v2051, %v2048
      %v2184 = vpack.c.b16 %v2052, %v2049
      %v2185 = vpack.c.b16 %v2056, %v2053
      %v2186 = vpack.c.b16 %v2057, %v2054
      %v2187 = vpack.c.b16 %v2058, %v2055
      %v2188 = vpack.c.b16 %v2062, %v2059
      %v2189 = vpack.c.b16 %v2063, %v2060
      %v2190 = vpack.c.b16 %v2064, %v2061
      %v2191 = vpack.c.b16 %v2068, %v2065
      %v2192 = vpack.c.b16 %v2069, %v2066
      %v2193 = vpack.c.b16 %v2070, %v2067
      %v2194 = vpack.c.b16 %v2074, %v2071
      %v2195 = vpack.c.b16 %v2075, %v2072
      %v2196 = vpack.c.b16 %v2076, %v2073
      %v2197 = vpack.c.b16 %v2080, %v2077
      %v2198 = vpack.c.b16 %v2081, %v2078
      %v2199 = vpack.c.b16 %v2082, %v2079
      %v2200 = vpack.c.b16 %v2086, %v2083
      %v2201 = vpack.c.b16 %v2087, %v2084
      %v2202 = vpack.c.b16 %v2088, %v2085
      %v2203 = vpack.c.b16 %v2092, %v2089
      %v2204 = vpack.c.b16 %v2093, %v2090
      %v2205 = vpack.c.b16 %v2094, %v2091
      %v2206 = vpack.c.b16 %v2098, %v2095
      %v2207 = vpack.c.b16 %v2099, %v2096
      %v2208 = vpack.c.b16 %v2100, %v2097
      %v2209 = vpack.c.b16 %v2104, %v2101
      %v2210 = vpack.c.b16 %v2105, %v2102
      %v2211 = vpack.c.b16 %v2106, %v2103
      %v2212 = vpack.c.b16 %v2110, %v2107
      %v2213 = vpack.c.b16 %v2111, %v2108
      %v2214 = vpack.c.b16 %v2112, %v2109
      %v2215 = vpack.c.b16 %v2116, %v2113
      %v2216 = vpack.c.b16 %v2117, %v2114
      %v2217 = vpack.c.b16 %v2118, %v2115
      %v2218 = vpack.c.b16 %v2122, %v2119
      %v2219 = vpack.c.b16 %v2123, %v2120
      %v2220 = vpack.c.b16 %v2124, %v2121
      %v2221 = vpack.c.b16 %v2128, %v2125
      %v2222 = vpack.c.b16 %v2129, %v2126
      %v2223 = vpack.c.b16 %v2130, %v2127
      %v2224 = vpack.c.b16 %v2134, %v2131
      %v2225 = vpack.c.b16 %v2135, %v2132
      %v2226 = vpack.c.b16 %v2136, %v2133
      %v2227 = vpack.c.b16 %v2140, %v2137
      %v2228 = vpack.c.b16 %v2141, %v2138
      %v2229 = vpack.c.b16 %v2142, %v2139
      %v2230 = vpack.c.b16 %v2146, %v2143
      %v2231 = vpack.c.b16 %v2147, %v2144
      %v2232 = vpack.c.b16 %v2148, %v2145
      %v2233 = vpack.c.b16 %v2152, %v2149
      %v2234 = vpack.c.b16 %v2153, %v2150
      %v2235 = vpack.c.b16 %v2154, %v2151
      %v2236 = vpack.c.b16 %v2158, %v2155
      %v2237 = vpack.c.b16 %v2159, %v2156
      %v2238 = vpack.c.b16 %v2160, %v2157
      %v2239 = vpack.c.b16 %v2164, %v2161
      %v2240 = vpack.c.b16 %v2165, %v2162
      %v2241 = vpack.c.b16 %v2166, %v2163
      %v2242 = vpack.c.b16 %v2170, %v2167
      %v2243 = vpack.c.b16 %v2171, %v2168
      %v2244 = vpack.c.b16 %v2172, %v2169
      %2317 = vmatprep.subr.bf16.mxu0 %v2174
      %2318 = vmatpush1.bf16.msra.mxu0 %v2173
      %2319 = vmatprep.subr.bf16.mxu0 %v2177
      %2320 = vmatpush1.bf16.msra.mxu0 %v2176
      %2321 = vmatprep.subr.bf16.mxu0 %v2180
      %2322 = vmatpush1.bf16.msra.mxu0 %v2179
      %2323 = vmatprep.subr.bf16.mxu0 %v2183
      %2324 = vmatpush1.bf16.msra.mxu0 %v2182
      %2325 = vmatprep.subr.bf16.mxu0 %v2186
      %2326 = vmatpush1.bf16.msra.mxu0 %v2185
      %2327 = vmatprep.subr.bf16.mxu0 %v2189
      %2328 = vmatpush1.bf16.msra.mxu0 %v2188
      %2329 = vmatprep.subr.bf16.mxu0 %v2192
      %2330 = vmatpush1.bf16.msra.mxu0 %v2191
      %2331 = vmatprep.subr.bf16.mxu0 %v2195
      %2332 = vmatpush1.bf16.msra.mxu0 %v2194
      %2333 = vmatprep.subr.bf16.mxu0 %v2198
      %2334 = vmatpush1.bf16.msra.mxu0 %v2197
      %2335 = vmatprep.subr.bf16.mxu0 %v2201
      %2336 = vmatpush1.bf16.msra.mxu0 %v2200
      %2337 = vmatprep.subr.bf16.mxu0 %v2204
      %2338 = vmatpush1.bf16.msra.mxu0 %v2203
      %2339 = vmatprep.subr.bf16.mxu0 %v2207
      %2340 = vmatpush1.bf16.msra.mxu0 %v2206
      %2341 = vmatprep.subr.bf16.mxu0 %v2210
      %2342 = vmatpush1.bf16.msra.mxu0 %v2209
      %2343 = vmatprep.subr.bf16.mxu0 %v2213
      %2344 = vmatpush1.bf16.msra.mxu0 %v2212
      %2345 = vmatprep.subr.bf16.mxu0 %v2216
      %2346 = vmatpush1.bf16.msra.mxu0 %v2215
      %2347 = vmatprep.subr.bf16.mxu0 %v2219
      %2348 = vmatpush1.bf16.msra.mxu0 %v2218
      %2349 = vmatprep.mubr.bf16.mxu0 %v1820
      %2350 = vmatmul.mubr.bf16.gmra.mrb[0].mxu0 %v1819
      %v2351 = vpop.f32.mrb[0].mxu0
      %v2352 = vadd.f32 0.0, %v2351
      %v2353 = vpop.f32.mrb[0].mxu0
      %v2354 = vadd.f32 0.0, %v2353
      %v2355 = vpop.f32.mrb[0].mxu0
      %v2356 = vadd.f32 0.0, %v2355
      %v2357 = vpop.f32.mrb[0].mxu0
      %v2358 = vadd.f32 0.0, %v2357
      %2359 = vmatprep.mubr.bf16.mxu0 %v1823
      %2360 = vmatmul.mubr.bf16.gmra.mrb[0].mxu0 %v1822
      %v2361 = vpop.f32.mrb[0].mxu0
      %v2362 = vadd.f32 0.0, %v2361
      %v2363 = vpop.f32.mrb[0].mxu0
      %v2364 = vadd.f32 0.0, %v2363
      %v2365 = vpop.f32.mrb[0].mxu0
      %v2366 = vadd.f32 0.0, %v2365
      %v2367 = vpop.f32.mrb[0].mxu0
      %v2368 = vadd.f32 0.0, %v2367
      %2369 = vmatprep.mubr.bf16.mxu0 %v1826
      %2370 = vmatmul.mubr.bf16.gmra.mrb[0].mxu0 %v1825
      %v2371 = vpop.f32.mrb[0].mxu0
      %v2372 = vadd.f32 0.0, %v2371
      %v2373 = vpop.f32.mrb[0].mxu0
      %v2374 = vadd.f32 0.0, %v2373
      %v2375 = vpop.f32.mrb[0].mxu0
      %v2376 = vadd.f32 0.0, %v2375
      %v2377 = vpop.f32.mrb[0].mxu0
      %v2378 = vadd.f32 0.0, %v2377
      %2379 = vmatprep.mubr.bf16.mxu0 %v1829
      %2380 = vmatmul.mubr.bf16.gmra.mrb[0].mxu0 %v1828
      %v2381 = vpop.f32.mrb[0].mxu0
      %v2382 = vadd.f32 0.0, %v2381
      %v2383 = vpop.f32.mrb[0].mxu0
      %v2384 = vadd.f32 0.0, %v2383
      %v2385 = vpop.f32.mrb[0].mxu0
      %v2386 = vadd.f32 0.0, %v2385
      %v2387 = vpop.f32.mrb[0].mxu0
      %v2388 = vadd.f32 0.0, %v2387
      %2389 = vmatprep.mubr.bf16.mxu0 %v1832
      %2390 = vmatmul.mubr.bf16.gmra.mrb[0].mxu0 %v1831
      %v2391 = vpop.f32.mrb[0].mxu0
      %v2392 = vadd.f32 0.0, %v2391
      %v2393 = vpop.f32.mrb[0].mxu0
      %v2394 = vadd.f32 0.0, %v2393
      %v2395 = vpop.f32.mrb[0].mxu0
      %v2396 = vadd.f32 0.0, %v2395
      %v2397 = vpop.f32.mrb[0].mxu0
      %v2398 = vadd.f32 0.0, %v2397
      %2399 = vmatprep.mubr.bf16.mxu0 %v1835
      %2400 = vmatmul.mubr.bf16.gmra.mrb[0].mxu0 %v1834
      %v2401 = vpop.f32.mrb[0].mxu0
      %v2402 = vadd.f32 0.0, %v2401
      %v2403 = vpop.f32.mrb[0].mxu0
      %v2404 = vadd.f32 0.0, %v2403
      %v2405 = vpop.f32.mrb[0].mxu0
      %v2406 = vadd.f32 0.0, %v2405
      %v2407 = vpop.f32.mrb[0].mxu0
      %v2408 = vadd.f32 0.0, %v2407
      %2409 = vdwg.mxu0
      %2410 = vmatprep.subr.bf16.mxu0 %v2222
      %2411 = vmatpush1.bf16.msra.mxu0 %v2221
      %2412 = vmatprep.subr.bf16.mxu0 %v2225
      %2413 = vmatpush1.bf16.msra.mxu0 %v2224
      %2414 = vmatprep.subr.bf16.mxu0 %v2228
      %2415 = vmatpush1.bf16.msra.mxu0 %v2227
      %2416 = vmatprep.subr.bf16.mxu0 %v2231
      %2417 = vmatpush1.bf16.msra.mxu0 %v2230
      %2418 = vmatprep.subr.bf16.mxu0 %v2234
      %2419 = vmatpush1.bf16.msra.mxu0 %v2233
      %2420 = vmatprep.subr.bf16.mxu0 %v2237
      %2421 = vmatpush1.bf16.msra.mxu0 %v2236
      %2422 = vmatprep.subr.bf16.mxu0 %v2240
      %2423 = vmatpush1.bf16.msra.mxu0 %v2239
      %2424 = vmatprep.subr.bf16.mxu0 %v2243
      %2425 = vmatpush1.bf16.msra.mxu0 %v2242
      %2426 = vmatprep.subr.bf16.mxu0 0
      %2427 = vmatpush1.bf16.msra.mxu0 0
      %2428 = vmatprep.subr.bf16.mxu0 0
      %2429 = vmatpush1.bf16.msra.mxu0 0
      %2430 = vmatprep.subr.bf16.mxu0 0
      %2431 = vmatpush1.bf16.msra.mxu0 0
      %2432 = vmatprep.subr.bf16.mxu0 0
      %2433 = vmatpush1.bf16.msra.mxu0 0
      %2434 = vmatprep.subr.bf16.mxu0 0
      %2435 = vmatpush1.bf16.msra.mxu0 0
      %2436 = vmatprep.subr.bf16.mxu0 0
      %2437 = vmatpush1.bf16.msra.mxu0 0
      %2438 = vmatprep.subr.bf16.mxu0 0
      %2439 = vmatpush1.bf16.msra.mxu0 0
      %2440 = vmatprep.subr.bf16.mxu0 0
      %2441 = vmatpush1.bf16.msra.mxu0 0
      %2442 = vmatprep.mubr.bf16.mxu0 0
      %2443 = vmatmul.mubr.bf16.gmra.mrb[0].mxu0 %v1821
      %v2444 = vpop.f32.mrb[0].mxu0
      %v2445 = vadd.f32 %v2352, %v2444
      %v2446 = vpop.f32.mrb[0].mxu0
      %v2447 = vadd.f32 %v2354, %v2446
      %v2448 = vpop.f32.mrb[0].mxu0
      %v2449 = vadd.f32 %v2356, %v2448
      %v2450 = vpop.f32.mrb[0].mxu0
      %v2451 = vadd.f32 %v2358, %v2450
      %2452 = vmatprep.mubr.bf16.mxu0 0
      %2453 = vmatmul.mubr.bf16.gmra.mrb[0].mxu0 %v1824
      %v2454 = vpop.f32.mrb[0].mxu0
      %v2455 = vadd.f32 %v2362, %v2454
      %v2456 = vpop.f32.mrb[0].mxu0
      %v2457 = vadd.f32 %v2364, %v2456
      %v2458 = vpop.f32.mrb[0].mxu0
      %v2459 = vadd.f32 %v2366, %v2458
      %v2460 = vpop.f32.mrb[0].mxu0
      %v2461 = vadd.f32 %v2368, %v2460
      %2462 = vmatprep.mubr.bf16.mxu0 0
      %2463 = vmatmul.mubr.bf16.gmra.mrb[0].mxu0 %v1827
      %v2464 = vpop.f32.mrb[0].mxu0
      %v2465 = vadd.f32 %v2372, %v2464
      %v2466 = vpop.f32.mrb[0].mxu0
      %v2467 = vadd.f32 %v2374, %v2466
      %v2468 = vpop.f32.mrb[0].mxu0
      %v2469 = vadd.f32 %v2376, %v2468
      %v2470 = vpop.f32.mrb[0].mxu0
      %v2471 = vadd.f32 %v2378, %v2470
      %2472 = vmatprep.mubr.bf16.mxu0 0
      %2473 = vmatmul.mubr.bf16.gmra.mrb[0].mxu0 %v1830
      %v2474 = vpop.f32.mrb[0].mxu0
      %v2475 = vadd.f32 %v2382, %v2474
      %v2476 = vpop.f32.mrb[0].mxu0
      %v2477 = vadd.f32 %v2384, %v2476
      %v2478 = vpop.f32.mrb[0].mxu0
      %v2479 = vadd.f32 %v2386, %v2478
      %v2480 = vpop.f32.mrb[0].mxu0
      %v2481 = vadd.f32 %v2388, %v2480
      %2482 = vmatprep.mubr.bf16.mxu0 0
      %2483 = vmatmul.mubr.bf16.gmra.mrb[0].mxu0 %v1833
      %v2484 = vpop.f32.mrb[0].mxu0
      %v2485 = vadd.f32 %v2392, %v2484
      %v2486 = vpop.f32.mrb[0].mxu0
      %v2487 = vadd.f32 %v2394, %v2486
      %v2488 = vpop.f32.mrb[0].mxu0
      %v2489 = vadd.f32 %v2396, %v2488
      %v2490 = vpop.f32.mrb[0].mxu0
      %v2491 = vadd.f32 %v2398, %v2490
      %2492 = vmatprep.mubr.bf16.mxu0 0
      %2493 = vmatmul.mubr.bf16.gmra.mrb[0].mxu0 %v1836
      %v2494 = vpop.f32.mrb[0].mxu0
      %v2495 = vadd.f32 %v2402, %v2494
      %v2496 = vpop.f32.mrb[0].mxu0
      %v2497 = vadd.f32 %v2404, %v2496
      %v2498 = vpop.f32.mrb[0].mxu0
      %v2499 = vadd.f32 %v2406, %v2498
      %v2500 = vpop.f32.mrb[0].mxu0
      %v2501 = vadd.f32 %v2408, %v2500
      %2502 = vdwg.mxu0
      %2503 = vmatprep.subr.bf16.mxu0 0
      %2504 = vmatpush1.bf16.msra.mxu0 %v2175
      %2505 = vmatprep.subr.bf16.mxu0 0
      %2506 = vmatpush1.bf16.msra.mxu0 %v2178
      %2507 = vmatprep.subr.bf16.mxu0 0
      %2508 = vmatpush1.bf16.msra.mxu0 %v2181
      %2509 = vmatprep.subr.bf16.mxu0 0
      %2510 = vmatpush1.bf16.msra.mxu0 %v2184
      %2511 = vmatprep.subr.bf16.mxu0 0
      %2512 = vmatpush1.bf16.msra.mxu0 %v2187
      %2513 = vmatprep.subr.bf16.mxu0 0
      %2514 = vmatpush1.bf16.msra.mxu0 %v2190
      %2515 = vmatprep.subr.bf16.mxu0 0
      %2516 = vmatpush1.bf16.msra.mxu0 %v2193
      %2517 = vmatprep.subr.bf16.mxu0 0
      %2518 = vmatpush1.bf16.msra.mxu0 %v2196
      %2519 = vmatprep.subr.bf16.mxu0 0
      %2520 = vmatpush1.bf16.msra.mxu0 %v2199
      %2521 = vmatprep.subr.bf16.mxu0 0
      %2522 = vmatpush1.bf16.msra.mxu0 %v2202
      %2523 = vmatprep.subr.bf16.mxu0 0
      %2524 = vmatpush1.bf16.msra.mxu0 %v2205
      %2525 = vmatprep.subr.bf16.mxu0 0
      %2526 = vmatpush1.bf16.msra.mxu0 %v2208
      %2527 = vmatprep.subr.bf16.mxu0 0
      %2528 = vmatpush1.bf16.msra.mxu0 %v2211
      %2529 = vmatprep.subr.bf16.mxu0 0
      %2530 = vmatpush1.bf16.msra.mxu0 %v2214
      %2531 = vmatprep.subr.bf16.mxu0 0
      %2532 = vmatpush1.bf16.msra.mxu0 %v2217
      %2533 = vmatprep.subr.bf16.mxu0 0
      %2534 = vmatpush1.bf16.msra.mxu0 %v2220
      %2535 = vmatprep.mubr.bf16.mxu0 %v1820
      %2536 = vmatmul.mubr.bf16.gmra.mrb[0].mxu0 %v1819
      %v2537 = vpop.f32.mrb[0].mxu0
      %v2538 = vadd.f32 0.0, %v2537
      %v2539 = vpop.f32.mrb[0].mxu0
      %v2540 = vpop.f32.mrb[0].mxu0
      %v2541 = vadd.f32 0.0, %v2540
      %v2542 = vpop.f32.mrb[0].mxu0
      %2543 = vmatprep.mubr.bf16.mxu0 %v1823
      %2544 = vmatmul.mubr.bf16.gmra.mrb[0].mxu0 %v1822
      %v2545 = vpop.f32.mrb[0].mxu0
      %v2546 = vadd.f32 0.0, %v2545
      %v2547 = vpop.f32.mrb[0].mxu0
      %v2548 = vpop.f32.mrb[0].mxu0
      %v2549 = vadd.f32 0.0, %v2548
      %v2550 = vpop.f32.mrb[0].mxu0
      %2551 = vmatprep.mubr.bf16.mxu0 %v1826
      %2552 = vmatmul.mubr.bf16.gmra.mrb[0].mxu0 %v1825
      %v2553 = vpop.f32.mrb[0].mxu0
      %v2554 = vadd.f32 0.0, %v2553
      %v2555 = vpop.f32.mrb[0].mxu0
      %v2556 = vpop.f32.mrb[0].mxu0
      %v2557 = vadd.f32 0.0, %v2556
      %v2558 = vpop.f32.mrb[0].mxu0
      %2559 = vmatprep.mubr.bf16.mxu0 %v1829
      %2560 = vmatmul.mubr.bf16.gmra.mrb[0].mxu0 %v1828
      %v2561 = vpop.f32.mrb[0].mxu0
      %v2562 = vadd.f32 0.0, %v2561
      %v2563 = vpop.f32.mrb[0].mxu0
      %v2564 = vpop.f32.mrb[0].mxu0
      %v2565 = vadd.f32 0.0, %v2564
      %v2566 = vpop.f32.mrb[0].mxu0
      %2567 = vmatprep.mubr.bf16.mxu0 %v1832
      %2568 = vmatmul.mubr.bf16.gmra.mrb[0].mxu0 %v1831
      %v2569 = vpop.f32.mrb[0].mxu0
      %v2570 = vadd.f32 0.0, %v2569
      %v2571 = vpop.f32.mrb[0].mxu0
      %v2572 = vpop.f32.mrb[0].mxu0
      %v2573 = vadd.f32 0.0, %v2572
      %v2574 = vpop.f32.mrb[0].mxu0
      %2575 = vmatprep.mubr.bf16.mxu0 %v1835
      %2576 = vmatmul.mubr.bf16.gmra.mrb[0].mxu0 %v1834
      %v2577 = vpop.f32.mrb[0].mxu0
      %v2578 = vadd.f32 0.0, %v2577
      %v2579 = vpop.f32.mrb[0].mxu0
      %v2580 = vpop.f32.mrb[0].mxu0
      %v2581 = vadd.f32 0.0, %v2580
      %v2582 = vpop.f32.mrb[0].mxu0
      %2583 = vdwg.mxu0
      %2584 = vmatprep.subr.bf16.mxu0 0
      %2585 = vmatpush1.bf16.msra.mxu0 %v2223
      %2586 = vmatprep.subr.bf16.mxu0 0
      %2587 = vmatpush1.bf16.msra.mxu0 %v2226
      %2588 = vmatprep.subr.bf16.mxu0 0
      %2589 = vmatpush1.bf16.msra.mxu0 %v2229
      %2590 = vmatprep.subr.bf16.mxu0 0
      %2591 = vmatpush1.bf16.msra.mxu0 %v2232
      %2592 = vmatprep.subr.bf16.mxu0 0
      %2593 = vmatpush1.bf16.msra.mxu0 %v2235
      %2594 = vmatprep.subr.bf16.mxu0 0
      %2595 = vmatpush1.bf16.msra.mxu0 %v2238
      %2596 = vmatprep.subr.bf16.mxu0 0
      %2597 = vmatpush1.bf16.msra.mxu0 %v2241
      %2598 = vmatprep.subr.bf16.mxu0 0
      %2599 = vmatpush1.bf16.msra.mxu0 %v2244
      %2600 = vmatprep.subr.bf16.mxu0 0
      %2601 = vmatpush1.bf16.msra.mxu0 0
      %2602 = vmatprep.subr.bf16.mxu0 0
      %2603 = vmatpush1.bf16.msra.mxu0 0
      %2604 = vmatprep.subr.bf16.mxu0 0
      %2605 = vmatpush1.bf16.msra.mxu0 0
      %2606 = vmatprep.subr.bf16.mxu0 0
      %2607 = vmatpush1.bf16.msra.mxu0 0
      %2608 = vmatprep.subr.bf16.mxu0 0
      %2609 = vmatpush1.bf16.msra.mxu0 0
      %2610 = vmatprep.subr.bf16.mxu0 0
      %2611 = vmatpush1.bf16.msra.mxu0 0
      %2612 = vmatprep.subr.bf16.mxu0 0
      %2613 = vmatpush1.bf16.msra.mxu0 0
      %2614 = vmatprep.subr.bf16.mxu0 0
      %2615 = vmatpush1.bf16.msra.mxu0 0
      %2616 = vmatprep.mubr.bf16.mxu0 0
      %2617 = vmatmul.mubr.bf16.gmra.mrb[0].mxu0 %v1821
      %v2618 = vpop.f32.mrb[0].mxu0
      %v2619 = vadd.f32 %v2538, %v2618
      %v2620 = vpop.f32.mrb[0].mxu0
      %v2621 = vpop.f32.mrb[0].mxu0
      %v2622 = vadd.f32 %v2541, %v2621
      %v2623 = vpop.f32.mrb[0].mxu0
      %2624 = vmatprep.mubr.bf16.mxu0 0
      %2625 = vmatmul.mubr.bf16.gmra.mrb[0].mxu0 %v1824
      %v2626 = vpop.f32.mrb[0].mxu0
      %v2627 = vadd.f32 %v2546, %v2626
      %v2628 = vpop.f32.mrb[0].mxu0
      %v2629 = vpop.f32.mrb[0].mxu0
      %v2630 = vadd.f32 %v2549, %v2629
      %v2631 = vpop.f32.mrb[0].mxu0
      %2632 = vmatprep.mubr.bf16.mxu0 0
      %2633 = vmatmul.mubr.bf16.gmra.mrb[0].mxu0 %v1827
      %v2634 = vpop.f32.mrb[0].mxu0
      %v2635 = vadd.f32 %v2554, %v2634
      %v2636 = vpop.f32.mrb[0].mxu0
      %v2637 = vpop.f32.mrb[0].mxu0
      %v2638 = vadd.f32 %v2557, %v2637
      %v2639 = vpop.f32.mrb[0].mxu0
      %2640 = vmatprep.mubr.bf16.mxu0 0
      %2641 = vmatmul.mubr.bf16.gmra.mrb[0].mxu0 %v1830
      %v2642 = vpop.f32.mrb[0].mxu0
      %v2643 = vadd.f32 %v2562, %v2642
      %v2644 = vpop.f32.mrb[0].mxu0
      %v2645 = vpop.f32.mrb[0].mxu0
      %v2646 = vadd.f32 %v2565, %v2645
      %v2647 = vpop.f32.mrb[0].mxu0
      %2648 = vmatprep.mubr.bf16.mxu0 0
      %2649 = vmatmul.mubr.bf16.gmra.mrb[0].mxu0 %v1833
      %v2650 = vpop.f32.mrb[0].mxu0
      %v2651 = vadd.f32 %v2570, %v2650
      %v2652 = vpop.f32.mrb[0].mxu0
      %v2653 = vpop.f32.mrb[0].mxu0
      %v2654 = vadd.f32 %v2573, %v2653
      %v2655 = vpop.f32.mrb[0].mxu0
      %2656 = vmatprep.mubr.bf16.mxu0 0
      %2657 = vmatmul.mubr.bf16.gmra.mrb[0].mxu0 %v1836
      %v2658 = vpop.f32.mrb[0].mxu0
      %v2659 = vadd.f32 %v2578, %v2658
      %v2660 = vpop.f32.mrb[0].mxu0
      %v2661 = vpop.f32.mrb[0].mxu0
      %v2662 = vadd.f32 %v2581, %v2661
      %v2663 = vpop.f32.mrb[0].mxu0
      %2664 = vdwg.mxu0
      %v2665 = vmul.f32 %v1783, %v2445
      %v2666 = vmul.f32 %v1784, %v2447
      %v2667 = vmul.f32 %v1785, %v2619
      %v2668 = vmul.f32 %v1786, %v2449
      %v2669 = vmul.f32 %v1787, %v2451
      %v2670 = vmul.f32 %v1788, %v2622
      %v2671 = vmul.f32 %v1789, %v2455
      %v2672 = vmul.f32 %v1790, %v2457
      %v2673 = vmul.f32 %v1791, %v2627
      %v2674 = vmul.f32 %v1792, %v2459
      %v2675 = vmul.f32 %v1793, %v2461
      %v2676 = vmul.f32 %v1794, %v2630
      %v2677 = vmul.f32 %v1795, %v2465
      %v2678 = vmul.f32 %v1796, %v2467
      %v2679 = vmul.f32 %v1797, %v2635
      %v2680 = vmul.f32 %v1798, %v2469
      %v2681 = vmul.f32 %v1799, %v2471
      %v2682 = vmul.f32 %v1800, %v2638
      %v2683 = vmul.f32 %v1801, %v2475
      %v2684 = vmul.f32 %v1802, %v2477
      %v2685 = vmul.f32 %v1803, %v2643
      %v2686 = vmul.f32 %v1804, %v2479
      %v2687 = vmul.f32 %v1805, %v2481
      %v2688 = vmul.f32 %v1806, %v2646
      %v2689 = vmul.f32 %v1807, %v2485
      %v2690 = vmul.f32 %v1808, %v2487
      %v2691 = vmul.f32 %v1809, %v2651
      %v2692 = vmul.f32 %v1810, %v2489
      %v2693 = vmul.f32 %v1811, %v2491
      %v2694 = vmul.f32 %v1812, %v2654
      %v2695 = vmul.f32 %v1813, %v2495
      %v2696 = vmul.f32 %v1814, %v2497
      %v2697 = vmul.f32 %v1815, %v2659
      %v2698 = vmul.f32 %v1816, %v2499
      %v2699 = vmul.f32 %v1817, %v2501
      %v2700 = vmul.f32 %v1818, %v2662
      %v2701 = vadd.f32 %v2665, %v2671
      %v2702 = vadd.f32 %v2701, %v2677
      %v2703 = vadd.f32 %v2666, %v2672
      %v2704 = vadd.f32 %v2703, %v2678
      %v2705 = vadd.f32 %v2667, %v2673
      %v2706 = vadd.f32 %v2705, %v2679
      %v2707 = vadd.f32 %v2668, %v2674
      %v2708 = vadd.f32 %v2707, %v2680
      %v2709 = vadd.f32 %v2669, %v2675
      %v2710 = vadd.f32 %v2709, %v2681
      %v2711 = vadd.f32 %v2670, %v2676
      %v2712 = vadd.f32 %v2711, %v2682
      %v2713 = vadd.f32 %v2683, %v2689
      %v2714 = vadd.f32 %v2713, %v2695
      %v2715 = vadd.f32 %v2684, %v2690
      %v2716 = vadd.f32 %v2715, %v2696
      %v2717 = vadd.f32 %v2685, %v2691
      %v2718 = vadd.f32 %v2717, %v2697
      %v2719 = vadd.f32 %v2686, %v2692
      %v2720 = vadd.f32 %v2719, %v2698
      %v2721 = vadd.f32 %v2687, %v2693
      %v2722 = vadd.f32 %v2721, %v2699
      %v2723 = vadd.f32 %v2688, %v2694
      %v2724 = vadd.f32 %v2723, %v2700
      %v2725 = vmax.f32 %v2702, %v2708
      %v2726 = vrot.slane %v2725, 4
      %v2727 = vmax.f32 %v2725, %v2726
      %v2728 = vrot.slane %v2727, 2
      %v2729 = vmax.f32 %v2727, %v2728
      %v2730 = vrot.slane %v2729, 1
      %v2731 = vmax.f32 %v2729, %v2730
      %v2732 = vmax.f32 %v2704, %v2710
      %v2733 = vrot.slane %v2732, 4
      %v2734 = vmax.f32 %v2732, %v2733
      %v2735 = vrot.slane %v2734, 2
      %v2736 = vmax.f32 %v2734, %v2735
      %v2737 = vrot.slane %v2736, 1
      %v2738 = vmax.f32 %v2736, %v2737
      %v2739 = vmax.f32 %v2706, %v2712
      %v2740 = vrot.slane %v2739, 4
      %v2741 = vmax.f32 %v2739, %v2740
      %v2742 = vrot.slane %v2741, 2
      %v2743 = vmax.f32 %v2741, %v2742
      %v2744 = vrot.slane %v2743, 1
      %v2745 = vmax.f32 %v2743, %v2744
      %v2746 = vmax.f32 %v2714, %v2720
      %v2747 = vrot.slane %v2746, 4
      %v2748 = vmax.f32 %v2746, %v2747
      %v2749 = vrot.slane %v2748, 2
      %v2750 = vmax.f32 %v2748, %v2749
      %v2751 = vrot.slane %v2750, 1
      %v2752 = vmax.f32 %v2750, %v2751
      %v2753 = vmax.f32 %v2716, %v2722
      %v2754 = vrot.slane %v2753, 4
      %v2755 = vmax.f32 %v2753, %v2754
      %v2756 = vrot.slane %v2755, 2
      %v2757 = vmax.f32 %v2755, %v2756
      %v2758 = vrot.slane %v2757, 1
      %v2759 = vmax.f32 %v2757, %v2758
      %v2760 = vmax.f32 %v2718, %v2724
      %v2761 = vrot.slane %v2760, 4
      %v2762 = vmax.f32 %v2760, %v2761
      %v2763 = vrot.slane %v2762, 2
      %v2764 = vmax.f32 %v2762, %v2763
      %v2765 = vrot.slane %v2764, 1
      %v2766 = vmax.f32 %v2764, %v2765
      %v2767 = vlaneseq
      %v2768 = vshrl.u32 %v2767, 7
      %v2769 = vadd.s32 %v2768, 8
      %vm2770 = vcmp.ge.f32.partialorder %v2702, %v2731
      %vm2771 = vcmp.ge.f32.partialorder %v2704, %v2738
      %vm2772 = vcmp.ge.f32.partialorder %v2706, %v2745
      %vm2773 = vcmp.ge.f32.partialorder %v2708, %v2731
      %vm2774 = vcmp.ge.f32.partialorder %v2710, %v2738
      %vm2775 = vcmp.ge.f32.partialorder %v2712, %v2745
      %vm2776 = vcmp.ge.f32.partialorder %v2714, %v2752
      %vm2777 = vcmp.ge.f32.partialorder %v2716, %v2759
      %vm2778 = vcmp.ge.f32.partialorder %v2718, %v2766
      %vm2779 = vcmp.ge.f32.partialorder %v2720, %v2752
      %vm2780 = vcmp.ge.f32.partialorder %v2722, %v2759
      %vm2781 = vcmp.ge.f32.partialorder %v2724, %v2766
      %v2782 = vsel %vm2770, %v2768, 16
      %v2783 = vsel %vm2771, %v2768, 16
      %v2784 = vsel %vm2772, %v2768, 16
      %v2785 = vsel %vm2773, %v2769, 16
      %v2786 = vsel %vm2774, %v2769, 16
      %v2787 = vsel %vm2775, %v2769, 16
      %v2788 = vsel %vm2776, %v2768, 16
      %v2789 = vsel %vm2777, %v2768, 16
      %v2790 = vsel %vm2778, %v2768, 16
      %v2791 = vsel %vm2779, %v2769, 16
      %v2792 = vsel %vm2780, %v2769, 16
      %v2793 = vsel %vm2781, %v2769, 16
      %vm2794 = vcmp.lt.s32.totalorder %v2782, %v2785
      %v2795 = vsel %vm2794, %v2782, %v2785
      %v2796 = vrot.slane %v2795, 4
      %vm2797 = vcmp.lt.s32.totalorder %v2795, %v2796
      %v2798 = vsel %vm2797, %v2795, %v2796
      %v2799 = vrot.slane %v2798, 2
      %vm2800 = vcmp.lt.s32.totalorder %v2798, %v2799
      %v2801 = vsel %vm2800, %v2798, %v2799
      %v2802 = vrot.slane %v2801, 1
      %vm2803 = vcmp.lt.s32.totalorder %v2801, %v2802
      %v2804 = vsel %vm2803, %v2801, %v2802
      %vm2805 = vcmp.lt.s32.totalorder %v2783, %v2786
      %v2806 = vsel %vm2805, %v2783, %v2786
      %v2807 = vrot.slane %v2806, 4
      %vm2808 = vcmp.lt.s32.totalorder %v2806, %v2807
      %v2809 = vsel %vm2808, %v2806, %v2807
      %v2810 = vrot.slane %v2809, 2
      %vm2811 = vcmp.lt.s32.totalorder %v2809, %v2810
      %v2812 = vsel %vm2811, %v2809, %v2810
      %v2813 = vrot.slane %v2812, 1
      %vm2814 = vcmp.lt.s32.totalorder %v2812, %v2813
      %v2815 = vsel %vm2814, %v2812, %v2813
      %vm2816 = vcmp.lt.s32.totalorder %v2784, %v2787
      %v2817 = vsel %vm2816, %v2784, %v2787
      %v2818 = vrot.slane %v2817, 4
      %vm2819 = vcmp.lt.s32.totalorder %v2817, %v2818
      %v2820 = vsel %vm2819, %v2817, %v2818
      %v2821 = vrot.slane %v2820, 2
      %vm2822 = vcmp.lt.s32.totalorder %v2820, %v2821
      %v2823 = vsel %vm2822, %v2820, %v2821
      %v2824 = vrot.slane %v2823, 1
      %vm2825 = vcmp.lt.s32.totalorder %v2823, %v2824
      %v2826 = vsel %vm2825, %v2823, %v2824
      %vm2827 = vcmp.lt.s32.totalorder %v2788, %v2791
      %v2828 = vsel %vm2827, %v2788, %v2791
      %v2829 = vrot.slane %v2828, 4
      %vm2830 = vcmp.lt.s32.totalorder %v2828, %v2829
      %v2831 = vsel %vm2830, %v2828, %v2829
      %v2832 = vrot.slane %v2831, 2
      %vm2833 = vcmp.lt.s32.totalorder %v2831, %v2832
      %v2834 = vsel %vm2833, %v2831, %v2832
      %v2835 = vrot.slane %v2834, 1
      %vm2836 = vcmp.lt.s32.totalorder %v2834, %v2835
      %v2837 = vsel %vm2836, %v2834, %v2835
      %vm2838 = vcmp.lt.s32.totalorder %v2789, %v2792
      %v2839 = vsel %vm2838, %v2789, %v2792
      %v2840 = vrot.slane %v2839, 4
      %vm2841 = vcmp.lt.s32.totalorder %v2839, %v2840
      %v2842 = vsel %vm2841, %v2839, %v2840
      %v2843 = vrot.slane %v2842, 2
      %vm2844 = vcmp.lt.s32.totalorder %v2842, %v2843
      %v2845 = vsel %vm2844, %v2842, %v2843
      %v2846 = vrot.slane %v2845, 1
      %vm2847 = vcmp.lt.s32.totalorder %v2845, %v2846
      %v2848 = vsel %vm2847, %v2845, %v2846
      %vm2849 = vcmp.lt.s32.totalorder %v2790, %v2793
      %v2850 = vsel %vm2849, %v2790, %v2793
      %v2851 = vrot.slane %v2850, 4
      %vm2852 = vcmp.lt.s32.totalorder %v2850, %v2851
      %v2853 = vsel %vm2852, %v2850, %v2851
      %v2854 = vrot.slane %v2853, 2
      %vm2855 = vcmp.lt.s32.totalorder %v2853, %v2854
      %v2856 = vsel %vm2855, %v2853, %v2854
      %v2857 = vrot.slane %v2856, 1
      %vm2858 = vcmp.lt.s32.totalorder %v2856, %v2857
      %v2859 = vsel %vm2858, %v2856, %v2857
      %vm2860 = vcmp.eq.s32.totalorder %v2768, %v2804
      %vm2861 = vcmp.eq.s32.totalorder %v2768, %v2815
      %vm2862 = vcmp.eq.s32.totalorder %v2768, %v2826
      %vm2863 = vcmp.eq.s32.totalorder %v2769, %v2804
      %vm2864 = vcmp.eq.s32.totalorder %v2769, %v2815
      %vm2865 = vcmp.eq.s32.totalorder %v2769, %v2826
      %vm2866 = vcmp.eq.s32.totalorder %v2768, %v2837
      %vm2867 = vcmp.eq.s32.totalorder %v2768, %v2848
      %vm2868 = vcmp.eq.s32.totalorder %v2768, %v2859
      %vm2869 = vcmp.eq.s32.totalorder %v2769, %v2837
      %vm2870 = vcmp.eq.s32.totalorder %v2769, %v2848
      %vm2871 = vcmp.eq.s32.totalorder %v2769, %v2859
      %v2872 = vsel %vm2860, 1, 0
      %v2873 = vsel %vm2861, 1, 0
      %v2874 = vsel %vm2862, 1, 0
      %v2875 = vsel %vm2863, 1, 0
      %v2876 = vsel %vm2864, 1, 0
      %v2877 = vsel %vm2865, 1, 0
      %v2878 = vsel %vm2866, 1, 0
      %v2879 = vsel %vm2867, 1, 0
      %v2880 = vsel %vm2868, 1, 0
      %v2881 = vsel %vm2869, 1, 0
      %v2882 = vsel %vm2870, 1, 0
      %v2883 = vsel %vm2871, 1, 0
      %v2884 = vcvt.s32.f32 %v2872
      %v2885 = vcvt.s32.f32 %v2873
      %v2886 = vcvt.s32.f32 %v2874
      %v2887 = vcvt.s32.f32 %v2875
      %v2888 = vcvt.s32.f32 %v2876
      %v2889 = vcvt.s32.f32 %v2877
      %v2890 = vcvt.s32.f32 %v2878
      %v2891 = vcvt.s32.f32 %v2879
      %v2892 = vcvt.s32.f32 %v2880
      %v2893 = vcvt.s32.f32 %v2881
      %v2894 = vcvt.s32.f32 %v2882
      %v2895 = vcvt.s32.f32 %v2883
      %v2896 = vld [vmem:[#allocation2] sm:$0x3f]
      %v2898 = vcombine.high %v2896, %v2896
      %v2900 = vunpack.c.l.s4 1983009808
      %v2901 = vunpack.c.0.s8 %v2900
      %v2902 = vlaneseq
      %v2903 = vshrl.u32 %v2902, 7
      %v2904 = vsub.s32 %v2901, %v2903
      %v2905 = vrot.slane %v2896, %v2904
      %v2907 = vunpack.c.l.s4 1983009808
      %v2908 = vunpack.c.0.s8 %v2907
      %v2909 = vlaneseq
      %v2910 = vshrl.u32 %v2909, 7
      %v2911 = vsub.s32 %v2908, %v2910
      %v2912 = vrot.slane %v2898, %v2911
      %v2913 = vcombine.high %v2905, %v2905
      %v2914 = vrot.slane %v2905, 1
      %v2915 = vrot.slane %v2913, 1
      %v2916 = vrot.slane %v2912, 1
      %vm2923 = vcmp.gt.f32.partialorder %v2731, %v2905
      %vm2924 = vcmp.gt.f32.partialorder %v2738, %v2913
      %vm2925 = vcmp.gt.f32.partialorder %v2745, %v2912
      %vm2926 = vcmp.gt.f32.partialorder %v2752, %v2914
      %vm2927 = vcmp.gt.f32.partialorder %v2759, %v2915
      %vm2928 = vcmp.gt.f32.partialorder %v2766, %v2916
      %v2929 = vsel %vm2923, %v2731, %v2905
      %v2930 = vsel %vm2924, %v2738, %v2913
      %v2931 = vsel %vm2925, %v2745, %v2912
      %v2932 = vsel %vm2926, %v2752, %v2914
      %v2933 = vsel %vm2927, %v2759, %v2915
      %v2934 = vsel %vm2928, %v2766, %v2916
      %v2941 = vcombine.low %v2929, %v2930
      %v2943 = vunpack.c.l.s4 1983009808
      %v2944 = vunpack.c.0.s8 %v2943
      %v2945 = vlaneseq
      %v2946 = vshrl.u32 %v2945, 7
      %v2947 = vsub.s32 %v2944, %v2946
      %v2948 = vrot.slane %v2941, %v2947
      %v2950 = vunpack.c.l.s4 1983009808
      %v2951 = vunpack.c.0.s8 %v2950
      %v2952 = vlaneseq
      %v2953 = vshrl.u32 %v2952, 7
      %v2954 = vsub.s32 %v2951, %v2953
      %v2955 = vrot.slane %v2931, %v2954
      %v2956 = vcombine.low %v2948, %v2955
      %v2957 = vcombine.low %v2932, %v2933
      %v2959 = vunpack.c.l.s4 1983009808
      %v2960 = vunpack.c.0.s8 %v2959
      %v2961 = vlaneseq
      %v2962 = vshrl.u32 %v2961, 7
      %v2963 = vsub.s32 %v2960, %v2962
      %v2964 = vrot.slane %v2957, %v2963
      %v2966 = vunpack.c.l.s4 1983009808
      %v2967 = vunpack.c.0.s8 %v2966
      %v2968 = vlaneseq
      %v2969 = vshrl.u32 %v2968, 7
      %v2970 = vsub.s32 %v2967, %v2969
      %v2971 = vrot.slane %v2934, %v2970
      %v2972 = vcombine.low %v2964, %v2971
      %vm2973 = vcmask 1044484
      %v2974 = vsel %vm2973, %v2956, %v2956
      %vm2975 = vcmask 1046534
      %v2976 = vsel %vm2975, %v2956, %v2974
      %v2977 = vrot.slane %v2972, 7
      %vm2978 = vcmask 1041409
      %v2979 = vsel %vm2978, %v2977, %v2976
      %vm2980 = vcmask 1043459
      %v2981 = vsel %vm2980, %v2977, %v2979
      %vm2982 = vcmask 1045509
      %v2983 = vsel %vm2982, %v2977, %v2981
      %vm2984 = vcmask 1047559
      %v2985 = vsel %vm2984, %v2977, %v2983
      %2987 = vst [vmem:[#allocation2] sm:$0x3f] %v2985
      %v2988 = vmul.f32 %v1783, %v2884
      %v2989 = vmul.f32 %v1784, %v2885
      %v2990 = vmul.f32 %v1785, %v2886
      %v2991 = vmul.f32 %v1786, %v2887
      %v2992 = vmul.f32 %v1787, %v2888
      %v2993 = vmul.f32 %v1788, %v2889
      %v2994 = vmul.f32 %v1801, %v2890
      %v2995 = vmul.f32 %v1802, %v2891
      %v2996 = vmul.f32 %v1803, %v2892
      %v2997 = vmul.f32 %v1804, %v2893
      %v2998 = vmul.f32 %v1805, %v2894
      %v2999 = vmul.f32 %v1806, %v2895
      %v3000 = vadd.f32 %v2988, %v2991
      %v3001 = vrot.slane %v3000, 4
      %v3002 = vadd.f32 %v3000, %v3001
      %v3003 = vrot.slane %v3002, 2
      %v3004 = vadd.f32 %v3002, %v3003
      %v3005 = vrot.slane %v3004, 1
      %v3006 = vadd.f32 %v3004, %v3005
      %v3007 = vadd.f32 %v2989, %v2992
      %v3008 = vrot.slane %v3007, 4
      %v3009 = vadd.f32 %v3007, %v3008
      %v3010 = vrot.slane %v3009, 2
      %v3011 = vadd.f32 %v3009, %v3010
      %v3012 = vrot.slane %v3011, 1
      %v3013 = vadd.f32 %v3011, %v3012
      %v3014 = vadd.f32 %v2990, %v2993
      %v3015 = vrot.slane %v3014, 4
      %v3016 = vadd.f32 %v3014, %v3015
      %v3017 = vrot.slane %v3016, 2
      %v3018 = vadd.f32 %v3016, %v3017
      %v3019 = vrot.slane %v3018, 1
      %v3020 = vadd.f32 %v3018, %v3019
      %v3021 = vadd.f32 %v2994, %v2997
      %v3022 = vrot.slane %v3021, 4
      %v3023 = vadd.f32 %v3021, %v3022
      %v3024 = vrot.slane %v3023, 2
      %v3025 = vadd.f32 %v3023, %v3024
      %v3026 = vrot.slane %v3025, 1
      %v3027 = vadd.f32 %v3025, %v3026
      %v3028 = vadd.f32 %v2995, %v2998
      %v3029 = vrot.slane %v3028, 4
      %v3030 = vadd.f32 %v3028, %v3029
      %v3031 = vrot.slane %v3030, 2
      %v3032 = vadd.f32 %v3030, %v3031
      %v3033 = vrot.slane %v3032, 1
      %v3034 = vadd.f32 %v3032, %v3033
      %v3035 = vadd.f32 %v2996, %v2999
      %v3036 = vrot.slane %v3035, 4
      %v3037 = vadd.f32 %v3035, %v3036
      %v3038 = vrot.slane %v3037, 2
      %v3039 = vadd.f32 %v3037, %v3038
      %v3040 = vrot.slane %v3039, 1
      %v3041 = vadd.f32 %v3039, %v3040
      %v3042 = vld [vmem:[#allocation3] sm:$0x3f]
      %v3044 = vcombine.high %v3042, %v3042
      %v3046 = vunpack.c.l.s4 1983009808
      %v3047 = vunpack.c.0.s8 %v3046
      %v3048 = vlaneseq
      %v3049 = vshrl.u32 %v3048, 7
      %v3050 = vsub.s32 %v3047, %v3049
      %v3051 = vrot.slane %v3042, %v3050
      %v3053 = vunpack.c.l.s4 1983009808
      %v3054 = vunpack.c.0.s8 %v3053
      %v3055 = vlaneseq
      %v3056 = vshrl.u32 %v3055, 7
      %v3057 = vsub.s32 %v3054, %v3056
      %v3058 = vrot.slane %v3044, %v3057
      %v3059 = vcombine.high %v3051, %v3051
      %v3060 = vrot.slane %v3051, 1
      %v3061 = vrot.slane %v3059, 1
      %v3062 = vrot.slane %v3058, 1
      %v3069 = vsel %vm2923, %v3006, %v3051
      %v3070 = vsel %vm2924, %v3013, %v3059
      %v3071 = vsel %vm2925, %v3020, %v3058
      %v3072 = vsel %vm2926, %v3027, %v3060
      %v3073 = vsel %vm2927, %v3034, %v3061
      %v3074 = vsel %vm2928, %v3041, %v3062
      %v3081 = vcombine.low %v3069, %v3070
      %v3083 = vunpack.c.l.s4 1983009808
      %v3084 = vunpack.c.0.s8 %v3083
      %v3085 = vlaneseq
      %v3086 = vshrl.u32 %v3085, 7
      %v3087 = vsub.s32 %v3084, %v3086
      %v3088 = vrot.slane %v3081, %v3087
      %v3090 = vunpack.c.l.s4 1983009808
      %v3091 = vunpack.c.0.s8 %v3090
      %v3092 = vlaneseq
      %v3093 = vshrl.u32 %v3092, 7
      %v3094 = vsub.s32 %v3091, %v3093
      %v3095 = vrot.slane %v3071, %v3094
      %v3096 = vcombine.low %v3088, %v3095
      %v3097 = vcombine.low %v3072, %v3073
      %v3099 = vunpack.c.l.s4 1983009808
      %v3100 = vunpack.c.0.s8 %v3099
      %v3101 = vlaneseq
      %v3102 = vshrl.u32 %v3101, 7
      %v3103 = vsub.s32 %v3100, %v3102
      %v3104 = vrot.slane %v3097, %v3103
      %v3106 = vunpack.c.l.s4 1983009808
      %v3107 = vunpack.c.0.s8 %v3106
      %v3108 = vlaneseq
      %v3109 = vshrl.u32 %v3108, 7
      %v3110 = vsub.s32 %v3107, %v3109
      %v3111 = vrot.slane %v3074, %v3110
      %v3112 = vcombine.low %v3104, %v3111
      %v3113 = vsel %vm2973, %v3096, %v3096
      %v3114 = vsel %vm2975, %v3096, %v3113
      %v3115 = vrot.slane %v3112, 7
      %v3116 = vsel %vm2978, %v3115, %v3114
      %v3117 = vsel %vm2980, %v3115, %v3116
      %v3118 = vsel %vm2982, %v3115, %v3117
      %v3119 = vsel %vm2984, %v3115, %v3118
      %3121 = vst [vmem:[#allocation3] sm:$0x3f] %v3119
      %v3122 = vmul.f32 %v1789, %v2884
      %v3123 = vmul.f32 %v1790, %v2885
      %v3124 = vmul.f32 %v1791, %v2886
      %v3125 = vmul.f32 %v1792, %v2887
      %v3126 = vmul.f32 %v1793, %v2888
      %v3127 = vmul.f32 %v1794, %v2889
      %v3128 = vmul.f32 %v1807, %v2890
      %v3129 = vmul.f32 %v1808, %v2891
      %v3130 = vmul.f32 %v1809, %v2892
      %v3131 = vmul.f32 %v1810, %v2893
      %v3132 = vmul.f32 %v1811, %v2894
      %v3133 = vmul.f32 %v1812, %v2895
      %v3134 = vadd.f32 %v3122, %v3125
      %v3135 = vrot.slane %v3134, 4
      %v3136 = vadd.f32 %v3134, %v3135
      %v3137 = vrot.slane %v3136, 2
      %v3138 = vadd.f32 %v3136, %v3137
      %v3139 = vrot.slane %v3138, 1
      %v3140 = vadd.f32 %v3138, %v3139
      %v3141 = vadd.f32 %v3123, %v3126
      %v3142 = vrot.slane %v3141, 4
      %v3143 = vadd.f32 %v3141, %v3142
      %v3144 = vrot.slane %v3143, 2
      %v3145 = vadd.f32 %v3143, %v3144
      %v3146 = vrot.slane %v3145, 1
      %v3147 = vadd.f32 %v3145, %v3146
      %v3148 = vadd.f32 %v3124, %v3127
      %v3149 = vrot.slane %v3148, 4
      %v3150 = vadd.f32 %v3148, %v3149
      %v3151 = vrot.slane %v3150, 2
      %v3152 = vadd.f32 %v3150, %v3151
      %v3153 = vrot.slane %v3152, 1
      %v3154 = vadd.f32 %v3152, %v3153
      %v3155 = vadd.f32 %v3128, %v3131
      %v3156 = vrot.slane %v3155, 4
      %v3157 = vadd.f32 %v3155, %v3156
      %v3158 = vrot.slane %v3157, 2
      %v3159 = vadd.f32 %v3157, %v3158
      %v3160 = vrot.slane %v3159, 1
      %v3161 = vadd.f32 %v3159, %v3160
      %v3162 = vadd.f32 %v3129, %v3132
      %v3163 = vrot.slane %v3162, 4
      %v3164 = vadd.f32 %v3162, %v3163
      %v3165 = vrot.slane %v3164, 2
      %v3166 = vadd.f32 %v3164, %v3165
      %v3167 = vrot.slane %v3166, 1
      %v3168 = vadd.f32 %v3166, %v3167
      %v3169 = vadd.f32 %v3130, %v3133
      %v3170 = vrot.slane %v3169, 4
      %v3171 = vadd.f32 %v3169, %v3170
      %v3172 = vrot.slane %v3171, 2
      %v3173 = vadd.f32 %v3171, %v3172
      %v3174 = vrot.slane %v3173, 1
      %v3175 = vadd.f32 %v3173, %v3174
      %s3176 = scalar_lea.vmem [#allocation3], 6
      %v3177 = vld [vmem:[%s3176] sm:$0x3f]
      %v3179 = vcombine.high %v3177, %v3177
      %v3181 = vunpack.c.l.s4 1983009808
      %v3182 = vunpack.c.0.s8 %v3181
      %v3183 = vlaneseq
      %v3184 = vshrl.u32 %v3183, 7
      %v3185 = vsub.s32 %v3182, %v3184
      %v3186 = vrot.slane %v3177, %v3185
      %v3188 = vunpack.c.l.s4 1983009808
      %v3189 = vunpack.c.0.s8 %v3188
      %v3190 = vlaneseq
      %v3191 = vshrl.u32 %v3190, 7
      %v3192 = vsub.s32 %v3189, %v3191
      %v3193 = vrot.slane %v3179, %v3192
      %v3194 = vcombine.high %v3186, %v3186
      %v3195 = vrot.slane %v3186, 1
      %v3196 = vrot.slane %v3194, 1
      %v3197 = vrot.slane %v3193, 1
      %v3204 = vsel %vm2923, %v3140, %v3186
      %v3205 = vsel %vm2924, %v3147, %v3194
      %v3206 = vsel %vm2925, %v3154, %v3193
      %v3207 = vsel %vm2926, %v3161, %v3195
      %v3208 = vsel %vm2927, %v3168, %v3196
      %v3209 = vsel %vm2928, %v3175, %v3197
      %v3216 = vcombine.low %v3204, %v3205
      %v3218 = vunpack.c.l.s4 1983009808
      %v3219 = vunpack.c.0.s8 %v3218
      %v3220 = vlaneseq
      %v3221 = vshrl.u32 %v3220, 7
      %v3222 = vsub.s32 %v3219, %v3221
      %v3223 = vrot.slane %v3216, %v3222
      %v3225 = vunpack.c.l.s4 1983009808
      %v3226 = vunpack.c.0.s8 %v3225
      %v3227 = vlaneseq
      %v3228 = vshrl.u32 %v3227, 7
      %v3229 = vsub.s32 %v3226, %v3228
      %v3230 = vrot.slane %v3206, %v3229
      %v3231 = vcombine.low %v3223, %v3230
      %v3232 = vcombine.low %v3207, %v3208
      %v3234 = vunpack.c.l.s4 1983009808
      %v3235 = vunpack.c.0.s8 %v3234
      %v3236 = vlaneseq
      %v3237 = vshrl.u32 %v3236, 7
      %v3238 = vsub.s32 %v3235, %v3237
      %v3239 = vrot.slane %v3232, %v3238
      %v3241 = vunpack.c.l.s4 1983009808
      %v3242 = vunpack.c.0.s8 %v3241
      %v3243 = vlaneseq
      %v3244 = vshrl.u32 %v3243, 7
      %v3245 = vsub.s32 %v3242, %v3244
      %v3246 = vrot.slane %v3209, %v3245
      %v3247 = vcombine.low %v3239, %v3246
      %v3248 = vsel %vm2973, %v3231, %v3231
      %v3249 = vsel %vm2975, %v3231, %v3248
      %v3250 = vrot.slane %v3247, 7
      %v3251 = vsel %vm2978, %v3250, %v3249
      %v3252 = vsel %vm2980, %v3250, %v3251
      %v3253 = vsel %vm2982, %v3250, %v3252
      %v3254 = vsel %vm2984, %v3250, %v3253
      %3256 = vst [vmem:[%s3176] sm:$0x3f] %v3254
      %v3257 = vmul.f32 %v1795, %v2884
      %v3258 = vmul.f32 %v1796, %v2885
      %v3259 = vmul.f32 %v1797, %v2886
      %v3260 = vmul.f32 %v1798, %v2887
      %v3261 = vmul.f32 %v1799, %v2888
      %v3262 = vmul.f32 %v1800, %v2889
      %v3263 = vmul.f32 %v1813, %v2890
      %v3264 = vmul.f32 %v1814, %v2891
      %v3265 = vmul.f32 %v1815, %v2892
      %v3266 = vmul.f32 %v1816, %v2893
      %v3267 = vmul.f32 %v1817, %v2894
      %v3268 = vmul.f32 %v1818, %v2895
      %v3269 = vadd.f32 %v3257, %v3260
      %v3270 = vrot.slane %v3269, 4
      %v3271 = vadd.f32 %v3269, %v3270
      %v3272 = vrot.slane %v3271, 2
      %v3273 = vadd.f32 %v3271, %v3272
      %v3274 = vrot.slane %v3273, 1
      %v3275 = vadd.f32 %v3273, %v3274
      %v3276 = vadd.f32 %v3258, %v3261
      %v3277 = vrot.slane %v3276, 4
      %v3278 = vadd.f32 %v3276, %v3277
      %v3279 = vrot.slane %v3278, 2
      %v3280 = vadd.f32 %v3278, %v3279
      %v3281 = vrot.slane %v3280, 1
      %v3282 = vadd.f32 %v3280, %v3281
      %v3283 = vadd.f32 %v3259, %v3262
      %v3284 = vrot.slane %v3283, 4
      %v3285 = vadd.f32 %v3283, %v3284
      %v3286 = vrot.slane %v3285, 2
      %v3287 = vadd.f32 %v3285, %v3286
      %v3288 = vrot.slane %v3287, 1
      %v3289 = vadd.f32 %v3287, %v3288
      %v3290 = vadd.f32 %v3263, %v3266
      %v3291 = vrot.slane %v3290, 4
      %v3292 = vadd.f32 %v3290, %v3291
      %v3293 = vrot.slane %v3292, 2
      %v3294 = vadd.f32 %v3292, %v3293
      %v3295 = vrot.slane %v3294, 1
      %v3296 = vadd.f32 %v3294, %v3295
      %v3297 = vadd.f32 %v3264, %v3267
      %v3298 = vrot.slane %v3297, 4
      %v3299 = vadd.f32 %v3297, %v3298
      %v3300 = vrot.slane %v3299, 2
      %v3301 = vadd.f32 %v3299, %v3300
      %v3302 = vrot.slane %v3301, 1
      %v3303 = vadd.f32 %v3301, %v3302
      %v3304 = vadd.f32 %v3265, %v3268
      %v3305 = vrot.slane %v3304, 4
      %v3306 = vadd.f32 %v3304, %v3305
      %v3307 = vrot.slane %v3306, 2
      %v3308 = vadd.f32 %v3306, %v3307
      %v3309 = vrot.slane %v3308, 1
      %v3310 = vadd.f32 %v3308, %v3309
      %s3311 = scalar_lea.vmem [#allocation3], 12
      %v3312 = vld [vmem:[%s3311] sm:$0x3f]
      %v3314 = vcombine.high %v3312, %v3312
      %v3316 = vunpack.c.l.s4 1983009808
      %v3317 = vunpack.c.0.s8 %v3316
      %v3318 = vlaneseq
      %v3319 = vshrl.u32 %v3318, 7
      %v3320 = vsub.s32 %v3317, %v3319
      %v3321 = vrot.slane %v3312, %v3320
      %v3323 = vunpack.c.l.s4 1983009808
      %v3324 = vunpack.c.0.s8 %v3323
      %v3325 = vlaneseq
      %v3326 = vshrl.u32 %v3325, 7
      %v3327 = vsub.s32 %v3324, %v3326
      %v3328 = vrot.slane %v3314, %v3327
      %v3329 = vcombine.high %v3321, %v3321
      %v3330 = vrot.slane %v3321, 1
      %v3331 = vrot.slane %v3329, 1
      %v3332 = vrot.slane %v3328, 1
      %v3339 = vsel %vm2923, %v3275, %v3321
      %v3340 = vsel %vm2924, %v3282, %v3329
      %v3341 = vsel %vm2925, %v3289, %v3328
      %v3342 = vsel %vm2926, %v3296, %v3330
      %v3343 = vsel %vm2927, %v3303, %v3331
      %v3344 = vsel %vm2928, %v3310, %v3332
      %v3351 = vcombine.low %v3339, %v3340
      %v3353 = vunpack.c.l.s4 1983009808
      %v3354 = vunpack.c.0.s8 %v3353
      %v3355 = vlaneseq
      %v3356 = vshrl.u32 %v3355, 7
      %v3357 = vsub.s32 %v3354, %v3356
      %v3358 = vrot.slane %v3351, %v3357
      %v3360 = vunpack.c.l.s4 1983009808
      %v3361 = vunpack.c.0.s8 %v3360
      %v3362 = vlaneseq
      %v3363 = vshrl.u32 %v3362, 7
      %v3364 = vsub.s32 %v3361, %v3363
      %v3365 = vrot.slane %v3341, %v3364
      %v3366 = vcombine.low %v3358, %v3365
      %v3367 = vcombine.low %v3342, %v3343
      %v3369 = vunpack.c.l.s4 1983009808
      %v3370 = vunpack.c.0.s8 %v3369
      %v3371 = vlaneseq
      %v3372 = vshrl.u32 %v3371, 7
      %v3373 = vsub.s32 %v3370, %v3372
      %v3374 = vrot.slane %v3367, %v3373
      %v3376 = vunpack.c.l.s4 1983009808
      %v3377 = vunpack.c.0.s8 %v3376
      %v3378 = vlaneseq
      %v3379 = vshrl.u32 %v3378, 7
      %v3380 = vsub.s32 %v3377, %v3379
      %v3381 = vrot.slane %v3344, %v3380
      %v3382 = vcombine.low %v3374, %v3381
      %v3383 = vsel %vm2973, %v3366, %v3366
      %v3384 = vsel %vm2975, %v3366, %v3383
      %v3385 = vrot.slane %v3382, 7
      %v3386 = vsel %vm2978, %v3385, %v3384
      %v3387 = vsel %vm2980, %v3385, %v3386
      %v3388 = vsel %vm2982, %v3385, %v3387
      %v3389 = vsel %vm2984, %v3385, %v3388
      %3391 = vst [vmem:[%s3311] sm:$0x3f] %v3389
      // Predicated region
      $region57: #{stnkd_forward.1} parent=51 // pred_check
        %p3392 = pneg %p341
      $region58: #{stnkd_forward.1} parent=51 // pred_check_branch
        %3394 = sbr.rel (%p3392) target = $region60
      $region59: #{stnkd_forward.1} parent=51 // pred_region
        %v3395 = vld [vmem:[#allocation3] sm:$0x3f]
        %v3396 = vld [vmem:[%s3176] sm:$0x3f]
        %v3397 = vld [vmem:[%s3311] sm:$0x3f]
        %v3399 = vcombine.high %v3395, %v3395
        %v3401 = vunpack.c.l.s4 1983009808
        %v3402 = vunpack.c.0.s8 %v3401
        %v3403 = vlaneseq
        %v3404 = vshrl.u32 %v3403, 7
        %v3405 = vsub.s32 %v3402, %v3404
        %v3406 = vrot.slane %v3395, %v3405
        %v3408 = vunpack.c.l.s4 1983009808
        %v3409 = vunpack.c.0.s8 %v3408
        %v3410 = vlaneseq
        %v3411 = vshrl.u32 %v3410, 7
        %v3412 = vsub.s32 %v3409, %v3411
        %v3413 = vrot.slane %v3399, %v3412
        %v3414 = vcombine.high %v3406, %v3406
        %v3419 = vcombine.low %v3396, %v3396
        %v3421 = vunpack.c.l.s4 1983009808
        %v3422 = vunpack.c.0.s8 %v3421
        %v3423 = vlaneseq
        %v3424 = vshrl.u32 %v3423, 7
        %v3425 = vsub.s32 %v3422, %v3424
        %v3426 = vrot.slane %v3419, %v3425
        %v3428 = vunpack.c.l.s4 1983009808
        %v3429 = vunpack.c.0.s8 %v3428
        %v3430 = vlaneseq
        %v3431 = vshrl.u32 %v3430, 7
        %v3432 = vsub.s32 %v3429, %v3431
        %v3433 = vrot.slane %v3396, %v3432
        %v3434 = vcombine.high %v3426, %v3426
        %v3439 = vcombine.high %v3397, %v3397
        %v3441 = vunpack.c.l.s4 1983009808
        %v3442 = vunpack.c.0.s8 %v3441
        %v3443 = vlaneseq
        %v3444 = vshrl.u32 %v3443, 7
        %v3445 = vsub.s32 %v3442, %v3444
        %v3446 = vrot.slane %v3397, %v3445
        %v3448 = vunpack.c.l.s4 1983009808
        %v3449 = vunpack.c.0.s8 %v3448
        %v3450 = vlaneseq
        %v3451 = vshrl.u32 %v3450, 7
        %v3452 = vsub.s32 %v3449, %v3451
        %v3453 = vrot.slane %v3439, %v3452
        %v3454 = vcombine.low %v3446, %v3446
        %v3455 = vcombine.low %v3453, %v3453
        %vm3459 = vcmask 1041408
        %v3460 = vsel %vm3459, %v3406, %v3426
        %v3461 = vsel %vm3459, %v3414, %v3434
        %v3462 = vsel %vm3459, %v3413, %v3433
        %vm3463 = vcmask 1043456
        %v3464 = vsel %vm3463, %v3460, %v3454
        %v3465 = vsel %vm3463, %v3461, %v3446
        %v3466 = vsel %vm3463, %v3462, %v3455
        %v3467 = vpack.c.bf16 %v3464, %v3464
        %v3468 = vpack.c.bf16 %v3465, %v3465
        %v3469 = vpack.c.bf16 %v3466, %v3466
        %v3470 = vld [vmem:[%s5] sm:$0xff]
        %v3471 = vld [vmem:[%s5 + $0x8] sm:$0xff]
        %v3472 = vld [vmem:[%s5 + $0x10] sm:$0xff]
        %v3473 = vld [vmem:[%s5 + $0x18] sm:$0xff]
        %v3474 = vld [vmem:[%s5 + $0x20] sm:$0xff]
        %v3475 = vld [vmem:[%s5 + $0x28] sm:$0xff]
        %v3476 = vld [vmem:[%s5 + $0x30] sm:$0xff]
        %v3477 = vld [vmem:[%s5 + $0x38] sm:$0xff]
        %v3478 = vld [vmem:[%s5 + $0x40] sm:$0xff]
        %v3479 = vld [vmem:[%s5 + $0x48] sm:$0xff]
        %v3480 = vld [vmem:[%s5 + $0x50] sm:$0xff]
        %v3481 = vld [vmem:[%s5 + $0x58] sm:$0xff]
        %v3482 = vld [vmem:[%s5 + $0x60] sm:$0xff]
        %v3483 = vld [vmem:[%s5 + $0x68] sm:$0xff]
        %v3484 = vld [vmem:[%s5 + $0x70] sm:$0xff]
        %v3485 = vld [vmem:[%s5 + $0x78] sm:$0xff]
        %v3486 = vld [vmem:[%s5 + $0x80] sm:$0xff]
        %v3487 = vld [vmem:[%s5 + $0x88] sm:$0xff]
        %v3488 = vld [vmem:[%s5 + $0x90] sm:$0xff]
        %v3489 = vld [vmem:[%s5 + $0x98] sm:$0xff]
        %v3490 = vld [vmem:[%s5 + $0xa0] sm:$0xff]
        %v3491 = vld [vmem:[%s5 + $0xa8] sm:$0xff]
        %v3492 = vld [vmem:[%s5 + $0xb0] sm:$0xff]
        %v3493 = vld [vmem:[%s5 + $0xb8] sm:$0xff]
        %v3494 = vld [vmem:[%s5 + $0xc0] sm:$0xff]
        %v3495 = vld [vmem:[%s5 + $0xc8] sm:$0xff]
        %v3496 = vld [vmem:[%s5 + $0xd0] sm:$0xff]
        %v3497 = vld [vmem:[%s5 + $0xd8] sm:$0xff]
        %v3498 = vld [vmem:[%s5 + $0xe0] sm:$0xff]
        %v3499 = vld [vmem:[%s5 + $0xe8] sm:$0xff]
        %v3500 = vld [vmem:[%s5 + $0xf0] sm:$0xff]
        %v3501 = vld [vmem:[%s5 + $0xf8] sm:$0xff]
        %v3502 = vld [vmem:[%s5 + $0x100] sm:$0xff]
        %v3503 = vld [vmem:[%s5 + $0x108] sm:$0xff]
        %v3504 = vld [vmem:[%s5 + $0x110] sm:$0xff]
        %v3505 = vld [vmem:[%s5 + $0x118] sm:$0xff]
        %v3506 = vld [vmem:[%s5 + $0x120] sm:$0xff]
        %v3507 = vld [vmem:[%s5 + $0x128] sm:$0xff]
        %v3508 = vld [vmem:[%s5 + $0x130] sm:$0xff]
        %v3509 = vld [vmem:[%s5 + $0x138] sm:$0xff]
        %v3510 = vld [vmem:[%s5 + $0x140] sm:$0xff]
        %v3511 = vld [vmem:[%s5 + $0x148] sm:$0xff]
        %v3512 = vld [vmem:[%s5 + $0x150] sm:$0xff]
        %v3513 = vld [vmem:[%s5 + $0x158] sm:$0xff]
        %v3514 = vld [vmem:[%s5 + $0x160] sm:$0xff]
        %v3515 = vld [vmem:[%s5 + $0x168] sm:$0xff]
        %v3516 = vld [vmem:[%s5 + $0x170] sm:$0xff]
        %v3517 = vld [vmem:[%s5 + $0x178] sm:$0xff]
        %v3518 = vld [vmem:[%s5 + $0x180] sm:$0xff]
        %v3519 = vld [vmem:[%s5 + $0x188] sm:$0xff]
        %v3520 = vld [vmem:[%s5 + $0x190] sm:$0xff]
        %v3521 = vld [vmem:[%s5 + $0x198] sm:$0xff]
        %v3522 = vld [vmem:[%s5 + $0x1a0] sm:$0xff]
        %v3523 = vld [vmem:[%s5 + $0x1a8] sm:$0xff]
        %v3524 = vld [vmem:[%s5 + $0x1b0] sm:$0xff]
        %v3525 = vld [vmem:[%s5 + $0x1b8] sm:$0xff]
        %v3526 = vld [vmem:[%s5 + $0x1c0] sm:$0xff]
        %v3527 = vld [vmem:[%s5 + $0x1c8] sm:$0xff]
        %v3528 = vld [vmem:[%s5 + $0x1d0] sm:$0xff]
        %v3529 = vld [vmem:[%s5 + $0x1d8] sm:$0xff]
        %v3530 = vld [vmem:[%s5 + $0x1e0] sm:$0xff]
        %v3531 = vld [vmem:[%s5 + $0x1e8] sm:$0xff]
        %v3532 = vld [vmem:[%s5 + $0x1f0] sm:$0xff]
        %v3533 = vld [vmem:[%s5 + $0x1f8] sm:$0xff]
        %v3534 = vld [vmem:[%s5 + $0x200] sm:$0xff]
        %v3535 = vld [vmem:[%s5 + $0x208] sm:$0xff]
        %v3536 = vld [vmem:[%s5 + $0x210] sm:$0xff]
        %v3537 = vld [vmem:[%s5 + $0x218] sm:$0xff]
        %v3538 = vld [vmem:[%s5 + $0x220] sm:$0xff]
        %v3539 = vld [vmem:[%s5 + $0x228] sm:$0xff]
        %v3540 = vld [vmem:[%s5 + $0x230] sm:$0xff]
        %v3541 = vld [vmem:[%s5 + $0x238] sm:$0xff]
        %v3542 = vld [vmem:[%s5 + $0x240] sm:$0xff]
        %v3543 = vld [vmem:[%s5 + $0x248] sm:$0xff]
        %v3544 = vld [vmem:[%s5 + $0x250] sm:$0xff]
        %v3545 = vld [vmem:[%s5 + $0x258] sm:$0xff]
        %v3546 = vld [vmem:[%s5 + $0x260] sm:$0xff]
        %v3547 = vld [vmem:[%s5 + $0x268] sm:$0xff]
        %v3548 = vld [vmem:[%s5 + $0x270] sm:$0xff]
        %v3549 = vld [vmem:[%s5 + $0x278] sm:$0xff]
        %v3550 = vld [vmem:[%s5 + $0x280] sm:$0xff]
        %v3551 = vld [vmem:[%s5 + $0x288] sm:$0xff]
        %v3552 = vld [vmem:[%s5 + $0x290] sm:$0xff]
        %v3553 = vld [vmem:[%s5 + $0x298] sm:$0xff]
        %v3554 = vld [vmem:[%s5 + $0x2a0] sm:$0xff]
        %v3555 = vld [vmem:[%s5 + $0x2a8] sm:$0xff]
        %v3556 = vld [vmem:[%s5 + $0x2b0] sm:$0xff]
        %v3557 = vld [vmem:[%s5 + $0x2b8] sm:$0xff]
        %v3558 = vld [vmem:[%s5 + $0x2c0] sm:$0xff]
        %v3559 = vld [vmem:[%s5 + $0x2c8] sm:$0xff]
        %v3560 = vld [vmem:[%s5 + $0x2d0] sm:$0xff]
        %v3561 = vld [vmem:[%s5 + $0x2d8] sm:$0xff]
        %v3562 = vld [vmem:[%s5 + $0x2e0] sm:$0xff]
        %v3563 = vld [vmem:[%s5 + $0x2e8] sm:$0xff]
        %v3564 = vld [vmem:[%s5 + $0x2f0] sm:$0xff]
        %v3565 = vld [vmem:[%s5 + $0x2f8] sm:$0xff]
        %v3662 = vunpack.c.l.b16 %v3470
        %v3663 = vunpack.c.h.b16 %v3470
        %v3664 = vunpack.c.l.b16 %v3471
        %v3665 = vunpack.c.h.b16 %v3471
        %v3666 = vunpack.c.l.b16 %v3472
        %v3667 = vunpack.c.h.b16 %v3472
        %v3668 = vunpack.c.l.b16 %v3473
        %v3669 = vunpack.c.h.b16 %v3473
        %v3670 = vunpack.c.l.b16 %v3474
        %v3671 = vunpack.c.h.b16 %v3474
        %v3672 = vunpack.c.l.b16 %v3475
        %v3673 = vunpack.c.h.b16 %v3475
        %v3674 = vunpack.c.l.b16 %v3476
        %v3675 = vunpack.c.h.b16 %v3476
        %v3676 = vunpack.c.l.b16 %v3477
        %v3677 = vunpack.c.h.b16 %v3477
        %v3678 = vunpack.c.l.b16 %v3478
        %v3679 = vunpack.c.h.b16 %v3478
        %v3680 = vunpack.c.l.b16 %v3479
        %v3681 = vunpack.c.h.b16 %v3479
        %v3682 = vunpack.c.l.b16 %v3480
        %v3683 = vunpack.c.h.b16 %v3480
        %v3684 = vunpack.c.l.b16 %v3481
        %v3685 = vunpack.c.h.b16 %v3481
        %v3686 = vunpack.c.l.b16 %v3482
        %v3687 = vunpack.c.h.b16 %v3482
        %v3688 = vunpack.c.l.b16 %v3483
        %v3689 = vunpack.c.h.b16 %v3483
        %v3690 = vunpack.c.l.b16 %v3484
        %v3691 = vunpack.c.h.b16 %v3484
        %v3692 = vunpack.c.l.b16 %v3485
        %v3693 = vunpack.c.h.b16 %v3485
        %v3694 = vunpack.c.l.b16 %v3486
        %v3695 = vunpack.c.h.b16 %v3486
        %v3696 = vunpack.c.l.b16 %v3487
        %v3697 = vunpack.c.h.b16 %v3487
        %v3698 = vunpack.c.l.b16 %v3488
        %v3699 = vunpack.c.h.b16 %v3488
        %v3700 = vunpack.c.l.b16 %v3489
        %v3701 = vunpack.c.h.b16 %v3489
        %v3702 = vunpack.c.l.b16 %v3490
        %v3703 = vunpack.c.h.b16 %v3490
        %v3704 = vunpack.c.l.b16 %v3491
        %v3705 = vunpack.c.h.b16 %v3491
        %v3706 = vunpack.c.l.b16 %v3492
        %v3707 = vunpack.c.h.b16 %v3492
        %v3708 = vunpack.c.l.b16 %v3493
        %v3709 = vunpack.c.h.b16 %v3493
        %v3710 = vunpack.c.l.b16 %v3494
        %v3711 = vunpack.c.h.b16 %v3494
        %v3712 = vunpack.c.l.b16 %v3495
        %v3713 = vunpack.c.h.b16 %v3495
        %v3714 = vunpack.c.l.b16 %v3496
        %v3715 = vunpack.c.h.b16 %v3496
        %v3716 = vunpack.c.l.b16 %v3497
        %v3717 = vunpack.c.h.b16 %v3497
        %v3718 = vunpack.c.l.b16 %v3498
        %v3719 = vunpack.c.h.b16 %v3498
        %v3720 = vunpack.c.l.b16 %v3499
        %v3721 = vunpack.c.h.b16 %v3499
        %v3722 = vunpack.c.l.b16 %v3500
        %v3723 = vunpack.c.h.b16 %v3500
        %v3724 = vunpack.c.l.b16 %v3501
        %v3725 = vunpack.c.h.b16 %v3501
        %v3726 = vunpack.c.l.b16 %v3502
        %v3727 = vunpack.c.h.b16 %v3502
        %v3728 = vunpack.c.l.b16 %v3503
        %v3729 = vunpack.c.h.b16 %v3503
        %v3730 = vunpack.c.l.b16 %v3504
        %v3731 = vunpack.c.h.b16 %v3504
        %v3732 = vunpack.c.l.b16 %v3505
        %v3733 = vunpack.c.h.b16 %v3505
        %v3734 = vunpack.c.l.b16 %v3506
        %v3735 = vunpack.c.h.b16 %v3506
        %v3736 = vunpack.c.l.b16 %v3507
        %v3737 = vunpack.c.h.b16 %v3507
        %v3738 = vunpack.c.l.b16 %v3508
        %v3739 = vunpack.c.h.b16 %v3508
        %v3740 = vunpack.c.l.b16 %v3509
        %v3741 = vunpack.c.h.b16 %v3509
        %v3742 = vunpack.c.l.b16 %v3510
        %v3743 = vunpack.c.h.b16 %v3510
        %v3744 = vunpack.c.l.b16 %v3511
        %v3745 = vunpack.c.h.b16 %v3511
        %v3746 = vunpack.c.l.b16 %v3512
        %v3747 = vunpack.c.h.b16 %v3512
        %v3748 = vunpack.c.l.b16 %v3513
        %v3749 = vunpack.c.h.b16 %v3513
        %v3750 = vunpack.c.l.b16 %v3514
        %v3751 = vunpack.c.h.b16 %v3514
        %v3752 = vunpack.c.l.b16 %v3515
        %v3753 = vunpack.c.h.b16 %v3515
        %v3754 = vunpack.c.l.b16 %v3516
        %v3755 = vunpack.c.h.b16 %v3516
        %v3756 = vunpack.c.l.b16 %v3517
        %v3757 = vunpack.c.h.b16 %v3517
        %v3758 = vunpack.c.l.b16 %v3518
        %v3759 = vunpack.c.h.b16 %v3518
        %v3760 = vunpack.c.l.b16 %v3519
        %v3761 = vunpack.c.h.b16 %v3519
        %v3762 = vunpack.c.l.b16 %v3520
        %v3763 = vunpack.c.h.b16 %v3520
        %v3764 = vunpack.c.l.b16 %v3521
        %v3765 = vunpack.c.h.b16 %v3521
        %v3766 = vunpack.c.l.b16 %v3522
        %v3767 = vunpack.c.h.b16 %v3522
        %v3768 = vunpack.c.l.b16 %v3523
        %v3769 = vunpack.c.h.b16 %v3523
        %v3770 = vunpack.c.l.b16 %v3524
        %v3771 = vunpack.c.h.b16 %v3524
        %v3772 = vunpack.c.l.b16 %v3525
        %v3773 = vunpack.c.h.b16 %v3525
        %v3774 = vunpack.c.l.b16 %v3526
        %v3775 = vunpack.c.h.b16 %v3526
        %v3776 = vunpack.c.l.b16 %v3527
        %v3777 = vunpack.c.h.b16 %v3527
        %v3778 = vunpack.c.l.b16 %v3528
        %v3779 = vunpack.c.h.b16 %v3528
        %v3780 = vunpack.c.l.b16 %v3529
        %v3781 = vunpack.c.h.b16 %v3529
        %v3782 = vunpack.c.l.b16 %v3530
        %v3783 = vunpack.c.h.b16 %v3530
        %v3784 = vunpack.c.l.b16 %v3531
        %v3785 = vunpack.c.h.b16 %v3531
        %v3786 = vunpack.c.l.b16 %v3532
        %v3787 = vunpack.c.h.b16 %v3532
        %v3788 = vunpack.c.l.b16 %v3533
        %v3789 = vunpack.c.h.b16 %v3533
        %v3790 = vunpack.c.l.b16 %v3534
        %v3791 = vunpack.c.h.b16 %v3534
        %v3792 = vunpack.c.l.b16 %v3535
        %v3793 = vunpack.c.h.b16 %v3535
        %v3794 = vunpack.c.l.b16 %v3536
        %v3795 = vunpack.c.h.b16 %v3536
        %v3796 = vunpack.c.l.b16 %v3537
        %v3797 = vunpack.c.h.b16 %v3537
        %v3798 = vunpack.c.l.b16 %v3538
        %v3799 = vunpack.c.h.b16 %v3538
        %v3800 = vunpack.c.l.b16 %v3539
        %v3801 = vunpack.c.h.b16 %v3539
        %v3802 = vunpack.c.l.b16 %v3540
        %v3803 = vunpack.c.h.b16 %v3540
        %v3804 = vunpack.c.l.b16 %v3541
        %v3805 = vunpack.c.h.b16 %v3541
        %v3806 = vunpack.c.l.b16 %v3542
        %v3807 = vunpack.c.h.b16 %v3542
        %v3808 = vunpack.c.l.b16 %v3543
        %v3809 = vunpack.c.h.b16 %v3543
        %v3810 = vunpack.c.l.b16 %v3544
        %v3811 = vunpack.c.h.b16 %v3544
        %v3812 = vunpack.c.l.b16 %v3545
        %v3813 = vunpack.c.h.b16 %v3545
        %v3814 = vunpack.c.l.b16 %v3546
        %v3815 = vunpack.c.h.b16 %v3546
        %v3816 = vunpack.c.l.b16 %v3547
        %v3817 = vunpack.c.h.b16 %v3547
        %v3818 = vunpack.c.l.b16 %v3548
        %v3819 = vunpack.c.h.b16 %v3548
        %v3820 = vunpack.c.l.b16 %v3549
        %v3821 = vunpack.c.h.b16 %v3549
        %v3822 = vunpack.c.l.b16 %v3550
        %v3823 = vunpack.c.h.b16 %v3550
        %v3824 = vunpack.c.l.b16 %v3551
        %v3825 = vunpack.c.h.b16 %v3551
        %v3826 = vunpack.c.l.b16 %v3552
        %v3827 = vunpack.c.h.b16 %v3552
        %v3828 = vunpack.c.l.b16 %v3553
        %v3829 = vunpack.c.h.b16 %v3553
        %v3830 = vunpack.c.l.b16 %v3554
        %v3831 = vunpack.c.h.b16 %v3554
        %v3832 = vunpack.c.l.b16 %v3555
        %v3833 = vunpack.c.h.b16 %v3555
        %v3834 = vunpack.c.l.b16 %v3556
        %v3835 = vunpack.c.h.b16 %v3556
        %v3836 = vunpack.c.l.b16 %v3557
        %v3837 = vunpack.c.h.b16 %v3557
        %v3838 = vunpack.c.l.b16 %v3558
        %v3839 = vunpack.c.h.b16 %v3558
        %v3840 = vunpack.c.l.b16 %v3559
        %v3841 = vunpack.c.h.b16 %v3559
        %v3842 = vunpack.c.l.b16 %v3560
        %v3843 = vunpack.c.h.b16 %v3560
        %v3844 = vunpack.c.l.b16 %v3561
        %v3845 = vunpack.c.h.b16 %v3561
        %v3846 = vunpack.c.l.b16 %v3562
        %v3847 = vunpack.c.h.b16 %v3562
        %v3848 = vunpack.c.l.b16 %v3563
        %v3849 = vunpack.c.h.b16 %v3563
        %v3850 = vunpack.c.l.b16 %v3564
        %v3851 = vunpack.c.h.b16 %v3564
        %v3852 = vunpack.c.l.b16 %v3565
        %v3853 = vunpack.c.h.b16 %v3565
        %v3854 = vpack.c.b16 %v3666, %v3662
        %v3855 = vpack.c.b16 %v3667, %v3663
        %v3856 = vpack.c.b16 %v3668, %v3664
        %v3857 = vpack.c.b16 %v3669, %v3665
        %v3858 = vpack.c.b16 %v3674, %v3670
        %v3859 = vpack.c.b16 %v3675, %v3671
        %v3860 = vpack.c.b16 %v3676, %v3672
        %v3861 = vpack.c.b16 %v3677, %v3673
        %v3862 = vpack.c.b16 %v3682, %v3678
        %v3863 = vpack.c.b16 %v3683, %v3679
        %v3864 = vpack.c.b16 %v3684, %v3680
        %v3865 = vpack.c.b16 %v3685, %v3681
        %v3866 = vpack.c.b16 %v3690, %v3686
        %v3867 = vpack.c.b16 %v3691, %v3687
        %v3868 = vpack.c.b16 %v3692, %v3688
        %v3869 = vpack.c.b16 %v3693, %v3689
        %v3870 = vpack.c.b16 %v3698, %v3694
        %v3871 = vpack.c.b16 %v3699, %v3695
        %v3872 = vpack.c.b16 %v3700, %v3696
        %v3873 = vpack.c.b16 %v3701, %v3697
        %v3874 = vpack.c.b16 %v3706, %v3702
        %v3875 = vpack.c.b16 %v3707, %v3703
        %v3876 = vpack.c.b16 %v3708, %v3704
        %v3877 = vpack.c.b16 %v3709, %v3705
        %v3878 = vpack.c.b16 %v3714, %v3710
        %v3879 = vpack.c.b16 %v3715, %v3711
        %v3880 = vpack.c.b16 %v3716, %v3712
        %v3881 = vpack.c.b16 %v3717, %v3713
        %v3882 = vpack.c.b16 %v3722, %v3718
        %v3883 = vpack.c.b16 %v3723, %v3719
        %v3884 = vpack.c.b16 %v3724, %v3720
        %v3885 = vpack.c.b16 %v3725, %v3721
        %v3886 = vpack.c.b16 %v3730, %v3726
        %v3887 = vpack.c.b16 %v3731, %v3727
        %v3888 = vpack.c.b16 %v3732, %v3728
        %v3889 = vpack.c.b16 %v3733, %v3729
        %v3890 = vpack.c.b16 %v3738, %v3734
        %v3891 = vpack.c.b16 %v3739, %v3735
        %v3892 = vpack.c.b16 %v3740, %v3736
        %v3893 = vpack.c.b16 %v3741, %v3737
        %v3894 = vpack.c.b16 %v3746, %v3742
        %v3895 = vpack.c.b16 %v3747, %v3743
        %v3896 = vpack.c.b16 %v3748, %v3744
        %v3897 = vpack.c.b16 %v3749, %v3745
        %v3898 = vpack.c.b16 %v3754, %v3750
        %v3899 = vpack.c.b16 %v3755, %v3751
        %v3900 = vpack.c.b16 %v3756, %v3752
        %v3901 = vpack.c.b16 %v3757, %v3753
        %v3902 = vpack.c.b16 %v3762, %v3758
        %v3903 = vpack.c.b16 %v3763, %v3759
        %v3904 = vpack.c.b16 %v3764, %v3760
        %v3905 = vpack.c.b16 %v3765, %v3761
        %v3906 = vpack.c.b16 %v3770, %v3766
        %v3907 = vpack.c.b16 %v3771, %v3767
        %v3908 = vpack.c.b16 %v3772, %v3768
        %v3909 = vpack.c.b16 %v3773, %v3769
        %v3910 = vpack.c.b16 %v3778, %v3774
        %v3911 = vpack.c.b16 %v3779, %v3775
        %v3912 = vpack.c.b16 %v3780, %v3776
        %v3913 = vpack.c.b16 %v3781, %v3777
        %v3914 = vpack.c.b16 %v3786, %v3782
        %v3915 = vpack.c.b16 %v3787, %v3783
        %v3916 = vpack.c.b16 %v3788, %v3784
        %v3917 = vpack.c.b16 %v3789, %v3785
        %v3918 = vpack.c.b16 %v3794, %v3790
        %v3919 = vpack.c.b16 %v3795, %v3791
        %v3920 = vpack.c.b16 %v3796, %v3792
        %v3921 = vpack.c.b16 %v3797, %v3793
        %v3922 = vpack.c.b16 %v3802, %v3798
        %v3923 = vpack.c.b16 %v3803, %v3799
        %v3924 = vpack.c.b16 %v3804, %v3800
        %v3925 = vpack.c.b16 %v3805, %v3801
        %v3926 = vpack.c.b16 %v3810, %v3806
        %v3927 = vpack.c.b16 %v3811, %v3807
        %v3928 = vpack.c.b16 %v3812, %v3808
        %v3929 = vpack.c.b16 %v3813, %v3809
        %v3930 = vpack.c.b16 %v3818, %v3814
        %v3931 = vpack.c.b16 %v3819, %v3815
        %v3932 = vpack.c.b16 %v3820, %v3816
        %v3933 = vpack.c.b16 %v3821, %v3817
        %v3934 = vpack.c.b16 %v3826, %v3822
        %v3935 = vpack.c.b16 %v3827, %v3823
        %v3936 = vpack.c.b16 %v3828, %v3824
        %v3937 = vpack.c.b16 %v3829, %v3825
        %v3938 = vpack.c.b16 %v3834, %v3830
        %v3939 = vpack.c.b16 %v3835, %v3831
        %v3940 = vpack.c.b16 %v3836, %v3832
        %v3941 = vpack.c.b16 %v3837, %v3833
        %v3942 = vpack.c.b16 %v3842, %v3838
        %v3943 = vpack.c.b16 %v3843, %v3839
        %v3944 = vpack.c.b16 %v3844, %v3840
        %v3945 = vpack.c.b16 %v3845, %v3841
        %v3946 = vpack.c.b16 %v3850, %v3846
        %v3947 = vpack.c.b16 %v3851, %v3847
        %v3948 = vpack.c.b16 %v3852, %v3848
        %v3949 = vpack.c.b16 %v3853, %v3849
        %4046 = vmatprep.subr.bf16.mxu0 %v3855
        %4047 = vmatpush1.bf16.msra.mxu0 %v3854
        %4048 = vmatprep.subr.bf16.mxu0 %v3859
        %4049 = vmatpush1.bf16.msra.mxu0 %v3858
        %4050 = vmatprep.subr.bf16.mxu0 %v3863
        %4051 = vmatpush1.bf16.msra.mxu0 %v3862
        %4052 = vmatprep.subr.bf16.mxu0 %v3867
        %4053 = vmatpush1.bf16.msra.mxu0 %v3866
        %4054 = vmatprep.subr.bf16.mxu0 %v3871
        %4055 = vmatpush1.bf16.msra.mxu0 %v3870
        %4056 = vmatprep.subr.bf16.mxu0 %v3875
        %4057 = vmatpush1.bf16.msra.mxu0 %v3874
        %4058 = vmatprep.subr.bf16.mxu0 %v3879
        %4059 = vmatpush1.bf16.msra.mxu0 %v3878
        %4060 = vmatprep.subr.bf16.mxu0 %v3883
        %4061 = vmatpush1.bf16.msra.mxu0 %v3882
        %4062 = vmatprep.subr.bf16.mxu0 %v3887
        %4063 = vmatpush1.bf16.msra.mxu0 %v3886
        %4064 = vmatprep.subr.bf16.mxu0 %v3891
        %4065 = vmatpush1.bf16.msra.mxu0 %v3890
        %4066 = vmatprep.subr.bf16.mxu0 %v3895
        %4067 = vmatpush1.bf16.msra.mxu0 %v3894
        %4068 = vmatprep.subr.bf16.mxu0 %v3899
        %4069 = vmatpush1.bf16.msra.mxu0 %v3898
        %4070 = vmatprep.subr.bf16.mxu0 %v3903
        %4071 = vmatpush1.bf16.msra.mxu0 %v3902
        %4072 = vmatprep.subr.bf16.mxu0 %v3907
        %4073 = vmatpush1.bf16.msra.mxu0 %v3906
        %4074 = vmatprep.subr.bf16.mxu0 %v3911
        %4075 = vmatpush1.bf16.msra.mxu0 %v3910
        %4076 = vmatprep.subr.bf16.mxu0 %v3915
        %4077 = vmatpush1.bf16.msra.mxu0 %v3914
        %4078 = vmatprep.mubr.bf16.mxu0 %v3468
        %4079 = vmatmul.mubr.bf16.gmra.mrb[0].mxu0 %v3467
        %v4080 = vpop.f32.mrb[0].mxu0
        %v4081 = vadd.f32 0.0, %v4080
        %v4082 = vpop.f32.mrb[0].mxu0
        %v4083 = vadd.f32 0.0, %v4082
        %v4084 = vpop.f32.mrb[0].mxu0
        %v4085 = vpop.f32.mrb[0].mxu0
        %4086 = vdwg.mxu0
        %4087 = vmatprep.subr.bf16.mxu0 %v3919
        %4088 = vmatpush1.bf16.msra.mxu0 %v3918
        %4089 = vmatprep.subr.bf16.mxu0 %v3923
        %4090 = vmatpush1.bf16.msra.mxu0 %v3922
        %4091 = vmatprep.subr.bf16.mxu0 %v3927
        %4092 = vmatpush1.bf16.msra.mxu0 %v3926
        %4093 = vmatprep.subr.bf16.mxu0 %v3931
        %4094 = vmatpush1.bf16.msra.mxu0 %v3930
        %4095 = vmatprep.subr.bf16.mxu0 %v3935
        %4096 = vmatpush1.bf16.msra.mxu0 %v3934
        %4097 = vmatprep.subr.bf16.mxu0 %v3939
        %4098 = vmatpush1.bf16.msra.mxu0 %v3938
        %4099 = vmatprep.subr.bf16.mxu0 %v3943
        %4100 = vmatpush1.bf16.msra.mxu0 %v3942
        %4101 = vmatprep.subr.bf16.mxu0 %v3947
        %4102 = vmatpush1.bf16.msra.mxu0 %v3946
        %4103 = vmatprep.subr.bf16.mxu0 0
        %4104 = vmatpush1.bf16.msra.mxu0 0
        %4105 = vmatprep.subr.bf16.mxu0 0
        %4106 = vmatpush1.bf16.msra.mxu0 0
        %4107 = vmatprep.subr.bf16.mxu0 0
        %4108 = vmatpush1.bf16.msra.mxu0 0
        %4109 = vmatprep.subr.bf16.mxu0 0
        %4110 = vmatpush1.bf16.msra.mxu0 0
        %4111 = vmatprep.subr.bf16.mxu0 0
        %4112 = vmatpush1.bf16.msra.mxu0 0
        %4113 = vmatprep.subr.bf16.mxu0 0
        %4114 = vmatpush1.bf16.msra.mxu0 0
        %4115 = vmatprep.subr.bf16.mxu0 0
        %4116 = vmatpush1.bf16.msra.mxu0 0
        %4117 = vmatprep.subr.bf16.mxu0 0
        %4118 = vmatpush1.bf16.msra.mxu0 0
        %4119 = vmatprep.mubr.bf16.mxu0 0
        %4120 = vmatmul.mubr.bf16.gmra.mrb[0].mxu0 %v3469
        %v4121 = vpop.f32.mrb[0].mxu0
        %v4122 = vadd.f32 %v4081, %v4121
        %v4123 = vpop.f32.mrb[0].mxu0
        %v4124 = vadd.f32 %v4083, %v4123
        %v4125 = vpop.f32.mrb[0].mxu0
        %v4126 = vpop.f32.mrb[0].mxu0
        %4127 = vdwg.mxu0
        %4128 = vmatprep.subr.bf16.mxu0 %v3857
        %4129 = vmatpush1.bf16.msra.mxu0 %v3856
        %4130 = vmatprep.subr.bf16.mxu0 %v3861
        %4131 = vmatpush1.bf16.msra.mxu0 %v3860
        %4132 = vmatprep.subr.bf16.mxu0 %v3865
        %4133 = vmatpush1.bf16.msra.mxu0 %v3864
        %4134 = vmatprep.subr.bf16.mxu0 %v3869
        %4135 = vmatpush1.bf16.msra.mxu0 %v3868
        %4136 = vmatprep.subr.bf16.mxu0 %v3873
        %4137 = vmatpush1.bf16.msra.mxu0 %v3872
        %4138 = vmatprep.subr.bf16.mxu0 %v3877
        %4139 = vmatpush1.bf16.msra.mxu0 %v3876
        %4140 = vmatprep.subr.bf16.mxu0 %v3881
        %4141 = vmatpush1.bf16.msra.mxu0 %v3880
        %4142 = vmatprep.subr.bf16.mxu0 %v3885
        %4143 = vmatpush1.bf16.msra.mxu0 %v3884
        %4144 = vmatprep.subr.bf16.mxu0 %v3889
        %4145 = vmatpush1.bf16.msra.mxu0 %v3888
        %4146 = vmatprep.subr.bf16.mxu0 %v3893
        %4147 = vmatpush1.bf16.msra.mxu0 %v3892
        %4148 = vmatprep.subr.bf16.mxu0 %v3897
        %4149 = vmatpush1.bf16.msra.mxu0 %v3896
        %4150 = vmatprep.subr.bf16.mxu0 %v3901
        %4151 = vmatpush1.bf16.msra.mxu0 %v3900
        %4152 = vmatprep.subr.bf16.mxu0 %v3905
        %4153 = vmatpush1.bf16.msra.mxu0 %v3904
        %4154 = vmatprep.subr.bf16.mxu0 %v3909
        %4155 = vmatpush1.bf16.msra.mxu0 %v3908
        %4156 = vmatprep.subr.bf16.mxu0 %v3913
        %4157 = vmatpush1.bf16.msra.mxu0 %v3912
        %4158 = vmatprep.subr.bf16.mxu0 %v3917
        %4159 = vmatpush1.bf16.msra.mxu0 %v3916
        %4160 = vmatprep.mubr.bf16.mxu0 %v3468
        %4161 = vmatmul.mubr.bf16.gmra.mrb[0].mxu0 %v3467
        %v4162 = vpop.f32.mrb[0].mxu0
        %v4163 = vadd.f32 0.0, %v4162
        %v4164 = vpop.f32.mrb[0].mxu0
        %v4165 = vadd.f32 0.0, %v4164
        %v4166 = vpop.f32.mrb[0].mxu0
        %v4167 = vpop.f32.mrb[0].mxu0
        %4168 = vdwg.mxu0
        %4169 = vmatprep.subr.bf16.mxu0 %v3921
        %4170 = vmatpush1.bf16.msra.mxu0 %v3920
        %4171 = vmatprep.subr.bf16.mxu0 %v3925
        %4172 = vmatpush1.bf16.msra.mxu0 %v3924
        %4173 = vmatprep.subr.bf16.mxu0 %v3929
        %4174 = vmatpush1.bf16.msra.mxu0 %v3928
        %4175 = vmatprep.subr.bf16.mxu0 %v3933
        %4176 = vmatpush1.bf16.msra.mxu0 %v3932
        %4177 = vmatprep.subr.bf16.mxu0 %v3937
        %4178 = vmatpush1.bf16.msra.mxu0 %v3936
        %4179 = vmatprep.subr.bf16.mxu0 %v3941
        %4180 = vmatpush1.bf16.msra.mxu0 %v3940
        %4181 = vmatprep.subr.bf16.mxu0 %v3945
        %4182 = vmatpush1.bf16.msra.mxu0 %v3944
        %4183 = vmatprep.subr.bf16.mxu0 %v3949
        %4184 = vmatpush1.bf16.msra.mxu0 %v3948
        %4185 = vmatprep.subr.bf16.mxu0 0
        %4186 = vmatpush1.bf16.msra.mxu0 0
        %4187 = vmatprep.subr.bf16.mxu0 0
        %4188 = vmatpush1.bf16.msra.mxu0 0
        %4189 = vmatprep.subr.bf16.mxu0 0
        %4190 = vmatpush1.bf16.msra.mxu0 0
        %4191 = vmatprep.subr.bf16.mxu0 0
        %4192 = vmatpush1.bf16.msra.mxu0 0
        %4193 = vmatprep.subr.bf16.mxu0 0
        %4194 = vmatpush1.bf16.msra.mxu0 0
        %4195 = vmatprep.subr.bf16.mxu0 0
        %4196 = vmatpush1.bf16.msra.mxu0 0
        %4197 = vmatprep.subr.bf16.mxu0 0
        %4198 = vmatpush1.bf16.msra.mxu0 0
        %4199 = vmatprep.subr.bf16.mxu0 0
        %4200 = vmatpush1.bf16.msra.mxu0 0
        %4201 = vmatprep.mubr.bf16.mxu0 0
        %4202 = vmatmul.mubr.bf16.gmra.mrb[0].mxu0 %v3469
        %v4203 = vpop.f32.mrb[0].mxu0
        %v4204 = vadd.f32 %v4163, %v4203
        %v4205 = vpop.f32.mrb[0].mxu0
        %v4206 = vadd.f32 %v4165, %v4205
        %v4207 = vpop.f32.mrb[0].mxu0
        %v4208 = vpop.f32.mrb[0].mxu0
        %4209 = vdwg.mxu0
        %v4210 = vmul.f32 %v4122, %v4204
        %v4211 = vmul.f32 %v4124, %v4206
        %v4214 = vrot.slane %v4210, 2
        %v4215 = vrot.slane %v4211, 2
        %v4218 = vadd.f32 %v4210, %v4214
        %v4219 = vadd.f32 %v4211, %v4215
        %v4220 = vrot.slane %v4210, 4
        %v4221 = vrot.slane %v4211, 4
        %v4224 = vadd.f32 %v4218, %v4220
        %v4225 = vadd.f32 %v4219, %v4221
        %v4226 = vmul.f32 %v4204, %v4204
        %v4227 = vmul.f32 %v4206, %v4206
        %v4230 = vrot.slane %v4226, 2
        %v4231 = vrot.slane %v4227, 2
        %v4234 = vadd.f32 %v4226, %v4230
        %v4235 = vadd.f32 %v4227, %v4231
        %v4236 = vrot.slane %v4226, 4
        %v4237 = vrot.slane %v4227, 4
        %v4240 = vadd.f32 %v4234, %v4236
        %v4241 = vadd.f32 %v4235, %v4237
        %v4242 = vadd.f32 %v4240, 1e-06
        %v4243 = vadd.f32 %v4241, 1e-06
        %v4244 = vrcp.pop %v4242
        %v4245 = vrcp.pop %v4243
        %v4246 = vmul.f32 %v4224, %v4244
        %v4247 = vmul.f32 %v4225, %v4245
        %vm4248 = vcmp.ge.f32.partialorder %v4224, 0.0
        %vm4249 = vcmp.ge.f32.partialorder %v4225, 0.0
        %v4250 = vmul.f32 %v4246, %v4204
        %v4251 = vmul.f32 %v4247, %v4206
        %v4252 = vsub.f32 %v4122, %v4250
        %v4253 = vsub.f32 %v4124, %v4251
        %v4254 = vsel %vm4248, %v4122, %v4252
        %v4255 = vsel %vm4249, %v4124, %v4253
        %v4258 = vrot.slane %v4204, 2
        %v4259 = vrot.slane %v4206, 2
        %v4262 = vmul.f32 %v4246, %v4258
        %v4263 = vmul.f32 %v4247, %v4259
        %v4266 = vrot.slane %v4262, 6
        %v4267 = vrot.slane %v4263, 6
        %v4270 = vsub.f32 %v4122, %v4266
        %v4271 = vsub.f32 %v4124, %v4267
        %v4274 = vrot.slane %v4122, 2
        %v4275 = vrot.slane %v4124, 2
        %v4280 = vrot.slane %v4270, 2
        %v4281 = vrot.slane %v4271, 2
        %v4284 = vsel %vm4248, %v4274, %v4280
        %v4285 = vsel %vm4249, %v4275, %v4281
        %v4286 = vrot.slane %v4204, 4
        %v4287 = vrot.slane %v4206, 4
        %v4290 = vmul.f32 %v4246, %v4286
        %v4291 = vmul.f32 %v4247, %v4287
        %v4294 = vrot.slane %v4290, 4
        %v4295 = vrot.slane %v4291, 4
        %v4298 = vsub.f32 %v4122, %v4294
        %v4299 = vsub.f32 %v4124, %v4295
        %v4300 = vrot.slane %v4122, 4
        %v4301 = vrot.slane %v4124, 4
        %v4306 = vrot.slane %v4298, 4
        %v4307 = vrot.slane %v4299, 4
        %v4310 = vsel %vm4248, %v4300, %v4306
        %v4311 = vsel %vm4249, %v4301, %v4307
        %v4314 = vrot.slane %v4284, 6
        %v4315 = vrot.slane %v4285, 6
        %v4320 = vrot.slane %v4310, 4
        %v4321 = vrot.slane %v4311, 4
        %v4324 = vsel %vm3459, %v4254, %v4314
        %v4325 = vsel %vm3459, %v4255, %v4315
        %v4326 = vsel %vm3463, %v4324, %v4320
        %v4327 = vsel %vm3463, %v4325, %v4321
        %v4328 = vpack.c.bf16 %v4326, %v4326
        %v4329 = vpack.c.bf16 %v4327, %v4327
        %v4330 = vld [vmem:[%s6] sm:$0xff]
        %v4331 = vld [vmem:[%s6 + $0x8] sm:$0xff]
        %v4332 = vld [vmem:[%s6 + $0x10] sm:$0xff]
        %v4333 = vld [vmem:[%s6 + $0x18] sm:$0xff]
        %v4334 = vld [vmem:[%s6 + $0x20] sm:$0xff]
        %v4335 = vld [vmem:[%s6 + $0x28] sm:$0xff]
        %v4336 = vld [vmem:[%s6 + $0x30] sm:$0xff]
        %v4337 = vld [vmem:[%s6 + $0x38] sm:$0xff]
        %v4338 = vld [vmem:[%s6 + $0x40] sm:$0xff]
        %v4339 = vld [vmem:[%s6 + $0x48] sm:$0xff]
        %v4340 = vld [vmem:[%s6 + $0x50] sm:$0xff]
        %v4341 = vld [vmem:[%s6 + $0x58] sm:$0xff]
        %v4342 = vld [vmem:[%s6 + $0x60] sm:$0xff]
        %v4343 = vld [vmem:[%s6 + $0x68] sm:$0xff]
        %v4344 = vld [vmem:[%s6 + $0x70] sm:$0xff]
        %v4345 = vld [vmem:[%s6 + $0x78] sm:$0xff]
        %v4346 = vld [vmem:[%s6 + $0x80] sm:$0xff]
        %v4347 = vld [vmem:[%s6 + $0x88] sm:$0xff]
        %v4348 = vld [vmem:[%s6 + $0x90] sm:$0xff]
        %v4349 = vld [vmem:[%s6 + $0x98] sm:$0xff]
        %v4350 = vld [vmem:[%s6 + $0xa0] sm:$0xff]
        %v4351 = vld [vmem:[%s6 + $0xa8] sm:$0xff]
        %v4352 = vld [vmem:[%s6 + $0xb0] sm:$0xff]
        %v4353 = vld [vmem:[%s6 + $0xb8] sm:$0xff]
        %v4354 = vld [vmem:[%s6 + $0xc0] sm:$0xff]
        %v4355 = vld [vmem:[%s6 + $0xc8] sm:$0xff]
        %v4356 = vld [vmem:[%s6 + $0xd0] sm:$0xff]
        %v4357 = vld [vmem:[%s6 + $0xd8] sm:$0xff]
        %v4358 = vld [vmem:[%s6 + $0xe0] sm:$0xff]
        %v4359 = vld [vmem:[%s6 + $0xe8] sm:$0xff]
        %v4360 = vld [vmem:[%s6 + $0xf0] sm:$0xff]
        %v4361 = vld [vmem:[%s6 + $0xf8] sm:$0xff]
        %v4394 = vunpack.c.l.b16 %v4330
        %v4395 = vunpack.c.h.b16 %v4330
        %v4396 = vunpack.c.l.b16 %v4331
        %v4397 = vunpack.c.h.b16 %v4331
        %v4398 = vunpack.c.l.b16 %v4332
        %v4399 = vunpack.c.h.b16 %v4332
        %v4400 = vunpack.c.l.b16 %v4333
        %v4401 = vunpack.c.h.b16 %v4333
        %v4402 = vunpack.c.l.b16 %v4334
        %v4403 = vunpack.c.h.b16 %v4334
        %v4404 = vunpack.c.l.b16 %v4335
        %v4405 = vunpack.c.h.b16 %v4335
        %v4406 = vunpack.c.l.b16 %v4336
        %v4407 = vunpack.c.h.b16 %v4336
        %v4408 = vunpack.c.l.b16 %v4337
        %v4409 = vunpack.c.h.b16 %v4337
        %v4410 = vunpack.c.l.b16 %v4338
        %v4411 = vunpack.c.h.b16 %v4338
        %v4412 = vunpack.c.l.b16 %v4339
        %v4413 = vunpack.c.h.b16 %v4339
        %v4414 = vunpack.c.l.b16 %v4340
        %v4415 = vunpack.c.h.b16 %v4340
        %v4416 = vunpack.c.l.b16 %v4341
        %v4417 = vunpack.c.h.b16 %v4341
        %v4418 = vunpack.c.l.b16 %v4342
        %v4419 = vunpack.c.h.b16 %v4342
        %v4420 = vunpack.c.l.b16 %v4343
        %v4421 = vunpack.c.h.b16 %v4343
        %v4422 = vunpack.c.l.b16 %v4344
        %v4423 = vunpack.c.h.b16 %v4344
        %v4424 = vunpack.c.l.b16 %v4345
        %v4425 = vunpack.c.h.b16 %v4345
        %v4426 = vunpack.c.l.b16 %v4346
        %v4427 = vunpack.c.h.b16 %v4346
        %v4428 = vunpack.c.l.b16 %v4347
        %v4429 = vunpack.c.h.b16 %v4347
        %v4430 = vunpack.c.l.b16 %v4348
        %v4431 = vunpack.c.h.b16 %v4348
        %v4432 = vunpack.c.l.b16 %v4349
        %v4433 = vunpack.c.h.b16 %v4349
        %v4434 = vunpack.c.l.b16 %v4350
        %v4435 = vunpack.c.h.b16 %v4350
        %v4436 = vunpack.c.l.b16 %v4351
        %v4437 = vunpack.c.h.b16 %v4351
        %v4438 = vunpack.c.l.b16 %v4352
        %v4439 = vunpack.c.h.b16 %v4352
        %v4440 = vunpack.c.l.b16 %v4353
        %v4441 = vunpack.c.h.b16 %v4353
        %v4442 = vunpack.c.l.b16 %v4354
        %v4443 = vunpack.c.h.b16 %v4354
        %v4444 = vunpack.c.l.b16 %v4355
        %v4445 = vunpack.c.h.b16 %v4355
        %v4446 = vunpack.c.l.b16 %v4356
        %v4447 = vunpack.c.h.b16 %v4356
        %v4448 = vunpack.c.l.b16 %v4357
        %v4449 = vunpack.c.h.b16 %v4357
        %v4450 = vunpack.c.l.b16 %v4358
        %v4451 = vunpack.c.h.b16 %v4358
        %v4452 = vunpack.c.l.b16 %v4359
        %v4453 = vunpack.c.h.b16 %v4359
        %v4454 = vunpack.c.l.b16 %v4360
        %v4455 = vunpack.c.h.b16 %v4360
        %v4456 = vunpack.c.l.b16 %v4361
        %v4457 = vunpack.c.h.b16 %v4361
        %v4458 = vpack.c.b16 %v4396, %v4394
        %v4459 = vpack.c.b16 %v4397, %v4395
        %v4460 = vpack.c.b16 %v4400, %v4398
        %v4461 = vpack.c.b16 %v4401, %v4399
        %v4462 = vpack.c.b16 %v4404, %v4402
        %v4463 = vpack.c.b16 %v4405, %v4403
        %v4464 = vpack.c.b16 %v4408, %v4406
        %v4465 = vpack.c.b16 %v4409, %v4407
        %v4466 = vpack.c.b16 %v4412, %v4410
        %v4467 = vpack.c.b16 %v4413, %v4411
        %v4468 = vpack.c.b16 %v4416, %v4414
        %v4469 = vpack.c.b16 %v4417, %v4415
        %v4470 = vpack.c.b16 %v4420, %v4418
        %v4471 = vpack.c.b16 %v4421, %v4419
        %v4472 = vpack.c.b16 %v4424, %v4422
        %v4473 = vpack.c.b16 %v4425, %v4423
        %v4474 = vpack.c.b16 %v4428, %v4426
        %v4475 = vpack.c.b16 %v4429, %v4427
        %v4476 = vpack.c.b16 %v4432, %v4430
        %v4477 = vpack.c.b16 %v4433, %v4431
        %v4478 = vpack.c.b16 %v4436, %v4434
        %v4479 = vpack.c.b16 %v4437, %v4435
        %v4480 = vpack.c.b16 %v4440, %v4438
        %v4481 = vpack.c.b16 %v4441, %v4439
        %v4482 = vpack.c.b16 %v4444, %v4442
        %v4483 = vpack.c.b16 %v4445, %v4443
        %v4484 = vpack.c.b16 %v4448, %v4446
        %v4485 = vpack.c.b16 %v4449, %v4447
        %v4486 = vpack.c.b16 %v4452, %v4450
        %v4487 = vpack.c.b16 %v4453, %v4451
        %v4488 = vpack.c.b16 %v4456, %v4454
        %v4489 = vpack.c.b16 %v4457, %v4455
        %4522 = vmatprep.subr.bf16.mxu0 %v4459
        %4523 = vmatpush1.bf16.msra.mxu0 %v4458
        %4524 = vmatprep.subr.bf16.mxu0 %v4461
        %4525 = vmatpush1.bf16.msra.mxu0 %v4460
        %4526 = vmatprep.subr.bf16.mxu0 %v4463
        %4527 = vmatpush1.bf16.msra.mxu0 %v4462
        %4528 = vmatprep.subr.bf16.mxu0 %v4465
        %4529 = vmatpush1.bf16.msra.mxu0 %v4464
        %4530 = vmatprep.subr.bf16.mxu0 %v4467
        %4531 = vmatpush1.bf16.msra.mxu0 %v4466
        %4532 = vmatprep.subr.bf16.mxu0 %v4469
        %4533 = vmatpush1.bf16.msra.mxu0 %v4468
        %4534 = vmatprep.subr.bf16.mxu0 %v4471
        %4535 = vmatpush1.bf16.msra.mxu0 %v4470
        %4536 = vmatprep.subr.bf16.mxu0 %v4473
        %4537 = vmatpush1.bf16.msra.mxu0 %v4472
        %4538 = vmatprep.subr.bf16.mxu0 %v4475
        %4539 = vmatpush1.bf16.msra.mxu0 %v4474
        %4540 = vmatprep.subr.bf16.mxu0 %v4477
        %4541 = vmatpush1.bf16.msra.mxu0 %v4476
        %4542 = vmatprep.subr.bf16.mxu0 %v4479
        %4543 = vmatpush1.bf16.msra.mxu0 %v4478
        %4544 = vmatprep.subr.bf16.mxu0 %v4481
        %4545 = vmatpush1.bf16.msra.mxu0 %v4480
        %4546 = vmatprep.subr.bf16.mxu0 %v4483
        %4547 = vmatpush1.bf16.msra.mxu0 %v4482
        %4548 = vmatprep.subr.bf16.mxu0 %v4485
        %4549 = vmatpush1.bf16.msra.mxu0 %v4484
        %4550 = vmatprep.subr.bf16.mxu0 %v4487
        %4551 = vmatpush1.bf16.msra.mxu0 %v4486
        %4552 = vmatprep.subr.bf16.mxu0 %v4489
        %4553 = vmatpush1.bf16.msra.mxu0 %v4488
        %4554 = vmatprep.mubr.bf16.mxu0 %v4329
        %4555 = vmatmul.mubr.bf16.gmra.mrb[0].mxu0 %v4328
        %v4556 = vpop.f32.mrb[0].mxu0
        %v4557 = vadd.f32 0.0, %v4556
        %v4558 = vpop.f32.mrb[0].mxu0
        %v4559 = vadd.f32 0.0, %v4558
        %v4560 = vpop.f32.mrb[0].mxu0
        %v4561 = vpop.f32.mrb[0].mxu0
        %4562 = vdwg.mxu0
        %v4563 = vmul.f32 %v4557, %v4559
        %v4565 = vrot.slane %v4563, 2
        %v4567 = vadd.f32 %v4563, %v4565
        %v4568 = vrot.slane %v4563, 4
        %v4570 = vadd.f32 %v4567, %v4568
        %v4571 = vmul.f32 %v4559, %v4559
        %v4573 = vrot.slane %v4571, 2
        %v4575 = vadd.f32 %v4571, %v4573
        %v4576 = vrot.slane %v4571, 4
        %v4578 = vadd.f32 %v4575, %v4576
        %v4579 = vadd.f32 %v4578, 1e-06
        %v4580 = vrcp.pop %v4579
        %v4581 = vmul.f32 %v4570, %v4580
        %vm4582 = vcmp.ge.f32.partialorder %v4570, 0.0
        %v4583 = vmul.f32 %v4581, %v4559
        %v4584 = vsub.f32 %v4557, %v4583
        %v4585 = vsel %vm4582, %v4557, %v4584
        %v4587 = vrot.slane %v4559, 2
        %v4589 = vmul.f32 %v4581, %v4587
        %v4591 = vrot.slane %v4589, 6
        %v4593 = vsub.f32 %v4557, %v4591
        %v4595 = vrot.slane %v4557, 2
        %v4598 = vrot.slane %v4593, 2
        %v4600 = vsel %vm4582, %v4595, %v4598
        %v4601 = vrot.slane %v4559, 4
        %v4603 = vmul.f32 %v4581, %v4601
        %v4605 = vrot.slane %v4603, 4
        %v4607 = vsub.f32 %v4557, %v4605
        %v4608 = vrot.slane %v4557, 4
        %v4611 = vrot.slane %v4607, 4
        %v4613 = vsel %vm4582, %v4608, %v4611
        %v4615 = vrot.slane %v4600, 6
        %v4618 = vrot.slane %v4613, 4
        %v4620 = vsel %vm3459, %v4585, %v4615
        %v4621 = vsel %vm3463, %v4620, %v4618
        %v4622 = vpack.c.bf16 %v4621, %v4621
        %v4623 = vld [vmem:[%s7] sm:$0xf]
        %v4624 = vld [vmem:[%s7 + $0x4] sm:$0xf]
        %v4625 = vld [vmem:[%s7 + $0x8] sm:$0xf]
        %v4626 = vld [vmem:[%s7 + $0xc] sm:$0xf]
        %v4627 = vld [vmem:[%s7 + $0x10] sm:$0xf]
        %v4628 = vld [vmem:[%s7 + $0x14] sm:$0xf]
        %v4629 = vld [vmem:[%s7 + $0x18] sm:$0xf]
        %v4630 = vld [vmem:[%s7 + $0x1c] sm:$0xf]
        %v4631 = vld [vmem:[%s7 + $0x20] sm:$0xf]
        %v4632 = vld [vmem:[%s7 + $0x24] sm:$0xf]
        %v4633 = vld [vmem:[%s7 + $0x28] sm:$0xf]
        %v4634 = vld [vmem:[%s7 + $0x2c] sm:$0xf]
        %v4635 = vld [vmem:[%s7 + $0x30] sm:$0xf]
        %v4636 = vld [vmem:[%s7 + $0x34] sm:$0xf]
        %v4637 = vld [vmem:[%s7 + $0x38] sm:$0xf]
        %v4638 = vld [vmem:[%s7 + $0x3c] sm:$0xf]
        %v4655 = vunpack.c.l.b16 %v4623
        %v4656 = vunpack.c.l.b16 %v4624
        %v4657 = vunpack.c.l.b16 %v4625
        %v4658 = vunpack.c.l.b16 %v4626
        %v4659 = vunpack.c.l.b16 %v4627
        %v4660 = vunpack.c.l.b16 %v4628
        %v4661 = vunpack.c.l.b16 %v4629
        %v4662 = vunpack.c.l.b16 %v4630
        %v4663 = vunpack.c.l.b16 %v4631
        %v4664 = vunpack.c.l.b16 %v4632
        %v4665 = vunpack.c.l.b16 %v4633
        %v4666 = vunpack.c.l.b16 %v4634
        %v4667 = vunpack.c.l.b16 %v4635
        %v4668 = vunpack.c.l.b16 %v4636
        %v4669 = vunpack.c.l.b16 %v4637
        %v4670 = vunpack.c.l.b16 %v4638
        %v4671 = vpack.c.b16 %v4656, %v4655
        %v4672 = vpack.c.b16 %v4658, %v4657
        %v4673 = vpack.c.b16 %v4660, %v4659
        %v4674 = vpack.c.b16 %v4662, %v4661
        %v4675 = vpack.c.b16 %v4664, %v4663
        %v4676 = vpack.c.b16 %v4666, %v4665
        %v4677 = vpack.c.b16 %v4668, %v4667
        %v4678 = vpack.c.b16 %v4670, %v4669
        %4687 = vmatprep.subr.bf16.mxu0 0
        %4688 = vmatpush1.bf16.msra.mxu0 %v4671
        %4689 = vmatprep.subr.bf16.mxu0 0
        %4690 = vmatpush1.bf16.msra.mxu0 %v4672
        %4691 = vmatprep.subr.bf16.mxu0 0
        %4692 = vmatpush1.bf16.msra.mxu0 %v4673
        %4693 = vmatprep.subr.bf16.mxu0 0
        %4694 = vmatpush1.bf16.msra.mxu0 %v4674
        %4695 = vmatprep.subr.bf16.mxu0 0
        %4696 = vmatpush1.bf16.msra.mxu0 %v4675
        %4697 = vmatprep.subr.bf16.mxu0 0
        %4698 = vmatpush1.bf16.msra.mxu0 %v4676
        %4699 = vmatprep.subr.bf16.mxu0 0
        %4700 = vmatpush1.bf16.msra.mxu0 %v4677
        %4701 = vmatprep.subr.bf16.mxu0 0
        %4702 = vmatpush1.bf16.msra.mxu0 %v4678
        %4703 = vmatprep.subr.bf16.mxu0 0
        %4704 = vmatpush1.bf16.msra.mxu0 0
        %4705 = vmatprep.subr.bf16.mxu0 0
        %4706 = vmatpush1.bf16.msra.mxu0 0
        %4707 = vmatprep.subr.bf16.mxu0 0
        %4708 = vmatpush1.bf16.msra.mxu0 0
        %4709 = vmatprep.subr.bf16.mxu0 0
        %4710 = vmatpush1.bf16.msra.mxu0 0
        %4711 = vmatprep.subr.bf16.mxu0 0
        %4712 = vmatpush1.bf16.msra.mxu0 0
        %4713 = vmatprep.subr.bf16.mxu0 0
        %4714 = vmatpush1.bf16.msra.mxu0 0
        %4715 = vmatprep.subr.bf16.mxu0 0
        %4716 = vmatpush1.bf16.msra.mxu0 0
        %4717 = vmatprep.subr.bf16.mxu0 0
        %4718 = vmatpush1.bf16.msra.mxu0 0
        %4719 = vmatprep.mubr.bf16.mxu0 0
        %4720 = vmatmul.mubr.bf16.gmra.mrb[0].mxu0 %v4622
        %v4721 = vpop.f32.mrb[0].mxu0
        %v4722 = vadd.f32 0.0, %v4721
        %v4723 = vpop.f32.mrb[0].mxu0
        %v4724 = vpop.f32.mrb[0].mxu0
        %v4725 = vpop.f32.mrb[0].mxu0
        %4726 = vdwg.mxu0
        %v4729 = vunpack.c.l.s4 1966171168
        %v4730 = vunpack.c.0.s8 %v4729
        %v4731 = vlaneseq
        %v4732 = vshrl.u32 %v4731, 7
        %v4733 = vsub.s32 %v4730, %v4732
        %v4734 = vrot.slane %v4722, %v4733
        %v4735 = vcombine.high %v4734, %v4734
        %v4737 = vunpack.c.l.s4 1966171168
        %v4738 = vunpack.c.0.s8 %v4737
        %v4739 = vlaneseq
        %v4740 = vshrl.u32 %v4739, 7
        %v4741 = vsub.s32 %v4738, %v4740
        %v4742 = vrot.slane %v4734, %v4741
        %v4744 = vunpack.c.l.s4 1966171168
        %v4745 = vunpack.c.0.s8 %v4744
        %v4746 = vlaneseq
        %v4747 = vshrl.u32 %v4746, 7
        %v4748 = vsub.s32 %v4745, %v4747
        %v4749 = vrot.slane %v4735, %v4748
        %vm4752 = vcmask 516096
        %4753 = vst.msk [vmem:[%s338] sm:$0x1] %vm4752, %v4742
        %4754 = vst.msk [vmem:[%s338 + $0x4] sm:$0x1] %vm4752, %v4749
        %v4755 = vcombine.high %v4742, %v4742
        %v4756 = vcombine.high %v4749, %v4749
        %4759 = vst.msk [vmem:[%s338 + $0x1] sm:$0x1] %vm4752, %v4755
        %4760 = vst.msk [vmem:[%s338 + $0x5] sm:$0x1] %vm4752, %v4756
        %v4761 = vcombine.high %v4722, %v4722
        %v4763 = vunpack.c.l.s4 1966171168
        %v4764 = vunpack.c.0.s8 %v4763
        %v4765 = vlaneseq
        %v4766 = vshrl.u32 %v4765, 7
        %v4767 = vsub.s32 %v4764, %v4766
        %v4768 = vrot.slane %v4761, %v4767
        %v4769 = vcombine.high %v4768, %v4768
        %v4771 = vunpack.c.l.s4 1966171168
        %v4772 = vunpack.c.0.s8 %v4771
        %v4773 = vlaneseq
        %v4774 = vshrl.u32 %v4773, 7
        %v4775 = vsub.s32 %v4772, %v4774
        %v4776 = vrot.slane %v4768, %v4775
        %v4778 = vunpack.c.l.s4 1966171168
        %v4779 = vunpack.c.0.s8 %v4778
        %v4780 = vlaneseq
        %v4781 = vshrl.u32 %v4780, 7
        %v4782 = vsub.s32 %v4779, %v4781
        %v4783 = vrot.slane %v4769, %v4782
        %4786 = vst.msk [vmem:[%s338 + $0x2] sm:$0x1] %vm4752, %v4776
        %4787 = vst.msk [vmem:[%s338 + $0x6] sm:$0x1] %vm4752, %v4783
      $region60: #{stnkd_forward.1} parent=51 // pred_fallthru
        _
      %s4788 = smul.u32 2, %s23
      %p4789 = scmp.lt.s32.totalorder %s4788, 3
      %s4790 = scalar_select %p4789, %s4788, 3
      %s4791 = smul.addr %s4790, 4
      %s4792 = scalar_lea.vmem %s8, %s4791
      // Predicated region
      $region61: #{stnkd_forward.1} parent=51 // pred_check
        %p4793 = pneg %p224
      $region62: #{stnkd_forward.1} parent=51 // pred_check_branch
        %4795 = sbr.rel (%p4793) target = $region64
      $region63: #{stnkd_forward.1} parent=51 // pred_region
        %s4796 = smul.u32 2, %s23
      $region64: #{stnkd_forward.1} parent=51 // pred_fallthru
        _
    $region52: #{stnkd_forward.1} parent=5 // pred_fallthru
      _
    %p4797 = scmp.le.s32.totalorder 2, %s14
    // Predicated region
    $region65: #{stnkd_forward.1} parent=5 // pred_check
      %p4798 = pneg %p4797
    $region66: #{stnkd_forward.1} parent=5 // pred_check_branch
      %4800 = sbr.rel (%p4798) target = $region68
    $region67: #{stnkd_forward.1} parent=5 // pred_region
      %s4801 = ssub.s32 %s14, 2
      // Predicated region
      $region69: #{stnkd_forward.1} parent=67 // pred_check
        %p4802 = pneg %p230
      $region70: #{stnkd_forward.1} parent=67 // pred_check_branch
        %4804 = sbr.rel (%p4802) target = $region72
      $region71: #{stnkd_forward.1} parent=67 // pred_region
        %s4805 = smul.u32 2, %s25
        %p4806 = scmp.lt.s32.totalorder %s4805, 3
        %s4807 = scalar_select %p4806, %s4805, 3
        %s4808 = smul.addr %s4807, 4
        %s4809 = scalar_lea.vmem %s8, %s4808
      $region72: #{stnkd_forward.1} parent=67 // pred_fallthru
        _
    $region68: #{stnkd_forward.1} parent=5 // pred_fallthru
      _
  $region6: #{stnkd_forward.1} parent=0 // loop_footer
    %s18 = sadd.s32 1, %s14
  $region7: #{stnkd_forward.1} parent=0 // loop_footer_branch
    %13 = sbr.rel target = $region3
  $region8: #{stnkd_forward.1} parent=0 // loop_exit
    _

</llo_original>
